<compile_context>
chip_gen: v7x
topology: tpu7x:2x2x1
jax: 0.10.0
libtpu: 0.0.40
codegen_flags: <defaults>
</compile_context>

<pallas_src>
import math

import jax
import jax.numpy as jnp
from jax.experimental import pallas as pl
from jax.experimental.pallas import tpu as pltpu

EPS = 1e-5
LANE = 128


def _round_up(x, m):
    return (x + m - 1) // m * m


# ----------------------------- Pallas kernels ------------------------------- #

def _pool_kernel(x_ref, o_ref):
    # x_ref: (Hh, 2, Wh, 2, Cp)  [C on the lane axis] ; o_ref: (Hh, Wh, Cp)
    v = x_ref[...]
    v = jnp.max(v, axis=3)
    v = jnp.max(v, axis=1)
    o_ref[...] = v


def _make_conv_kernel(ow, fuse_input_bn):
    """3x3 valid conv (implicit GEMM) over one output row + partial BN stats.

    Inputs are three single-row NHWC slabs (the 2-row halo), the (9, Cp, OCp)
    bf16 weights, and a per-input-channel (scale, shift) pair.  If
    `fuse_input_bn` is set, relu(x*scale + shift) (the previous layer's
    train-mode BN + ReLU) is applied to the rows in VMEM before the conv.
    """

    def kernel(x0_ref, x1_ref, x2_ref, w_ref, s_ref, t_ref, y_ref, stats_ref):
        oh = pl.program_id(1)
        ocp = y_ref.shape[-1]

        rows = [x0_ref[0, 0], x1_ref[0, 0], x2_ref[0, 0]]        # (W, Cp) f32 each
        if fuse_input_bn:
            s = s_ref[...]                                       # (1, Cp)
            t = t_ref[...]                                       # (1, Cp)
            rows = [jnp.maximum(r * s + t, 0.0) for r in rows]

        acc = jnp.zeros((ow, ocp), jnp.float32)
        for dy in range(3):
            for dx in range(3):
                win = rows[dy][dx:dx + ow, :].astype(jnp.bfloat16)   # (OW, Cp)
                acc = acc + jnp.dot(win, w_ref[dy * 3 + dx],
                                    preferred_element_type=jnp.float32)

        y_ref[0, 0] = acc                                        # raw conv output

        # Partial BatchNorm statistics, accumulated across the OH grid axis.
        part = jnp.concatenate(
            [jnp.sum(acc, axis=0, keepdims=True),
             jnp.sum(acc * acc, axis=0, keepdims=True)], axis=0)  # (2, OCp)

        @pl.when(oh == 0)
        def _():
            stats_ref[...] = jnp.zeros_like(stats_ref)

        stats_ref[0, :, :] = stats_ref[0, :, :] + part

    return kernel


def _affine_relu_kernel(x_ref, s_ref, t_ref, o_ref):
    # x_ref: (1, H, W, Cp) ; s/t: (1, Cp) broadcast over channels
    o_ref[...] = jnp.maximum(x_ref[...] * s_ref[...] + t_ref[...], 0.0)


# ----------------------------- wrappers ------------------------------------- #

def maxpool2x2_nhwc(x):
    """2x2 max pool, NHWC layout, channels on the lane axis."""
    N, H, W, Cp = x.shape
    Hh, Wh = H // 2, W // 2
    xv = x.reshape(N * Hh, 2, Wh, 2, Cp)          # row-major view, free in XLA
    out = pl.pallas_call(
        _pool_kernel,
        grid=(N,),
        in_specs=[pl.BlockSpec((Hh, 2, Wh, 2, Cp), lambda n: (n, 0, 0, 0, 0))],
        out_specs=pl.BlockSpec((Hh, Wh, Cp), lambda n: (n, 0, 0)),
        out_shape=jax.ShapeDtypeStruct((N * Hh, Wh, Cp), x.dtype),
        compiler_params=pltpu.CompilerParams(dimension_semantics=("parallel",)),
    )(xv)
    return out.reshape(N, Hh, Wh, Cp)


def conv3x3_pass1(x, w9, in_scale=None, in_shift=None):
    """Implicit-GEMM 3x3 valid conv.  Returns raw (pre-BN) output + per-batch
    partial BN statistics.  Optionally fuses relu(x*scale+shift) onto the input."""
    N, H, W, Cp = x.shape
    OCp = w9.shape[-1]
    OH, OW = H - 2, W - 2
    fuse = in_scale is not None
    if not fuse:
        in_scale = jnp.ones((1, Cp), jnp.float32)
        in_shift = jnp.zeros((1, Cp), jnp.float32)

    kernel = _make_conv_kernel(OW, fuse)
    cost = pl.CostEstimate(
        flops=2 * N * OH * OW * 9 * Cp * OCp,
        transcendentals=0,
        bytes_accessed=3 * x.size * 4 + w9.size * 2 + N * OH * OW * OCp * 4,
    )

    y, stats = pl.pallas_call(
        kernel,
        grid=(N, OH),
        in_specs=[
            # three single-row slabs of the same array = the 2-row halo
            pl.BlockSpec((1, 1, W, Cp), lambda n, oh: (n, oh, 0, 0)),
            pl.BlockSpec((1, 1, W, Cp), lambda n, oh: (n, oh + 1, 0, 0)),
            pl.BlockSpec((1, 1, W, Cp), lambda n, oh: (n, oh + 2, 0, 0)),
            # weights / fused-BN affine stay VMEM-resident across the grid
            pl.BlockSpec((9, Cp, OCp), lambda n, oh: (0, 0, 0)),
            pl.BlockSpec((1, Cp), lambda n, oh: (0, 0)),
            pl.BlockSpec((1, Cp), lambda n, oh: (0, 0)),
        ],
        out_specs=[
            pl.BlockSpec((1, 1, OW, OCp), lambda n, oh: (n, oh, 0, 0)),
            pl.BlockSpec((1, 2, OCp), lambda n, oh: (n, 0, 0)),   # accumulator
        ],
        out_shape=[
            jax.ShapeDtypeStruct((N, OH, OW, OCp), jnp.float32),
            jax.ShapeDtypeStruct((N, 2, OCp), jnp.float32),
        ],
        compiler_params=pltpu.CompilerParams(
            dimension_semantics=("parallel", "arbitrary")),
        cost_estimate=cost,
    )(x, x, x, w9, in_scale, in_shift)
    return y, stats


def affine_relu(x, scale, shift):
    N, H, W, Cp = x.shape
    return pl.pallas_call(
        _affine_relu_kernel,
        grid=(N,),
        in_specs=[
            pl.BlockSpec((1, H, W, Cp), lambda n: (n, 0, 0, 0)),
            pl.BlockSpec((1, Cp), lambda n: (0, 0)),
            pl.BlockSpec((1, Cp), lambda n: (0, 0)),
        ],
        out_specs=pl.BlockSpec((1, H, W, Cp), lambda n: (n, 0, 0, 0)),
        out_shape=jax.ShapeDtypeStruct(x.shape, jnp.float32),
        compiler_params=pltpu.CompilerParams(dimension_semantics=("parallel",)),
    )(x, scale, shift)


def _bn_affine(stats, count, gamma, beta):
    """Fold train-mode BatchNorm (biased var, eps=1e-5) into scale/shift."""
    s = jnp.sum(stats, axis=0)                       # (2, OCp)
    mean = s[0] / count
    var = jnp.maximum(s[1] / count - mean * mean, 0.0)
    scale = gamma * jax.lax.rsqrt(var + EPS)
    shift = beta - mean * scale
    return scale.reshape(1, -1).astype(jnp.float32), shift.reshape(1, -1).astype(jnp.float32)


def _prep_weight(w_oihw, cp, ocp):
    # torch (OC, C, 3, 3) -> (3, 3, C, OC) -> zero-pad channels -> (9, Cp, OCp) bf16
    oc, c, _, _ = w_oihw.shape
    w = jnp.transpose(w_oihw, (2, 3, 1, 0))
    w = jnp.pad(w, ((0, 0), (0, 0), (0, cp - c), (0, ocp - oc)))
    return w.reshape(9, cp, ocp).astype(jnp.bfloat16)


def down_forward(x_nchw, params):
    N, C, H, W = x_nchw.shape
    OC = params["w1"].shape[0]
    Cp = _round_up(C, LANE)
    OCp = _round_up(OC, LANE)

    w1 = _prep_weight(params["w1"], Cp, OCp)
    w2 = _prep_weight(params["w2"], OCp, OCp)
    g1 = jnp.pad(params["g1"], (0, OCp - OC), constant_values=1.0)
    be1 = jnp.pad(params["beta1"], (0, OCp - OC))
    g2 = jnp.pad(params["g2"], (0, OCp - OC), constant_values=1.0)
    be2 = jnp.pad(params["beta2"], (0, OCp - OC))
    # NOTE: conv biases (params["b1"]/["b2"]) are intentionally NOT applied in
    # the kernel path: a per-channel constant is exactly cancelled by the
    # train-mode BatchNorm mean subtraction.

    # single entry transpose: NCHW -> NHWC, channels zero-padded to lane width
    x = jnp.transpose(x_nchw, (0, 2, 3, 1))
    x = jnp.pad(x, ((0, 0), (0, 0), (0, 0), (0, Cp - C)))

    x = maxpool2x2_nhwc(x)                            # (N, H/2, W/2, Cp)

    # conv1: implicit-GEMM conv + partial BN stats
    y1, s1 = conv3x3_pass1(x, w1)
    n1 = x.shape[0] * (x.shape[1] - 2) * (x.shape[2] - 2)
    sc1, sh1 = _bn_affine(s1, n1, g1, be1)

    # conv2: BN1 + ReLU fused into the conv kernel's input load
    y2, s2 = conv3x3_pass1(y1, w2, sc1, sh1)
    n2 = y1.shape[0] * (y1.shape[1] - 2) * (y1.shape[2] - 2)
    sc2, sh2 = _bn_affine(s2, n2, g2, be2)

    z = affine_relu(y2, sc2, sh2)                     # (N, OH2, OW2, OCp)

    # single exit transpose: strip channel padding, NHWC -> NCHW
    return jnp.transpose(z[..., :OC], (0, 3, 1, 2))


# ----------------------------- params & reference --------------------------- #

def init_params(key, in_channels, out_channels):
    k1, k2, k3, k4 = jax.random.split(key, 4)
    fan1 = in_channels * 9
    bound1 = 1.0 / math.sqrt(fan1)
    w1 = jax.random.uniform(k1, (out_channels, in_channels, 3, 3), jnp.float32, -bound1, bound1)
    b1 = jax.random.uniform(k2, (out_channels,), jnp.float32, -bound1, bound1)
    fan2 = out_channels * 9
    bound2 = 1.0 / math.sqrt(fan2)
    w2 = jax.random.uniform(k3, (out_channels, out_channels, 3, 3), jnp.float32, -bound2, bound2)
    b2 = jax.random.uniform(k4, (out_channels,), jnp.float32, -bound2, bound2)
    ones = jnp.ones((out_channels,), jnp.float32)
    zeros = jnp.zeros((out_channels,), jnp.float32)
    return dict(w1=w1, b1=b1, g1=ones, beta1=zeros,
                w2=w2, b2=b2, g2=ones, beta2=zeros)


def ref_forward(x, p):
    """Pure-JAX reference mirroring the PyTorch forward (train-mode BN).
    Convs use bf16 inputs with f32 accumulation to match the kernel's MXU path."""
    N, C, H, W = x.shape
    x = x.reshape(N, C, H // 2, 2, W // 2, 2).max(axis=(3, 5))

    def conv_bn_relu(x, w, b, g, beta):
        y = jax.lax.conv_general_dilated(
            x.astype(jnp.bfloat16), w.astype(jnp.bfloat16), (1, 1), "VALID",
            dimension_numbers=("NCHW", "OIHW", "NCHW"),
            preferred_element_type=jnp.float32) + b[None, :, None, None]
        mean = y.mean(axis=(0, 2, 3), keepdims=True)
        var = ((y - mean) ** 2).mean(axis=(0, 2, 3), keepdims=True)
        y = (y - mean) * jax.lax.rsqrt(var + EPS)
        y = y * g[None, :, None, None] + beta[None, :, None, None]
        return jnp.maximum(y, 0.0)

    x = conv_bn_relu(x, p["w1"], p["b1"], p["g1"], p["beta1"])
    x = conv_bn_relu(x, p["w2"], p["b2"], p["g2"], p["beta2"])
    return x


# ----------------------------- main ------------------------------------------ #

if __name__ == "__main__":
    key = jax.random.PRNGKey(0)
    kx, kp = jax.random.split(key)

    in_channels, out_channels = 4, 8
    x = jax.random.normal(kx, (2, in_channels, 16, 16), jnp.float32)
    params = init_params(kp, in_channels, out_channels)

    out = jax.jit(down_forward)(x, params)
    out = jax.block_until_ready(out)

    assert out.shape == (2, out_channels, 4, 4), out.shape
    ref = ref_forward(x, params)
    err = float(jnp.max(jnp.abs(out - ref)))
    # bf16 matmuls + different accumulation order vs. the XLA conv reference
    assert err < 5e-3, f"max abs err {err}"

    print("KERNEL_OK")
</pallas_src>

<mosaic_0001>
module attributes {stable_mosaic.version = 11 : i64} {
  func.func @_pool_kernel(%arg0: i32, %arg1: memref<8x2x8x2x128xf32, #tpu.memory_space<vmem>>, %arg2: memref<8x8x128xf32, #tpu.memory_space<vmem>>) attributes {dimension_semantics = [#tpu.dimension_semantics<parallel>], iteration_bounds = array<i64: 2>, scalar_prefetch = 0 : i64, scratch_operands = 0 : i64, tpu.core_type = #tpu.core_type<tc>, window_params = [{transform_indices = @transform_0, window_bounds = array<i64: 8, 2, 8, 2, 128>}, {transform_indices = @transform_1, window_bounds = array<i64: 8, 8, 128>}]} {
    %c0 = arith.constant 0 : index
    %c0_0 = arith.constant 0 : index
    %c0_1 = arith.constant 0 : index
    %c0_2 = arith.constant 0 : index
    %c0_3 = arith.constant 0 : index
    %0 = vector.load %arg1[%c0, %c0_0, %c0_1, %c0_2, %c0_3] : memref<8x2x8x2x128xf32, #tpu.memory_space<vmem>>, vector<8x2x8x2x128xf32>
    %cst = arith.constant dense<0xFF800000> : vector<8x2x8x128xf32>
    %1 = vector.multi_reduction <maximumf>, %0, %cst [3] : vector<8x2x8x2x128xf32> to vector<8x2x8x128xf32>
    %cst_4 = arith.constant dense<0xFF800000> : vector<8x8x128xf32>
    %2 = vector.multi_reduction <maximumf>, %1, %cst_4 [1] : vector<8x2x8x128xf32> to vector<8x8x128xf32>
    %c0_5 = arith.constant 0 : index
    %c0_6 = arith.constant 0 : index
    %c0_7 = arith.constant 0 : index
    %3 = vector.load %arg2[%c0_5, %c0_6, %c0_7] : memref<8x8x128xf32, #tpu.memory_space<vmem>>, vector<8x8x128xf32>
    tpu.vector_store %arg2[%c0_5, %c0_6, %c0_7], %2 {strides = array<i32>} : memref<8x8x128xf32, #tpu.memory_space<vmem>>, vector<8x8x128xf32>,
    return
  }
  func.func @transform_0(%arg0: i32) -> (i32, i32, i32, i32, i32) {
    %c0_i32 = arith.constant 0 : i32
    %c0_i32_0 = arith.constant 0 : i32
    %c0_i32_1 = arith.constant 0 : i32
    %c0_i32_2 = arith.constant 0 : i32
    %c0_i32_3 = arith.constant 0 : i32
    return %arg0, %c0_i32, %c0_i32_0, %c0_i32_1, %c0_i32_2 : i32, i32, i32, i32, i32
  }
  func.func @transform_1(%arg0: i32) -> (i32, i32, i32) {
    %c0_i32 = arith.constant 0 : i32
    %c0_i32_0 = arith.constant 0 : i32
    %c0_i32_1 = arith.constant 0 : i32
    return %arg0, %c0_i32, %c0_i32_0 : i32, i32, i32
  }
}

module attributes {stable_mosaic.version = 11 : i64} {
  func.func @kernel(%arg0: i32, %arg1: i32, %arg2: memref<1x1x8x128xf32, #tpu.memory_space<vmem>>, %arg3: memref<1x1x8x128xf32, #tpu.memory_space<vmem>>, %arg4: memref<1x1x8x128xf32, #tpu.memory_space<vmem>>, %arg5: memref<9x128x128xbf16, #tpu.memory_space<vmem>>, %arg6: memref<1x128xf32, #tpu.memory_space<vmem>>, %arg7: memref<1x128xf32, #tpu.memory_space<vmem>>, %arg8: memref<1x1x6x128xf32, #tpu.memory_space<vmem>>, %arg9: memref<1x2x128xf32, #tpu.memory_space<vmem>>) attributes {dimension_semantics = [#tpu.dimension_semantics<parallel>, #tpu.dimension_semantics<arbitrary>], iteration_bounds = array<i64: 2, 6>, scalar_prefetch = 0 : i64, scratch_operands = 0 : i64, tpu.core_type = #tpu.core_type<tc>, window_params = [{transform_indices = @transform_0, window_bounds = array<i64: 1, 1, 8, 128>}, {transform_indices = @transform_1, window_bounds = array<i64: 1, 1, 8, 128>}, {transform_indices = @transform_2, window_bounds = array<i64: 1, 1, 8, 128>}, {pipeline_mode = #tpu.pipeline_mode<synchronous>, transform_indices = @transform_3, window_bounds = array<i64: 9, 128, 128>}, {pipeline_mode = #tpu.pipeline_mode<synchronous>, transform_indices = @transform_4, window_bounds = array<i64: 1, 128>}, {pipeline_mode = #tpu.pipeline_mode<synchronous>, transform_indices = @transform_5, window_bounds = array<i64: 1, 128>}, {transform_indices = @transform_6, window_bounds = array<i64: 1, 1, 6, 128>}, {transform_indices = @transform_7, window_bounds = array<i64: 1, 2, 128>}]} {
    %c0 = arith.constant 0 : index
    %c0_0 = arith.constant 0 : index
    %c0_1 = arith.constant 0 : index
    %c0_2 = arith.constant 0 : index
    %0 = vector.load %arg2[%c0, %c0_0, %c0_1, %c0_2] : memref<1x1x8x128xf32, #tpu.memory_space<vmem>>, vector<1x1x8x128xf32>
    %1 = vector.shape_cast %0 : vector<1x1x8x128xf32> to vector<8x128xf32>
    %c0_3 = arith.constant 0 : index
    %c0_4 = arith.constant 0 : index
    %c0_5 = arith.constant 0 : index
    %c0_6 = arith.constant 0 : index
    %2 = vector.load %arg3[%c0_3, %c0_4, %c0_5, %c0_6] : memref<1x1x8x128xf32, #tpu.memory_space<vmem>>, vector<1x1x8x128xf32>
    %3 = vector.shape_cast %2 : vector<1x1x8x128xf32> to vector<8x128xf32>
    %c0_7 = arith.constant 0 : index
    %c0_8 = arith.constant 0 : index
    %c0_9 = arith.constant 0 : index
    %c0_10 = arith.constant 0 : index
    %4 = vector.load %arg4[%c0_7, %c0_8, %c0_9, %c0_10] : memref<1x1x8x128xf32, #tpu.memory_space<vmem>>, vector<1x1x8x128xf32>
    %5 = vector.shape_cast %4 : vector<1x1x8x128xf32> to vector<8x128xf32>
    %cst = arith.constant 0.000000e+00 : f32
    %6 = vector.broadcast %cst : f32 to vector<6x128xf32>
    %7 = vector.extract_strided_slice %1 {offsets = [0, 0], sizes = [6, 128], strides = [1, 1]} : vector<8x128xf32> to vector<6x128xf32>
    %8 = arith.truncf %7 : vector<6x128xf32> to vector<6x128xbf16>
    %c0_11 = arith.constant 0 : index
    %c0_12 = arith.constant 0 : index
    %c0_13 = arith.constant 0 : index
    %9 = vector.load %arg5[%c0_11, %c0_12, %c0_13] : memref<9x128x128xbf16, #tpu.memory_space<vmem>>, vector<1x128x128xbf16>
    %10 = vector.shape_cast %9 : vector<1x128x128xbf16> to vector<128x128xbf16>
    %cst_14 = arith.constant dense<0.000000e+00> : vector<6x128xf32>
    %11 = tpu.matmul %8, %10, %cst_14 {dimension_numbers = #tpu.dot_dimension_numbers<[1], [0], [0], [1], [0, 0, 1, 1], [], []>} : vector<6x128xbf16>, vector<128x128xbf16>, vector<6x128xf32> -> vector<6x128xf32>
    %12 = arith.addf %6, %11 : vector<6x128xf32>
    %13 = vector.extract_strided_slice %1 {offsets = [1, 0], sizes = [6, 128], strides = [1, 1]} : vector<8x128xf32> to vector<6x128xf32>
    %14 = arith.truncf %13 : vector<6x128xf32> to vector<6x128xbf16>
    %c1 = arith.constant 1 : index
    %c0_15 = arith.constant 0 : index
    %c0_16 = arith.constant 0 : index
    %15 = vector.load %arg5[%c1, %c0_15, %c0_16] : memref<9x128x128xbf16, #tpu.memory_space<vmem>>, vector<1x128x128xbf16>
    %16 = vector.shape_cast %15 : vector<1x128x128xbf16> to vector<128x128xbf16>
    %cst_17 = arith.constant dense<0.000000e+00> : vector<6x128xf32>
    %17 = tpu.matmul %14, %16, %cst_17 {dimension_numbers = #tpu.dot_dimension_numbers<[1], [0], [0], [1], [0, 0, 1, 1], [], []>} : vector<6x128xbf16>, vector<128x128xbf16>, vector<6x128xf32> -> vector<6x128xf32>
    %18 = arith.addf %12, %17 : vector<6x128xf32>
    %19 = vector.extract_strided_slice %1 {offsets = [2, 0], sizes = [6, 128], strides = [1, 1]} : vector<8x128xf32> to vector<6x128xf32>
    %20 = arith.truncf %19 : vector<6x128xf32> to vector<6x128xbf16>
    %c2 = arith.constant 2 : index
    %c0_18 = arith.constant 0 : index
    %c0_19 = arith.constant 0 : index
    %21 = vector.load %arg5[%c2, %c0_18, %c0_19] : memref<9x128x128xbf16, #tpu.memory_space<vmem>>, vector<1x128x128xbf16>
    %22 = vector.shape_cast %21 : vector<1x128x128xbf16> to vector<128x128xbf16>
    %cst_20 = arith.constant dense<0.000000e+00> : vector<6x128xf32>
    %23 = tpu.matmul %20, %22, %cst_20 {dimension_numbers = #tpu.dot_dimension_numbers<[1], [0], [0], [1], [0, 0, 1, 1], [], []>} : vector<6x128xbf16>, vector<128x128xbf16>, vector<6x128xf32> -> vector<6x128xf32>
    %24 = arith.addf %18, %23 : vector<6x128xf32>
    %25 = vector.extract_strided_slice %3 {offsets = [0, 0], sizes = [6, 128], strides = [1, 1]} : vector<8x128xf32> to vector<6x128xf32>
    %26 = arith.truncf %25 : vector<6x128xf32> to vector<6x128xbf16>
    %c3 = arith.constant 3 : index
    %c0_21 = arith.constant 0 : index
    %c0_22 = arith.constant 0 : index
    %27 = vector.load %arg5[%c3, %c0_21, %c0_22] : memref<9x128x128xbf16, #tpu.memory_space<vmem>>, vector<1x128x128xbf16>
    %28 = vector.shape_cast %27 : vector<1x128x128xbf16> to vector<128x128xbf16>
    %cst_23 = arith.constant dense<0.000000e+00> : vector<6x128xf32>
    %29 = tpu.matmul %26, %28, %cst_23 {dimension_numbers = #tpu.dot_dimension_numbers<[1], [0], [0], [1], [0, 0, 1, 1], [], []>} : vector<6x128xbf16>, vector<128x128xbf16>, vector<6x128xf32> -> vector<6x128xf32>
    %30 = arith.addf %24, %29 : vector<6x128xf32>
    %31 = vector.extract_strided_slice %3 {offsets = [1, 0], sizes = [6, 128], strides = [1, 1]} : vector<8x128xf32> to vector<6x128xf32>
    %32 = arith.truncf %31 : vector<6x128xf32> to vector<6x128xbf16>
    %c4 = arith.constant 4 : index
    %c0_24 = arith.constant 0 : index
    %c0_25 = arith.constant 0 : index
    %33 = vector.load %arg5[%c4, %c0_24, %c0_25] : memref<9x128x128xbf16, #tpu.memory_space<vmem>>, vector<1x128x128xbf16>
    %34 = vector.shape_cast %33 : vector<1x128x128xbf16> to vector<128x128xbf16>
    %cst_26 = arith.constant dense<0.000000e+00> : vector<6x128xf32>
    %35 = tpu.matmul %32, %34, %cst_26 {dimension_numbers = #tpu.dot_dimension_numbers<[1], [0], [0], [1], [0, 0, 1, 1], [], []>} : vector<6x128xbf16>, vector<128x128xbf16>, vector<6x128xf32> -> vector<6x128xf32>
    %36 = arith.addf %30, %35 : vector<6x128xf32>
    %37 = vector.extract_strided_slice %3 {offsets = [2, 0], sizes = [6, 128], strides = [1, 1]} : vector<8x128xf32> to vector<6x128xf32>
    %38 = arith.truncf %37 : vector<6x128xf32> to vector<6x128xbf16>
    %c5 = arith.constant 5 : index
    %c0_27 = arith.constant 0 : index
    %c0_28 = arith.constant 0 : index
    %39 = vector.load %arg5[%c5, %c0_27, %c0_28] : memref<9x128x128xbf16, #tpu.memory_space<vmem>>, vector<1x128x128xbf16>
    %40 = vector.shape_cast %39 : vector<1x128x128xbf16> to vector<128x128xbf16>
    %cst_29 = arith.constant dense<0.000000e+00> : vector<6x128xf32>
    %41 = tpu.matmul %38, %40, %cst_29 {dimension_numbers = #tpu.dot_dimension_numbers<[1], [0], [0], [1], [0, 0, 1, 1], [], []>} : vector<6x128xbf16>, vector<128x128xbf16>, vector<6x128xf32> -> vector<6x128xf32>
    %42 = arith.addf %36, %41 : vector<6x128xf32>
    %43 = vector.extract_strided_slice %5 {offsets = [0, 0], sizes = [6, 128], strides = [1, 1]} : vector<8x128xf32> to vector<6x128xf32>
    %44 = arith.truncf %43 : vector<6x128xf32> to vector<6x128xbf16>
    %c6 = arith.constant 6 : index
    %c0_30 = arith.constant 0 : index
    %c0_31 = arith.constant 0 : index
    %45 = vector.load %arg5[%c6, %c0_30, %c0_31] : memref<9x128x128xbf16, #tpu.memory_space<vmem>>, vector<1x128x128xbf16>
    %46 = vector.shape_cast %45 : vector<1x128x128xbf16> to vector<128x128xbf16>
    %cst_32 = arith.constant dense<0.000000e+00> : vector<6x128xf32>
    %47 = tpu.matmul %44, %46, %cst_32 {dimension_numbers = #tpu.dot_dimension_numbers<[1], [0], [0], [1], [0, 0, 1, 1], [], []>} : vector<6x128xbf16>, vector<128x128xbf16>, vector<6x128xf32> -> vector<6x128xf32>
    %48 = arith.addf %42, %47 : vector<6x128xf32>
    %49 = vector.extract_strided_slice %5 {offsets = [1, 0], sizes = [6, 128], strides = [1, 1]} : vector<8x128xf32> to vector<6x128xf32>
    %50 = arith.truncf %49 : vector<6x128xf32> to vector<6x128xbf16>
    %c7 = arith.constant 7 : index
    %c0_33 = arith.constant 0 : index
    %c0_34 = arith.constant 0 : index
    %51 = vector.load %arg5[%c7, %c0_33, %c0_34] : memref<9x128x128xbf16, #tpu.memory_space<vmem>>, vector<1x128x128xbf16>
    %52 = vector.shape_cast %51 : vector<1x128x128xbf16> to vector<128x128xbf16>
    %cst_35 = arith.constant dense<0.000000e+00> : vector<6x128xf32>
    %53 = tpu.matmul %50, %52, %cst_35 {dimension_numbers = #tpu.dot_dimension_numbers<[1], [0], [0], [1], [0, 0, 1, 1], [], []>} : vector<6x128xbf16>, vector<128x128xbf16>, vector<6x128xf32> -> vector<6x128xf32>
    %54 = arith.addf %48, %53 : vector<6x128xf32>
    %55 = vector.extract_strided_slice %5 {offsets = [2, 0], sizes = [6, 128], strides = [1, 1]} : vector<8x128xf32> to vector<6x128xf32>
    %56 = arith.truncf %55 : vector<6x128xf32> to vector<6x128xbf16>
    %c8 = arith.constant 8 : index
    %c0_36 = arith.constant 0 : index
    %c0_37 = arith.constant 0 : index
    %57 = vector.load %arg5[%c8, %c0_36, %c0_37] : memref<9x128x128xbf16, #tpu.memory_space<vmem>>, vector<1x128x128xbf16>
    %58 = vector.shape_cast %57 : vector<1x128x128xbf16> to vector<128x128xbf16>
    %cst_38 = arith.constant dense<0.000000e+00> : vector<6x128xf32>
    %59 = tpu.matmul %56, %58, %cst_38 {dimension_numbers = #tpu.dot_dimension_numbers<[1], [0], [0], [1], [0, 0, 1, 1], [], []>} : vector<6x128xbf16>, vector<128x128xbf16>, vector<6x128xf32> -> vector<6x128xf32>
    %60 = arith.addf %54, %59 : vector<6x128xf32>
    %c0_39 = arith.constant 0 : index
    %c0_40 = arith.constant 0 : index
    %c0_41 = arith.constant 0 : index
    %c0_42 = arith.constant 0 : index
    %61 = vector.load %arg8[%c0_39, %c0_40, %c0_41, %c0_42] : memref<1x1x6x128xf32, #tpu.memory_space<vmem>>, vector<1x1x6x128xf32>
    %62 = vector.shape_cast %61 : vector<1x1x6x128xf32> to vector<6x128xf32>
    %63 = vector.shape_cast %60 : vector<6x128xf32> to vector<1x1x6x128xf32>
    tpu.vector_store %arg8[%c0_39, %c0_40, %c0_41, %c0_42], %63 {strides = array<i32>} : memref<1x1x6x128xf32, #tpu.memory_space<vmem>>, vector<1x1x6x128xf32>,
    %cst_43 = arith.constant dense<0.000000e+00> : vector<128xf32>
    %64 = vector.multi_reduction <add>, %60, %cst_43 [0] : vector<6x128xf32> to vector<128xf32>
    %65 = vector.shape_cast %64 : vector<128xf32> to vector<1x128xf32>
    %66 = arith.mulf %60, %60 : vector<6x128xf32>
    %cst_44 = arith.constant dense<0.000000e+00> : vector<128xf32>
    %67 = vector.multi_reduction <add>, %66, %cst_44 [0] : vector<6x128xf32> to vector<128xf32>
    %68 = vector.shape_cast %67 : vector<128xf32> to vector<1x128xf32>
    %69 = tpu.concatenate %65, %68 in 0 : vector<1x128xf32>, vector<1x128xf32> -> vector<2x128xf32>
    %c0_i32 = arith.constant 0 : i32
    %70 = arith.cmpi eq, %arg1, %c0_i32 : i32
    %71 = arith.extui %70 : i1 to i32
    %c0_i32_45 = arith.constant 0 : i32
    %72 = arith.cmpi ne, %71, %c0_i32_45 : i32
    scf.if %72 {
      %cst_52 = arith.constant 0.000000e+00 : f32
      %79 = vector.broadcast %cst_52 : f32 to vector<1x2x128xf32>
      %c0_53 = arith.constant 0 : index
      %c0_54 = arith.constant 0 : index
      %c0_55 = arith.constant 0 : index
      %80 = vector.load %arg9[%c0_53, %c0_54, %c0_55] : memref<1x2x128xf32, #tpu.memory_space<vmem>>, vector<1x2x128xf32>
      tpu.vector_store %arg9[%c0_53, %c0_54, %c0_55], %79 {strides = array<i32>} : memref<1x2x128xf32, #tpu.memory_space<vmem>>, vector<1x2x128xf32>,
    } else {
    }
    %c0_46 = arith.constant 0 : index
    %c0_47 = arith.constant 0 : index
    %c0_48 = arith.constant 0 : index
    %73 = vector.load %arg9[%c0_46, %c0_47, %c0_48] : memref<1x2x128xf32, #tpu.memory_space<vmem>>, vector<1x2x128xf32>
    %74 = vector.shape_cast %73 : vector<1x2x128xf32> to vector<2x128xf32>
    %75 = arith.addf %74, %69 : vector<2x128xf32>
    %c0_49 = arith.constant 0 : index
    %c0_50 = arith.constant 0 : index
    %c0_51 = arith.constant 0 : index
    %76 = vector.load %arg9[%c0_49, %c0_50, %c0_51] : memref<1x2x128xf32, #tpu.memory_space<vmem>>, vector<1x2x128xf32>
    %77 = vector.shape_cast %76 : vector<1x2x128xf32> to vector<2x128xf32>
    %78 = vector.shape_cast %75 : vector<2x128xf32> to vector<1x2x128xf32>
    tpu.vector_store %arg9[%c0_49, %c0_50, %c0_51], %78 {strides = array<i32>} : memref<1x2x128xf32, #tpu.memory_space<vmem>>, vector<1x2x128xf32>,
    return
  }
  func.func @transform_0(%arg0: i32, %arg1: i32) -> (i32, i32, i32, i32) {
    %c0_i32 = arith.constant 0 : i32
    %c0_i32_0 = arith.constant 0 : i32
    %c0_i32_1 = arith.constant 0 : i32
    return %arg0, %arg1, %c0_i32, %c0_i32_0 : i32, i32, i32, i32
  }
  func.func @transform_1(%arg0: i32, %arg1: i32) -> (i32, i32, i32, i32) {
    %c1_i32 = arith.constant 1 : i32
    %0 = arith.addi %arg1, %c1_i32 : i32
    %c0_i32 = arith.constant 0 : i32
    %c0_i32_0 = arith.constant 0 : i32
    %c0_i32_1 = arith.constant 0 : i32
    return %arg0, %0, %c0_i32, %c0_i32_0 : i32, i32, i32, i32
  }
  func.func @transform_2(%arg0: i32, %arg1: i32) -> (i32, i32, i32, i32) {
    %c2_i32 = arith.constant 2 : i32
    %0 = arith.addi %arg1, %c2_i32 : i32
    %c0_i32 = arith.constant 0 : i32
    %c0_i32_0 = arith.constant 0 : i32
    %c0_i32_1 = arith.constant 0 : i32
    return %arg0, %0, %c0_i32, %c0_i32_0 : i32, i32, i32, i32
  }
  func.func @transform_3(%arg0: i32, %arg1: i32) -> (i32, i32, i32) {
    %c0_i32 = arith.constant 0 : i32
    %c0_i32_0 = arith.constant 0 : i32
    %c0_i32_1 = arith.constant 0 : i32
    %c0_i32_2 = arith.constant 0 : i32
    return %c0_i32, %c0_i32_0, %c0_i32_1 : i32, i32, i32
  }
  func.func @transform_4(%arg0: i32, %arg1: i32) -> (i32, i32) {
    %c0_i32 = arith.constant 0 : i32
    %c0_i32_0 = arith.constant 0 : i32
    %c0_i32_1 = arith.constant 0 : i32
    return %c0_i32, %c0_i32_0 : i32, i32
  }
  func.func @transform_5(%arg0: i32, %arg1: i32) -> (i32, i32) {
    %c0_i32 = arith.constant 0 : i32
    %c0_i32_0 = arith.constant 0 : i32
    %c0_i32_1 = arith.constant 0 : i32
    return %c0_i32, %c0_i32_0 : i32, i32
  }
  func.func @transform_6(%arg0: i32, %arg1: i32) -> (i32, i32, i32, i32) {
    %c0_i32 = arith.constant 0 : i32
    %c0_i32_0 = arith.constant 0 : i32
    %c0_i32_1 = arith.constant 0 : i32
    return %arg0, %arg1, %c0_i32, %c0_i32_0 : i32, i32, i32, i32
  }
  func.func @transform_7(%arg0: i32, %arg1: i32) -> (i32, i32, i32) {
    %c0_i32 = arith.constant 0 : i32
    %c0_i32_0 = arith.constant 0 : i32
    %c0_i32_1 = arith.constant 0 : i32
    return %arg0, %c0_i32, %c0_i32_0 : i32, i32, i32
  }
}

module attributes {stable_mosaic.version = 11 : i64} {
  func.func @kernel(%arg0: i32, %arg1: i32, %arg2: memref<1x1x6x128xf32, #tpu.memory_space<vmem>>, %arg3: memref<1x1x6x128xf32, #tpu.memory_space<vmem>>, %arg4: memref<1x1x6x128xf32, #tpu.memory_space<vmem>>, %arg5: memref<9x128x128xbf16, #tpu.memory_space<vmem>>, %arg6: memref<1x128xf32, #tpu.memory_space<vmem>>, %arg7: memref<1x128xf32, #tpu.memory_space<vmem>>, %arg8: memref<1x1x4x128xf32, #tpu.memory_space<vmem>>, %arg9: memref<1x2x128xf32, #tpu.memory_space<vmem>>) attributes {dimension_semantics = [#tpu.dimension_semantics<parallel>, #tpu.dimension_semantics<arbitrary>], iteration_bounds = array<i64: 2, 4>, scalar_prefetch = 0 : i64, scratch_operands = 0 : i64, tpu.core_type = #tpu.core_type<tc>, window_params = [{transform_indices = @transform_0, window_bounds = array<i64: 1, 1, 6, 128>}, {transform_indices = @transform_1, window_bounds = array<i64: 1, 1, 6, 128>}, {transform_indices = @transform_2, window_bounds = array<i64: 1, 1, 6, 128>}, {pipeline_mode = #tpu.pipeline_mode<synchronous>, transform_indices = @transform_3, window_bounds = array<i64: 9, 128, 128>}, {pipeline_mode = #tpu.pipeline_mode<synchronous>, transform_indices = @transform_4, window_bounds = array<i64: 1, 128>}, {pipeline_mode = #tpu.pipeline_mode<synchronous>, transform_indices = @transform_5, window_bounds = array<i64: 1, 128>}, {transform_indices = @transform_6, window_bounds = array<i64: 1, 1, 4, 128>}, {transform_indices = @transform_7, window_bounds = array<i64: 1, 2, 128>}]} {
    %c0 = arith.constant 0 : index
    %c0_0 = arith.constant 0 : index
    %c0_1 = arith.constant 0 : index
    %c0_2 = arith.constant 0 : index
    %0 = vector.load %arg2[%c0, %c0_0, %c0_1, %c0_2] : memref<1x1x6x128xf32, #tpu.memory_space<vmem>>, vector<1x1x6x128xf32>
    %1 = vector.shape_cast %0 : vector<1x1x6x128xf32> to vector<6x128xf32>
    %c0_3 = arith.constant 0 : index
    %c0_4 = arith.constant 0 : index
    %c0_5 = arith.constant 0 : index
    %c0_6 = arith.constant 0 : index
    %2 = vector.load %arg3[%c0_3, %c0_4, %c0_5, %c0_6] : memref<1x1x6x128xf32, #tpu.memory_space<vmem>>, vector<1x1x6x128xf32>
    %3 = vector.shape_cast %2 : vector<1x1x6x128xf32> to vector<6x128xf32>
    %c0_7 = arith.constant 0 : index
    %c0_8 = arith.constant 0 : index
    %c0_9 = arith.constant 0 : index
    %c0_10 = arith.constant 0 : index
    %4 = vector.load %arg4[%c0_7, %c0_8, %c0_9, %c0_10] : memref<1x1x6x128xf32, #tpu.memory_space<vmem>>, vector<1x1x6x128xf32>
    %5 = vector.shape_cast %4 : vector<1x1x6x128xf32> to vector<6x128xf32>
    %c0_11 = arith.constant 0 : index
    %c0_12 = arith.constant 0 : index
    %6 = vector.load %arg6[%c0_11, %c0_12] : memref<1x128xf32, #tpu.memory_space<vmem>>, vector<1x128xf32>
    %c0_13 = arith.constant 0 : index
    %c0_14 = arith.constant 0 : index
    %7 = vector.load %arg7[%c0_13, %c0_14] : memref<1x128xf32, #tpu.memory_space<vmem>>, vector<1x128xf32>
    %8 = vector.broadcast %6 : vector<1x128xf32> to vector<6x128xf32>
    %9 = arith.mulf %1, %8 : vector<6x128xf32>
    %10 = vector.broadcast %7 : vector<1x128xf32> to vector<6x128xf32>
    %11 = arith.addf %9, %10 : vector<6x128xf32>
    %cst = arith.constant 0.000000e+00 : f32
    %12 = vector.broadcast %cst : f32 to vector<6x128xf32>
    %13 = arith.maximumf %11, %12 : vector<6x128xf32>
    %14 = vector.broadcast %6 : vector<1x128xf32> to vector<6x128xf32>
    %15 = arith.mulf %3, %14 : vector<6x128xf32>
    %16 = vector.broadcast %7 : vector<1x128xf32> to vector<6x128xf32>
    %17 = arith.addf %15, %16 : vector<6x128xf32>
    %cst_15 = arith.constant 0.000000e+00 : f32
    %18 = vector.broadcast %cst_15 : f32 to vector<6x128xf32>
    %19 = arith.maximumf %17, %18 : vector<6x128xf32>
    %20 = vector.broadcast %6 : vector<1x128xf32> to vector<6x128xf32>
    %21 = arith.mulf %5, %20 : vector<6x128xf32>
    %22 = vector.broadcast %7 : vector<1x128xf32> to vector<6x128xf32>
    %23 = arith.addf %21, %22 : vector<6x128xf32>
    %cst_16 = arith.constant 0.000000e+00 : f32
    %24 = vector.broadcast %cst_16 : f32 to vector<6x128xf32>
    %25 = arith.maximumf %23, %24 : vector<6x128xf32>
    %cst_17 = arith.constant 0.000000e+00 : f32
    %26 = vector.broadcast %cst_17 : f32 to vector<4x128xf32>
    %27 = vector.extract_strided_slice %13 {offsets = [0, 0], sizes = [4, 128], strides = [1, 1]} : vector<6x128xf32> to vector<4x128xf32>
    %28 = arith.truncf %27 : vector<4x128xf32> to vector<4x128xbf16>
    %c0_18 = arith.constant 0 : index
    %c0_19 = arith.constant 0 : index
    %c0_20 = arith.constant 0 : index
    %29 = vector.load %arg5[%c0_18, %c0_19, %c0_20] : memref<9x128x128xbf16, #tpu.memory_space<vmem>>, vector<1x128x128xbf16>
    %30 = vector.shape_cast %29 : vector<1x128x128xbf16> to vector<128x128xbf16>
    %cst_21 = arith.constant dense<0.000000e+00> : vector<4x128xf32>
    %31 = tpu.matmul %28, %30, %cst_21 {dimension_numbers = #tpu.dot_dimension_numbers<[1], [0], [0], [1], [0, 0, 1, 1], [], []>} : vector<4x128xbf16>, vector<128x128xbf16>, vector<4x128xf32> -> vector<4x128xf32>
    %32 = arith.addf %26, %31 : vector<4x128xf32>
    %33 = vector.extract_strided_slice %13 {offsets = [1, 0], sizes = [4, 128], strides = [1, 1]} : vector<6x128xf32> to vector<4x128xf32>
    %34 = arith.truncf %33 : vector<4x128xf32> to vector<4x128xbf16>
    %c1 = arith.constant 1 : index
    %c0_22 = arith.constant 0 : index
    %c0_23 = arith.constant 0 : index
    %35 = vector.load %arg5[%c1, %c0_22, %c0_23] : memref<9x128x128xbf16, #tpu.memory_space<vmem>>, vector<1x128x128xbf16>
    %36 = vector.shape_cast %35 : vector<1x128x128xbf16> to vector<128x128xbf16>
    %cst_24 = arith.constant dense<0.000000e+00> : vector<4x128xf32>
    %37 = tpu.matmul %34, %36, %cst_24 {dimension_numbers = #tpu.dot_dimension_numbers<[1], [0], [0], [1], [0, 0, 1, 1], [], []>} : vector<4x128xbf16>, vector<128x128xbf16>, vector<4x128xf32> -> vector<4x128xf32>
    %38 = arith.addf %32, %37 : vector<4x128xf32>
    %39 = vector.extract_strided_slice %13 {offsets = [2, 0], sizes = [4, 128], strides = [1, 1]} : vector<6x128xf32> to vector<4x128xf32>
    %40 = arith.truncf %39 : vector<4x128xf32> to vector<4x128xbf16>
    %c2 = arith.constant 2 : index
    %c0_25 = arith.constant 0 : index
    %c0_26 = arith.constant 0 : index
    %41 = vector.load %arg5[%c2, %c0_25, %c0_26] : memref<9x128x128xbf16, #tpu.memory_space<vmem>>, vector<1x128x128xbf16>
    %42 = vector.shape_cast %41 : vector<1x128x128xbf16> to vector<128x128xbf16>
    %cst_27 = arith.constant dense<0.000000e+00> : vector<4x128xf32>
    %43 = tpu.matmul %40, %42, %cst_27 {dimension_numbers = #tpu.dot_dimension_numbers<[1], [0], [0], [1], [0, 0, 1, 1], [], []>} : vector<4x128xbf16>, vector<128x128xbf16>, vector<4x128xf32> -> vector<4x128xf32>
    %44 = arith.addf %38, %43 : vector<4x128xf32>
    %45 = vector.extract_strided_slice %19 {offsets = [0, 0], sizes = [4, 128], strides = [1, 1]} : vector<6x128xf32> to vector<4x128xf32>
    %46 = arith.truncf %45 : vector<4x128xf32> to vector<4x128xbf16>
    %c3 = arith.constant 3 : index
    %c0_28 = arith.constant 0 : index
    %c0_29 = arith.constant 0 : index
    %47 = vector.load %arg5[%c3, %c0_28, %c0_29] : memref<9x128x128xbf16, #tpu.memory_space<vmem>>, vector<1x128x128xbf16>
    %48 = vector.shape_cast %47 : vector<1x128x128xbf16> to vector<128x128xbf16>
    %cst_30 = arith.constant dense<0.000000e+00> : vector<4x128xf32>
    %49 = tpu.matmul %46, %48, %cst_30 {dimension_numbers = #tpu.dot_dimension_numbers<[1], [0], [0], [1], [0, 0, 1, 1], [], []>} : vector<4x128xbf16>, vector<128x128xbf16>, vector<4x128xf32> -> vector<4x128xf32>
    %50 = arith.addf %44, %49 : vector<4x128xf32>
    %51 = vector.extract_strided_slice %19 {offsets = [1, 0], sizes = [4, 128], strides = [1, 1]} : vector<6x128xf32> to vector<4x128xf32>
    %52 = arith.truncf %51 : vector<4x128xf32> to vector<4x128xbf16>
    %c4 = arith.constant 4 : index
    %c0_31 = arith.constant 0 : index
    %c0_32 = arith.constant 0 : index
    %53 = vector.load %arg5[%c4, %c0_31, %c0_32] : memref<9x128x128xbf16, #tpu.memory_space<vmem>>, vector<1x128x128xbf16>
    %54 = vector.shape_cast %53 : vector<1x128x128xbf16> to vector<128x128xbf16>
    %cst_33 = arith.constant dense<0.000000e+00> : vector<4x128xf32>
    %55 = tpu.matmul %52, %54, %cst_33 {dimension_numbers = #tpu.dot_dimension_numbers<[1], [0], [0], [1], [0, 0, 1, 1], [], []>} : vector<4x128xbf16>, vector<128x128xbf16>, vector<4x128xf32> -> vector<4x128xf32>
    %56 = arith.addf %50, %55 : vector<4x128xf32>
    %57 = vector.extract_strided_slice %19 {offsets = [2, 0], sizes = [4, 128], strides = [1, 1]} : vector<6x128xf32> to vector<4x128xf32>
    %58 = arith.truncf %57 : vector<4x128xf32> to vector<4x128xbf16>
    %c5 = arith.constant 5 : index
    %c0_34 = arith.constant 0 : index
    %c0_35 = arith.constant 0 : index
    %59 = vector.load %arg5[%c5, %c0_34, %c0_35] : memref<9x128x128xbf16, #tpu.memory_space<vmem>>, vector<1x128x128xbf16>
    %60 = vector.shape_cast %59 : vector<1x128x128xbf16> to vector<128x128xbf16>
    %cst_36 = arith.constant dense<0.000000e+00> : vector<4x128xf32>
    %61 = tpu.matmul %58, %60, %cst_36 {dimension_numbers = #tpu.dot_dimension_numbers<[1], [0], [0], [1], [0, 0, 1, 1], [], []>} : vector<4x128xbf16>, vector<128x128xbf16>, vector<4x128xf32> -> vector<4x128xf32>
    %62 = arith.addf %56, %61 : vector<4x128xf32>
    %63 = vector.extract_strided_slice %25 {offsets = [0, 0], sizes = [4, 128], strides = [1, 1]} : vector<6x128xf32> to vector<4x128xf32>
    %64 = arith.truncf %63 : vector<4x128xf32> to vector<4x128xbf16>
    %c6 = arith.constant 6 : index
    %c0_37 = arith.constant 0 : index
    %c0_38 = arith.constant 0 : index
    %65 = vector.load %arg5[%c6, %c0_37, %c0_38] : memref<9x128x128xbf16, #tpu.memory_space<vmem>>, vector<1x128x128xbf16>
    %66 = vector.shape_cast %65 : vector<1x128x128xbf16> to vector<128x128xbf16>
    %cst_39 = arith.constant dense<0.000000e+00> : vector<4x128xf32>
    %67 = tpu.matmul %64, %66, %cst_39 {dimension_numbers = #tpu.dot_dimension_numbers<[1], [0], [0], [1], [0, 0, 1, 1], [], []>} : vector<4x128xbf16>, vector<128x128xbf16>, vector<4x128xf32> -> vector<4x128xf32>
    %68 = arith.addf %62, %67 : vector<4x128xf32>
    %69 = vector.extract_strided_slice %25 {offsets = [1, 0], sizes = [4, 128], strides = [1, 1]} : vector<6x128xf32> to vector<4x128xf32>
    %70 = arith.truncf %69 : vector<4x128xf32> to vector<4x128xbf16>
    %c7 = arith.constant 7 : index
    %c0_40 = arith.constant 0 : index
    %c0_41 = arith.constant 0 : index
    %71 = vector.load %arg5[%c7, %c0_40, %c0_41] : memref<9x128x128xbf16, #tpu.memory_space<vmem>>, vector<1x128x128xbf16>
    %72 = vector.shape_cast %71 : vector<1x128x128xbf16> to vector<128x128xbf16>
    %cst_42 = arith.constant dense<0.000000e+00> : vector<4x128xf32>
    %73 = tpu.matmul %70, %72, %cst_42 {dimension_numbers = #tpu.dot_dimension_numbers<[1], [0], [0], [1], [0, 0, 1, 1], [], []>} : vector<4x128xbf16>, vector<128x128xbf16>, vector<4x128xf32> -> vector<4x128xf32>
    %74 = arith.addf %68, %73 : vector<4x128xf32>
    %75 = vector.extract_strided_slice %25 {offsets = [2, 0], sizes = [4, 128], strides = [1, 1]} : vector<6x128xf32> to vector<4x128xf32>
    %76 = arith.truncf %75 : vector<4x128xf32> to vector<4x128xbf16>
    %c8 = arith.constant 8 : index
    %c0_43 = arith.constant 0 : index
    %c0_44 = arith.constant 0 : index
    %77 = vector.load %arg5[%c8, %c0_43, %c0_44] : memref<9x128x128xbf16, #tpu.memory_space<vmem>>, vector<1x128x128xbf16>
    %78 = vector.shape_cast %77 : vector<1x128x128xbf16> to vector<128x128xbf16>
    %cst_45 = arith.constant dense<0.000000e+00> : vector<4x128xf32>
    %79 = tpu.matmul %76, %78, %cst_45 {dimension_numbers = #tpu.dot_dimension_numbers<[1], [0], [0], [1], [0, 0, 1, 1], [], []>} : vector<4x128xbf16>, vector<128x128xbf16>, vector<4x128xf32> -> vector<4x128xf32>
    %80 = arith.addf %74, %79 : vector<4x128xf32>
    %c0_46 = arith.constant 0 : index
    %c0_47 = arith.constant 0 : index
    %c0_48 = arith.constant 0 : index
    %c0_49 = arith.constant 0 : index
    %81 = vector.load %arg8[%c0_46, %c0_47, %c0_48, %c0_49] : memref<1x1x4x128xf32, #tpu.memory_space<vmem>>, vector<1x1x4x128xf32>
    %82 = vector.shape_cast %81 : vector<1x1x4x128xf32> to vector<4x128xf32>
    %83 = vector.shape_cast %80 : vector<4x128xf32> to vector<1x1x4x128xf32>
    tpu.vector_store %arg8[%c0_46, %c0_47, %c0_48, %c0_49], %83 {strides = array<i32>} : memref<1x1x4x128xf32, #tpu.memory_space<vmem>>, vector<1x1x4x128xf32>,
    %cst_50 = arith.constant dense<0.000000e+00> : vector<128xf32>
    %84 = vector.multi_reduction <add>, %80, %cst_50 [0] : vector<4x128xf32> to vector<128xf32>
    %85 = vector.shape_cast %84 : vector<128xf32> to vector<1x128xf32>
    %86 = arith.mulf %80, %80 : vector<4x128xf32>
    %cst_51 = arith.constant dense<0.000000e+00> : vector<128xf32>
    %87 = vector.multi_reduction <add>, %86, %cst_51 [0] : vector<4x128xf32> to vector<128xf32>
    %88 = vector.shape_cast %87 : vector<128xf32> to vector<1x128xf32>
    %89 = tpu.concatenate %85, %88 in 0 : vector<1x128xf32>, vector<1x128xf32> -> vector<2x128xf32>
    %c0_i32 = arith.constant 0 : i32
    %90 = arith.cmpi eq, %arg1, %c0_i32 : i32
    %91 = arith.extui %90 : i1 to i32
    %c0_i32_52 = arith.constant 0 : i32
    %92 = arith.cmpi ne, %91, %c0_i32_52 : i32
    scf.if %92 {
      %cst_59 = arith.constant 0.000000e+00 : f32
      %99 = vector.broadcast %cst_59 : f32 to vector<1x2x128xf32>
      %c0_60 = arith.constant 0 : index
      %c0_61 = arith.constant 0 : index
      %c0_62 = arith.constant 0 : index
      %100 = vector.load %arg9[%c0_60, %c0_61, %c0_62] : memref<1x2x128xf32, #tpu.memory_space<vmem>>, vector<1x2x128xf32>
      tpu.vector_store %arg9[%c0_60, %c0_61, %c0_62], %99 {strides = array<i32>} : memref<1x2x128xf32, #tpu.memory_space<vmem>>, vector<1x2x128xf32>,
    } else {
    }
    %c0_53 = arith.constant 0 : index
    %c0_54 = arith.constant 0 : index
    %c0_55 = arith.constant 0 : index
    %93 = vector.load %arg9[%c0_53, %c0_54, %c0_55] : memref<1x2x128xf32, #tpu.memory_space<vmem>>, vector<1x2x128xf32>
    %94 = vector.shape_cast %93 : vector<1x2x128xf32> to vector<2x128xf32>
    %95 = arith.addf %94, %89 : vector<2x128xf32>
    %c0_56 = arith.constant 0 : index
    %c0_57 = arith.constant 0 : index
    %c0_58 = arith.constant 0 : index
    %96 = vector.load %arg9[%c0_56, %c0_57, %c0_58] : memref<1x2x128xf32, #tpu.memory_space<vmem>>, vector<1x2x128xf32>
    %97 = vector.shape_cast %96 : vector<1x2x128xf32> to vector<2x128xf32>
    %98 = vector.shape_cast %95 : vector<2x128xf32> to vector<1x2x128xf32>
    tpu.vector_store %arg9[%c0_56, %c0_57, %c0_58], %98 {strides = array<i32>} : memref<1x2x128xf32, #tpu.memory_space<vmem>>, vector<1x2x128xf32>,
    return
  }
  func.func @transform_0(%arg0: i32, %arg1: i32) -> (i32, i32, i32, i32) {
    %c0_i32 = arith.constant 0 : i32
    %c0_i32_0 = arith.constant 0 : i32
    %c0_i32_1 = arith.constant 0 : i32
    return %arg0, %arg1, %c0_i32, %c0_i32_0 : i32, i32, i32, i32
  }
  func.func @transform_1(%arg0: i32, %arg1: i32) -> (i32, i32, i32, i32) {
    %c1_i32 = arith.constant 1 : i32
    %0 = arith.addi %arg1, %c1_i32 : i32
    %c0_i32 = arith.constant 0 : i32
    %c0_i32_0 = arith.constant 0 : i32
    %c0_i32_1 = arith.constant 0 : i32
    return %arg0, %0, %c0_i32, %c0_i32_0 : i32, i32, i32, i32
  }
  func.func @transform_2(%arg0: i32, %arg1: i32) -> (i32, i32, i32, i32) {
    %c2_i32 = arith.constant 2 : i32
    %0 = arith.addi %arg1, %c2_i32 : i32
    %c0_i32 = arith.constant 0 : i32
    %c0_i32_0 = arith.constant 0 : i32
    %c0_i32_1 = arith.constant 0 : i32
    return %arg0, %0, %c0_i32, %c0_i32_0 : i32, i32, i32, i32
  }
  func.func @transform_3(%arg0: i32, %arg1: i32) -> (i32, i32, i32) {
    %c0_i32 = arith.constant 0 : i32
    %c0_i32_0 = arith.constant 0 : i32
    %c0_i32_1 = arith.constant 0 : i32
    %c0_i32_2 = arith.constant 0 : i32
    return %c0_i32, %c0_i32_0, %c0_i32_1 : i32, i32, i32
  }
  func.func @transform_4(%arg0: i32, %arg1: i32) -> (i32, i32) {
    %c0_i32 = arith.constant 0 : i32
    %c0_i32_0 = arith.constant 0 : i32
    %c0_i32_1 = arith.constant 0 : i32
    return %c0_i32, %c0_i32_0 : i32, i32
  }
  func.func @transform_5(%arg0: i32, %arg1: i32) -> (i32, i32) {
    %c0_i32 = arith.constant 0 : i32
    %c0_i32_0 = arith.constant 0 : i32
    %c0_i32_1 = arith.constant 0 : i32
    return %c0_i32, %c0_i32_0 : i32, i32
  }
  func.func @transform_6(%arg0: i32, %arg1: i32) -> (i32, i32, i32, i32) {
    %c0_i32 = arith.constant 0 : i32
    %c0_i32_0 = arith.constant 0 : i32
    %c0_i32_1 = arith.constant 0 : i32
    return %arg0, %arg1, %c0_i32, %c0_i32_0 : i32, i32, i32, i32
  }
  func.func @transform_7(%arg0: i32, %arg1: i32) -> (i32, i32, i32) {
    %c0_i32 = arith.constant 0 : i32
    %c0_i32_0 = arith.constant 0 : i32
    %c0_i32_1 = arith.constant 0 : i32
    return %arg0, %c0_i32, %c0_i32_0 : i32, i32, i32
  }
}

module attributes {stable_mosaic.version = 11 : i64} {
  func.func @_affine_relu_kernel(%arg0: i32, %arg1: memref<1x4x4x128xf32, #tpu.memory_space<vmem>>, %arg2: memref<1x128xf32, #tpu.memory_space<vmem>>, %arg3: memref<1x128xf32, #tpu.memory_space<vmem>>, %arg4: memref<1x4x4x128xf32, #tpu.memory_space<vmem>>) attributes {dimension_semantics = [#tpu.dimension_semantics<parallel>], iteration_bounds = array<i64: 2>, scalar_prefetch = 0 : i64, scratch_operands = 0 : i64, tpu.core_type = #tpu.core_type<tc>, window_params = [{transform_indices = @transform_0, window_bounds = array<i64: 1, 4, 4, 128>}, {pipeline_mode = #tpu.pipeline_mode<synchronous>, transform_indices = @transform_1, window_bounds = array<i64: 1, 128>}, {pipeline_mode = #tpu.pipeline_mode<synchronous>, transform_indices = @transform_2, window_bounds = array<i64: 1, 128>}, {transform_indices = @transform_3, window_bounds = array<i64: 1, 4, 4, 128>}]} {
    %c0 = arith.constant 0 : index
    %c0_0 = arith.constant 0 : index
    %c0_1 = arith.constant 0 : index
    %c0_2 = arith.constant 0 : index
    %0 = vector.load %arg1[%c0, %c0_0, %c0_1, %c0_2] : memref<1x4x4x128xf32, #tpu.memory_space<vmem>>, vector<1x4x4x128xf32>
    %c0_3 = arith.constant 0 : index
    %c0_4 = arith.constant 0 : index
    %1 = vector.load %arg2[%c0_3, %c0_4] : memref<1x128xf32, #tpu.memory_space<vmem>>, vector<1x128xf32>
    %2 = vector.shape_cast %1 : vector<1x128xf32> to vector<1x1x1x128xf32>
    %3 = vector.broadcast %2 : vector<1x1x1x128xf32> to vector<1x4x4x128xf32>
    %4 = arith.mulf %0, %3 : vector<1x4x4x128xf32>
    %c0_5 = arith.constant 0 : index
    %c0_6 = arith.constant 0 : index
    %5 = vector.load %arg3[%c0_5, %c0_6] : memref<1x128xf32, #tpu.memory_space<vmem>>, vector<1x128xf32>
    %6 = vector.shape_cast %5 : vector<1x128xf32> to vector<1x1x1x128xf32>
    %7 = vector.broadcast %6 : vector<1x1x1x128xf32> to vector<1x4x4x128xf32>
    %8 = arith.addf %4, %7 : vector<1x4x4x128xf32>
    %cst = arith.constant 0.000000e+00 : f32
    %9 = vector.broadcast %cst : f32 to vector<1x4x4x128xf32>
    %10 = arith.maximumf %8, %9 : vector<1x4x4x128xf32>
    %c0_7 = arith.constant 0 : index
    %c0_8 = arith.constant 0 : index
    %c0_9 = arith.constant 0 : index
    %c0_10 = arith.constant 0 : index
    %11 = vector.load %arg4[%c0_7, %c0_8, %c0_9, %c0_10] : memref<1x4x4x128xf32, #tpu.memory_space<vmem>>, vector<1x4x4x128xf32>
    tpu.vector_store %arg4[%c0_7, %c0_8, %c0_9, %c0_10], %10 {strides = array<i32>} : memref<1x4x4x128xf32, #tpu.memory_space<vmem>>, vector<1x4x4x128xf32>,
    return
  }
  func.func @transform_0(%arg0: i32) -> (i32, i32, i32, i32) {
    %c0_i32 = arith.constant 0 : i32
    %c0_i32_0 = arith.constant 0 : i32
    %c0_i32_1 = arith.constant 0 : i32
    %c0_i32_2 = arith.constant 0 : i32
    return %arg0, %c0_i32, %c0_i32_0, %c0_i32_1 : i32, i32, i32, i32
  }
  func.func @transform_1(%arg0: i32) -> (i32, i32) {
    %c0_i32 = arith.constant 0 : i32
    %c0_i32_0 = arith.constant 0 : i32
    %c0_i32_1 = arith.constant 0 : i32
    return %c0_i32, %c0_i32_0 : i32, i32
  }
  func.func @transform_2(%arg0: i32) -> (i32, i32) {
    %c0_i32 = arith.constant 0 : i32
    %c0_i32_0 = arith.constant 0 : i32
    %c0_i32_1 = arith.constant 0 : i32
    return %c0_i32, %c0_i32_0 : i32, i32
  }
  func.func @transform_3(%arg0: i32) -> (i32, i32, i32, i32) {
    %c0_i32 = arith.constant 0 : i32
    %c0_i32_0 = arith.constant 0 : i32
    %c0_i32_1 = arith.constant 0 : i32
    %c0_i32_2 = arith.constant 0 : i32
    return %arg0, %c0_i32, %c0_i32_0, %c0_i32_1 : i32, i32, i32, i32
  }
}

</mosaic_0001>

<llo_original>
// kernel: down_forward.4
$region0: #{down_forward.4}
  #allocation0 [shape = 'u32[]', space=smem, size = 0x4, offset = 0x4, fixed_abs, tag = 'smem constant byte address 0x4 - core index']
  #allocation1 [shape = 'u32[144,128]{1,0:T(1,128)}', space=vmem, size = 0x12000, scoped, tag = 'internal scratch']
  %s0 = inlined_call_operand.vmem [shape: f32[16,2,8,2,128], index: 0, kind: input, shape index: {}]
  %s1 = inlined_call_operand.vmem [shape: f32[16,8,128], index: 1, kind: output, shape index: {}]
  %s2 = sld [smem:[#allocation0]]
  $region37: #{down_forward.4} parent=0
    _
  %s4 = ssub.s32 1, %s2
  %s5 = scalar_select 0, %s4, %s2
  loop: start=0, step=1, limit=4
  $region2: #{down_forward.4} parent=0 // loop_pre_header
    _
  $region3: #{down_forward.4} parent=0 // loop_header
    %s7 = sphi 0, %s11
    %p8 = scmp.ge.s32.totalorder %s7, 4
    %s17 = sphi 0, %s19
    %s20 = sphi 0, %s17
    %s21 = sphi 0, %s20
    %s37 = sphi 0, %s21
    %s43 = sphi 0, %s45
    %s46 = sphi 0, %s43
    %s47 = sphi 0, %s46
    %s63 = sphi 0, %s47
  $region4: #{down_forward.4} parent=0 // loop_header_branch
    %10 = sbr.rel (%p8) target = $region8
  $region5: #{down_forward.4} parent=0 // loop_body
    %s12 = ssub.s32 %s7, 1
    %s13 = ssub.s32 %s7, 2
    %s14 = sadd.s32 %s7, 1
    %s15 = ssub.s32 %s7, %s14
    %p16 = scmp.eq.s32.totalorder %s15, 0
    %s18 = sadd.s32 %s17, 1
    %s19 = scalar_select %p16, %s17, %s18
    %p22 = pneg %p16
    %p23 = scmp.eq.s32.totalorder %s7, 1
    %p24 = por %p22, %p23
    %p25 = scmp.ne.s32.totalorder %s17, %s20
    %p26 = scmp.eq.s32.totalorder %s7, 0
    %p27 = por %p25, %p26
    %p28 = scmp.ne.s32.totalorder %s17, %s20
    %p29 = scmp.eq.s32.totalorder %s12, 1
    %p30 = por %p28, %p29
    %p31 = scmp.ne.s32.totalorder %s20, %s21
    %p32 = scmp.eq.s32.totalorder %s12, 0
    %p33 = por %p31, %p32
    %p34 = scmp.ne.s32.totalorder %s20, %s21
    %p35 = scmp.eq.s32.totalorder %s13, 1
    %p36 = por %p34, %p35
    %p38 = scmp.ne.s32.totalorder %s21, %s37
    %p39 = scmp.eq.s32.totalorder %s13, 0
    %p40 = por %p38, %p39
    %s41 = ssub.s32 %s7, %s14
    %p42 = scmp.eq.s32.totalorder %s41, 0
    %s44 = sadd.s32 %s43, 1
    %s45 = scalar_select %p42, %s43, %s44
    %p48 = pneg %p42
    %p49 = scmp.eq.s32.totalorder %s7, 1
    %p50 = por %p48, %p49
    %p51 = scmp.ne.s32.totalorder %s43, %s46
    %p52 = scmp.eq.s32.totalorder %s7, 0
    %p53 = por %p51, %p52
    %p54 = scmp.ne.s32.totalorder %s43, %s46
    %p55 = scmp.eq.s32.totalorder %s12, 1
    %p56 = por %p54, %p55
    %p57 = scmp.ne.s32.totalorder %s46, %s47
    %p58 = scmp.eq.s32.totalorder %s12, 0
    %p59 = por %p57, %p58
    %p60 = scmp.ne.s32.totalorder %s46, %s47
    %p61 = scmp.eq.s32.totalorder %s13, 1
    %p62 = por %p60, %p61
    %p64 = scmp.ne.s32.totalorder %s47, %s63
    %p65 = scmp.eq.s32.totalorder %s13, 0
    %p66 = por %p64, %p65
    %p67 = scmp.le.s32.totalorder 1, %s7
    %p68 = scmp.lt.s32.totalorder %s7, 3
    %p69 = pnand %p67, %p68
    %p70 = pneg %p69
    // Predicated region
    $region9: #{down_forward.4} parent=5 // pred_check
      _
    $region10: #{down_forward.4} parent=5 // pred_check_branch
      %72 = sbr.rel (%p69) target = $region12
    $region11: #{down_forward.4} parent=5 // pred_region
      %s73 = ssub.s32 %s7, 1
    $region12: #{down_forward.4} parent=5 // pred_fallthru
      _
    %p74 = scmp.lt.s32.totalorder %s7, 2
    // Predicated region
    $region13: #{down_forward.4} parent=5 // pred_check
      %p75 = pneg %p74
    $region14: #{down_forward.4} parent=5 // pred_check_branch
      %77 = sbr.rel (%p75) target = $region16
    $region15: #{down_forward.4} parent=5 // pred_region
      // Predicated region
      $region17: #{down_forward.4} parent=15 // pred_check
        %p78 = pneg %p27
      $region18: #{down_forward.4} parent=15 // pred_check_branch
        %80 = sbr.rel (%p78) target = $region20
      $region19: #{down_forward.4} parent=15 // pred_region
        %s81 = smul.u32 8, %s7
        %p82 = scmp.lt.s32.totalorder %s81, 15
        %s83 = scalar_select %p82, %s81, 15
        %s84 = smul.addr %s83, 16
        %s85 = smul.addr %s84, 2
        %s86 = scalar_lea.vmem %s0, %s85
        %s87 = smul.u32 8, %s7
      $region20: #{down_forward.4} parent=15 // pred_fallthru
        _
    $region16: #{down_forward.4} parent=5 // pred_fallthru
      _
    %p88 = scmp.le.s32.totalorder 1, %s7
    %p89 = scmp.lt.s32.totalorder %s7, 3
    %p90 = pnand %p88, %p89
    %p91 = pneg %p90
    // Predicated region
    $region21: #{down_forward.4} parent=5 // pred_check
      _
    $region22: #{down_forward.4} parent=5 // pred_check_branch
      %93 = sbr.rel (%p90) target = $region24
    $region23: #{down_forward.4} parent=5 // pred_region
      %s94 = ssub.s32 %s7, 1
      %s95 = smul.u32 8, %s12
      %p96 = scmp.lt.s32.totalorder %s95, 15
      %s97 = scalar_select %p96, %s95, 15
      %s98 = smul.addr %s97, 16
      %s99 = smul.addr %s98, 2
      %s100 = scalar_lea.vmem %s0, %s99
      %p101 = pneg %p33
      %p102 = pneg %p30
      %p103 = pneg %p59
      %p104 = pneg %p56
      %s105 = smul.u32 8, %s12
      %p106 = scmp.lt.s32.totalorder %s105, 15
      %s107 = scalar_select %p106, %s105, 15
      %s108 = smul.addr %s107, 8
      %s109 = scalar_lea.vmem %s1, %s108
      %s110 = smul.u32 8, %s12
      %p111 = scmp.lt.s32.totalorder %s110, 15
      %s112 = scalar_select %p111, %s110, 15
      %s113 = smul.addr %s112, 16
      %s114 = smul.addr %s113, 2
      %s115 = scalar_lea.vmem %s0, %s114
      %s116 = smul.u32 8, %s12
      %s117 = smul.u32 8, %s12
      %p118 = scmp.lt.s32.totalorder %s117, 15
      %s119 = scalar_select %p118, %s117, 15
      %s120 = smul.addr %s119, 8
      %s121 = scalar_lea.vmem %s1, %s120
      %s122 = smul.u32 8, %s12
      %v123 = vld [vmem:[%s115] sm:$0x3]
      %v124 = vld [vmem:[%s115 + $0x2] sm:$0x3]
      %v125 = vld [vmem:[%s115 + $0x4] sm:$0x3]
      %v126 = vld [vmem:[%s115 + $0x6] sm:$0x3]
      %v127 = vld [vmem:[%s115 + $0x8] sm:$0x3]
      %v128 = vld [vmem:[%s115 + $0xa] sm:$0x3]
      %v129 = vld [vmem:[%s115 + $0xc] sm:$0x3]
      %v130 = vld [vmem:[%s115 + $0xe] sm:$0x3]
      %v131 = vld [vmem:[%s115 + $0x10] sm:$0x3]
      %v132 = vld [vmem:[%s115 + $0x12] sm:$0x3]
      %v133 = vld [vmem:[%s115 + $0x14] sm:$0x3]
      %v134 = vld [vmem:[%s115 + $0x16] sm:$0x3]
      %v135 = vld [vmem:[%s115 + $0x18] sm:$0x3]
      %v136 = vld [vmem:[%s115 + $0x1a] sm:$0x3]
      %v137 = vld [vmem:[%s115 + $0x1c] sm:$0x3]
      %v138 = vld [vmem:[%s115 + $0x1e] sm:$0x3]
      %v139 = vld [vmem:[%s115 + $0x20] sm:$0x3]
      %v140 = vld [vmem:[%s115 + $0x22] sm:$0x3]
      %v141 = vld [vmem:[%s115 + $0x24] sm:$0x3]
      %v142 = vld [vmem:[%s115 + $0x26] sm:$0x3]
      %v143 = vld [vmem:[%s115 + $0x28] sm:$0x3]
      %v144 = vld [vmem:[%s115 + $0x2a] sm:$0x3]
      %v145 = vld [vmem:[%s115 + $0x2c] sm:$0x3]
      %v146 = vld [vmem:[%s115 + $0x2e] sm:$0x3]
      %v147 = vld [vmem:[%s115 + $0x30] sm:$0x3]
      %v148 = vld [vmem:[%s115 + $0x32] sm:$0x3]
      %v149 = vld [vmem:[%s115 + $0x34] sm:$0x3]
      %v150 = vld [vmem:[%s115 + $0x36] sm:$0x3]
      %v151 = vld [vmem:[%s115 + $0x38] sm:$0x3]
      %v152 = vld [vmem:[%s115 + $0x3a] sm:$0x3]
      %v153 = vld [vmem:[%s115 + $0x3c] sm:$0x3]
      %v154 = vld [vmem:[%s115 + $0x3e] sm:$0x3]
      %v155 = vld [vmem:[%s115 + $0x40] sm:$0x3]
      %v156 = vld [vmem:[%s115 + $0x42] sm:$0x3]
      %v157 = vld [vmem:[%s115 + $0x44] sm:$0x3]
      %v158 = vld [vmem:[%s115 + $0x46] sm:$0x3]
      %v159 = vld [vmem:[%s115 + $0x48] sm:$0x3]
      %v160 = vld [vmem:[%s115 + $0x4a] sm:$0x3]
      %v161 = vld [vmem:[%s115 + $0x4c] sm:$0x3]
      %v162 = vld [vmem:[%s115 + $0x4e] sm:$0x3]
      %v163 = vld [vmem:[%s115 + $0x50] sm:$0x3]
      %v164 = vld [vmem:[%s115 + $0x52] sm:$0x3]
      %v165 = vld [vmem:[%s115 + $0x54] sm:$0x3]
      %v166 = vld [vmem:[%s115 + $0x56] sm:$0x3]
      %v167 = vld [vmem:[%s115 + $0x58] sm:$0x3]
      %v168 = vld [vmem:[%s115 + $0x5a] sm:$0x3]
      %v169 = vld [vmem:[%s115 + $0x5c] sm:$0x3]
      %v170 = vld [vmem:[%s115 + $0x5e] sm:$0x3]
      %v171 = vld [vmem:[%s115 + $0x60] sm:$0x3]
      %v172 = vld [vmem:[%s115 + $0x62] sm:$0x3]
      %v173 = vld [vmem:[%s115 + $0x64] sm:$0x3]
      %v174 = vld [vmem:[%s115 + $0x66] sm:$0x3]
      %v175 = vld [vmem:[%s115 + $0x68] sm:$0x3]
      %v176 = vld [vmem:[%s115 + $0x6a] sm:$0x3]
      %v177 = vld [vmem:[%s115 + $0x6c] sm:$0x3]
      %v178 = vld [vmem:[%s115 + $0x6e] sm:$0x3]
      %v179 = vld [vmem:[%s115 + $0x70] sm:$0x3]
      %v180 = vld [vmem:[%s115 + $0x72] sm:$0x3]
      %v181 = vld [vmem:[%s115 + $0x74] sm:$0x3]
      %v182 = vld [vmem:[%s115 + $0x76] sm:$0x3]
      %v183 = vld [vmem:[%s115 + $0x78] sm:$0x3]
      %v184 = vld [vmem:[%s115 + $0x7a] sm:$0x3]
      %v185 = vld [vmem:[%s115 + $0x7c] sm:$0x3]
      %v186 = vld [vmem:[%s115 + $0x7e] sm:$0x3]
      %v187 = vld [vmem:[%s115 + $0x80] sm:$0x3]
      %v188 = vld [vmem:[%s115 + $0x82] sm:$0x3]
      %v189 = vld [vmem:[%s115 + $0x84] sm:$0x3]
      %v190 = vld [vmem:[%s115 + $0x86] sm:$0x3]
      %v191 = vld [vmem:[%s115 + $0x88] sm:$0x3]
      %v192 = vld [vmem:[%s115 + $0x8a] sm:$0x3]
      %v193 = vld [vmem:[%s115 + $0x8c] sm:$0x3]
      %v194 = vld [vmem:[%s115 + $0x8e] sm:$0x3]
      %v195 = vld [vmem:[%s115 + $0x90] sm:$0x3]
      %v196 = vld [vmem:[%s115 + $0x92] sm:$0x3]
      %v197 = vld [vmem:[%s115 + $0x94] sm:$0x3]
      %v198 = vld [vmem:[%s115 + $0x96] sm:$0x3]
      %v199 = vld [vmem:[%s115 + $0x98] sm:$0x3]
      %v200 = vld [vmem:[%s115 + $0x9a] sm:$0x3]
      %v201 = vld [vmem:[%s115 + $0x9c] sm:$0x3]
      %v202 = vld [vmem:[%s115 + $0x9e] sm:$0x3]
      %v203 = vld [vmem:[%s115 + $0xa0] sm:$0x3]
      %v204 = vld [vmem:[%s115 + $0xa2] sm:$0x3]
      %v205 = vld [vmem:[%s115 + $0xa4] sm:$0x3]
      %v206 = vld [vmem:[%s115 + $0xa6] sm:$0x3]
      %v207 = vld [vmem:[%s115 + $0xa8] sm:$0x3]
      %v208 = vld [vmem:[%s115 + $0xaa] sm:$0x3]
      %v209 = vld [vmem:[%s115 + $0xac] sm:$0x3]
      %v210 = vld [vmem:[%s115 + $0xae] sm:$0x3]
      %v211 = vld [vmem:[%s115 + $0xb0] sm:$0x3]
      %v212 = vld [vmem:[%s115 + $0xb2] sm:$0x3]
      %v213 = vld [vmem:[%s115 + $0xb4] sm:$0x3]
      %v214 = vld [vmem:[%s115 + $0xb6] sm:$0x3]
      %v215 = vld [vmem:[%s115 + $0xb8] sm:$0x3]
      %v216 = vld [vmem:[%s115 + $0xba] sm:$0x3]
      %v217 = vld [vmem:[%s115 + $0xbc] sm:$0x3]
      %v218 = vld [vmem:[%s115 + $0xbe] sm:$0x3]
      %v219 = vld [vmem:[%s115 + $0xc0] sm:$0x3]
      %v220 = vld [vmem:[%s115 + $0xc2] sm:$0x3]
      %v221 = vld [vmem:[%s115 + $0xc4] sm:$0x3]
      %v222 = vld [vmem:[%s115 + $0xc6] sm:$0x3]
      %v223 = vld [vmem:[%s115 + $0xc8] sm:$0x3]
      %v224 = vld [vmem:[%s115 + $0xca] sm:$0x3]
      %v225 = vld [vmem:[%s115 + $0xcc] sm:$0x3]
      %v226 = vld [vmem:[%s115 + $0xce] sm:$0x3]
      %v227 = vld [vmem:[%s115 + $0xd0] sm:$0x3]
      %v228 = vld [vmem:[%s115 + $0xd2] sm:$0x3]
      %v229 = vld [vmem:[%s115 + $0xd4] sm:$0x3]
      %v230 = vld [vmem:[%s115 + $0xd6] sm:$0x3]
      %v231 = vld [vmem:[%s115 + $0xd8] sm:$0x3]
      %v232 = vld [vmem:[%s115 + $0xda] sm:$0x3]
      %v233 = vld [vmem:[%s115 + $0xdc] sm:$0x3]
      %v234 = vld [vmem:[%s115 + $0xde] sm:$0x3]
      %v235 = vld [vmem:[%s115 + $0xe0] sm:$0x3]
      %v236 = vld [vmem:[%s115 + $0xe2] sm:$0x3]
      %v237 = vld [vmem:[%s115 + $0xe4] sm:$0x3]
      %v238 = vld [vmem:[%s115 + $0xe6] sm:$0x3]
      %v239 = vld [vmem:[%s115 + $0xe8] sm:$0x3]
      %v240 = vld [vmem:[%s115 + $0xea] sm:$0x3]
      %v241 = vld [vmem:[%s115 + $0xec] sm:$0x3]
      %v242 = vld [vmem:[%s115 + $0xee] sm:$0x3]
      %v243 = vld [vmem:[%s115 + $0xf0] sm:$0x3]
      %v244 = vld [vmem:[%s115 + $0xf2] sm:$0x3]
      %v245 = vld [vmem:[%s115 + $0xf4] sm:$0x3]
      %v246 = vld [vmem:[%s115 + $0xf6] sm:$0x3]
      %v247 = vld [vmem:[%s115 + $0xf8] sm:$0x3]
      %v248 = vld [vmem:[%s115 + $0xfa] sm:$0x3]
      %v249 = vld [vmem:[%s115 + $0xfc] sm:$0x3]
      %v250 = vld [vmem:[%s115 + $0xfe] sm:$0x3]
      %vm251 = vcmask 1041408
      %v252 = vsel %vm251, %v123, -inf
      %v253 = vrot.slane %v252, 4
      %v254 = vmax.f32 %v252, %v253
      %v255 = vrot.slane %v254, 2
      %v256 = vmax.f32 %v254, %v255
      %v257 = vrot.slane %v256, 1
      %v258 = vmax.f32 %v256, %v257
      %v259 = vsel %vm251, %v124, -inf
      %v260 = vrot.slane %v259, 4
      %v261 = vmax.f32 %v259, %v260
      %v262 = vrot.slane %v261, 2
      %v263 = vmax.f32 %v261, %v262
      %v264 = vrot.slane %v263, 1
      %v265 = vmax.f32 %v263, %v264
      %v266 = vsel %vm251, %v125, -inf
      %v267 = vrot.slane %v266, 4
      %v268 = vmax.f32 %v266, %v267
      %v269 = vrot.slane %v268, 2
      %v270 = vmax.f32 %v268, %v269
      %v271 = vrot.slane %v270, 1
      %v272 = vmax.f32 %v270, %v271
      %v273 = vsel %vm251, %v126, -inf
      %v274 = vrot.slane %v273, 4
      %v275 = vmax.f32 %v273, %v274
      %v276 = vrot.slane %v275, 2
      %v277 = vmax.f32 %v275, %v276
      %v278 = vrot.slane %v277, 1
      %v279 = vmax.f32 %v277, %v278
      %v280 = vsel %vm251, %v127, -inf
      %v281 = vrot.slane %v280, 4
      %v282 = vmax.f32 %v280, %v281
      %v283 = vrot.slane %v282, 2
      %v284 = vmax.f32 %v282, %v283
      %v285 = vrot.slane %v284, 1
      %v286 = vmax.f32 %v284, %v285
      %v287 = vsel %vm251, %v128, -inf
      %v288 = vrot.slane %v287, 4
      %v289 = vmax.f32 %v287, %v288
      %v290 = vrot.slane %v289, 2
      %v291 = vmax.f32 %v289, %v290
      %v292 = vrot.slane %v291, 1
      %v293 = vmax.f32 %v291, %v292
      %v294 = vsel %vm251, %v129, -inf
      %v295 = vrot.slane %v294, 4
      %v296 = vmax.f32 %v294, %v295
      %v297 = vrot.slane %v296, 2
      %v298 = vmax.f32 %v296, %v297
      %v299 = vrot.slane %v298, 1
      %v300 = vmax.f32 %v298, %v299
      %v301 = vsel %vm251, %v130, -inf
      %v302 = vrot.slane %v301, 4
      %v303 = vmax.f32 %v301, %v302
      %v304 = vrot.slane %v303, 2
      %v305 = vmax.f32 %v303, %v304
      %v306 = vrot.slane %v305, 1
      %v307 = vmax.f32 %v305, %v306
      %v308 = vsel %vm251, %v131, -inf
      %v309 = vrot.slane %v308, 4
      %v310 = vmax.f32 %v308, %v309
      %v311 = vrot.slane %v310, 2
      %v312 = vmax.f32 %v310, %v311
      %v313 = vrot.slane %v312, 1
      %v314 = vmax.f32 %v312, %v313
      %v315 = vsel %vm251, %v132, -inf
      %v316 = vrot.slane %v315, 4
      %v317 = vmax.f32 %v315, %v316
      %v318 = vrot.slane %v317, 2
      %v319 = vmax.f32 %v317, %v318
      %v320 = vrot.slane %v319, 1
      %v321 = vmax.f32 %v319, %v320
      %v322 = vsel %vm251, %v133, -inf
      %v323 = vrot.slane %v322, 4
      %v324 = vmax.f32 %v322, %v323
      %v325 = vrot.slane %v324, 2
      %v326 = vmax.f32 %v324, %v325
      %v327 = vrot.slane %v326, 1
      %v328 = vmax.f32 %v326, %v327
      %v329 = vsel %vm251, %v134, -inf
      %v330 = vrot.slane %v329, 4
      %v331 = vmax.f32 %v329, %v330
      %v332 = vrot.slane %v331, 2
      %v333 = vmax.f32 %v331, %v332
      %v334 = vrot.slane %v333, 1
      %v335 = vmax.f32 %v333, %v334
      %v336 = vsel %vm251, %v135, -inf
      %v337 = vrot.slane %v336, 4
      %v338 = vmax.f32 %v336, %v337
      %v339 = vrot.slane %v338, 2
      %v340 = vmax.f32 %v338, %v339
      %v341 = vrot.slane %v340, 1
      %v342 = vmax.f32 %v340, %v341
      %v343 = vsel %vm251, %v136, -inf
      %v344 = vrot.slane %v343, 4
      %v345 = vmax.f32 %v343, %v344
      %v346 = vrot.slane %v345, 2
      %v347 = vmax.f32 %v345, %v346
      %v348 = vrot.slane %v347, 1
      %v349 = vmax.f32 %v347, %v348
      %v350 = vsel %vm251, %v137, -inf
      %v351 = vrot.slane %v350, 4
      %v352 = vmax.f32 %v350, %v351
      %v353 = vrot.slane %v352, 2
      %v354 = vmax.f32 %v352, %v353
      %v355 = vrot.slane %v354, 1
      %v356 = vmax.f32 %v354, %v355
      %v357 = vsel %vm251, %v138, -inf
      %v358 = vrot.slane %v357, 4
      %v359 = vmax.f32 %v357, %v358
      %v360 = vrot.slane %v359, 2
      %v361 = vmax.f32 %v359, %v360
      %v362 = vrot.slane %v361, 1
      %v363 = vmax.f32 %v361, %v362
      %v364 = vsel %vm251, %v139, -inf
      %v365 = vrot.slane %v364, 4
      %v366 = vmax.f32 %v364, %v365
      %v367 = vrot.slane %v366, 2
      %v368 = vmax.f32 %v366, %v367
      %v369 = vrot.slane %v368, 1
      %v370 = vmax.f32 %v368, %v369
      %v371 = vsel %vm251, %v140, -inf
      %v372 = vrot.slane %v371, 4
      %v373 = vmax.f32 %v371, %v372
      %v374 = vrot.slane %v373, 2
      %v375 = vmax.f32 %v373, %v374
      %v376 = vrot.slane %v375, 1
      %v377 = vmax.f32 %v375, %v376
      %v378 = vsel %vm251, %v141, -inf
      %v379 = vrot.slane %v378, 4
      %v380 = vmax.f32 %v378, %v379
      %v381 = vrot.slane %v380, 2
      %v382 = vmax.f32 %v380, %v381
      %v383 = vrot.slane %v382, 1
      %v384 = vmax.f32 %v382, %v383
      %v385 = vsel %vm251, %v142, -inf
      %v386 = vrot.slane %v385, 4
      %v387 = vmax.f32 %v385, %v386
      %v388 = vrot.slane %v387, 2
      %v389 = vmax.f32 %v387, %v388
      %v390 = vrot.slane %v389, 1
      %v391 = vmax.f32 %v389, %v390
      %v392 = vsel %vm251, %v143, -inf
      %v393 = vrot.slane %v392, 4
      %v394 = vmax.f32 %v392, %v393
      %v395 = vrot.slane %v394, 2
      %v396 = vmax.f32 %v394, %v395
      %v397 = vrot.slane %v396, 1
      %v398 = vmax.f32 %v396, %v397
      %v399 = vsel %vm251, %v144, -inf
      %v400 = vrot.slane %v399, 4
      %v401 = vmax.f32 %v399, %v400
      %v402 = vrot.slane %v401, 2
      %v403 = vmax.f32 %v401, %v402
      %v404 = vrot.slane %v403, 1
      %v405 = vmax.f32 %v403, %v404
      %v406 = vsel %vm251, %v145, -inf
      %v407 = vrot.slane %v406, 4
      %v408 = vmax.f32 %v406, %v407
      %v409 = vrot.slane %v408, 2
      %v410 = vmax.f32 %v408, %v409
      %v411 = vrot.slane %v410, 1
      %v412 = vmax.f32 %v410, %v411
      %v413 = vsel %vm251, %v146, -inf
      %v414 = vrot.slane %v413, 4
      %v415 = vmax.f32 %v413, %v414
      %v416 = vrot.slane %v415, 2
      %v417 = vmax.f32 %v415, %v416
      %v418 = vrot.slane %v417, 1
      %v419 = vmax.f32 %v417, %v418
      %v420 = vsel %vm251, %v147, -inf
      %v421 = vrot.slane %v420, 4
      %v422 = vmax.f32 %v420, %v421
      %v423 = vrot.slane %v422, 2
      %v424 = vmax.f32 %v422, %v423
      %v425 = vrot.slane %v424, 1
      %v426 = vmax.f32 %v424, %v425
      %v427 = vsel %vm251, %v148, -inf
      %v428 = vrot.slane %v427, 4
      %v429 = vmax.f32 %v427, %v428
      %v430 = vrot.slane %v429, 2
      %v431 = vmax.f32 %v429, %v430
      %v432 = vrot.slane %v431, 1
      %v433 = vmax.f32 %v431, %v432
      %v434 = vsel %vm251, %v149, -inf
      %v435 = vrot.slane %v434, 4
      %v436 = vmax.f32 %v434, %v435
      %v437 = vrot.slane %v436, 2
      %v438 = vmax.f32 %v436, %v437
      %v439 = vrot.slane %v438, 1
      %v440 = vmax.f32 %v438, %v439
      %v441 = vsel %vm251, %v150, -inf
      %v442 = vrot.slane %v441, 4
      %v443 = vmax.f32 %v441, %v442
      %v444 = vrot.slane %v443, 2
      %v445 = vmax.f32 %v443, %v444
      %v446 = vrot.slane %v445, 1
      %v447 = vmax.f32 %v445, %v446
      %v448 = vsel %vm251, %v151, -inf
      %v449 = vrot.slane %v448, 4
      %v450 = vmax.f32 %v448, %v449
      %v451 = vrot.slane %v450, 2
      %v452 = vmax.f32 %v450, %v451
      %v453 = vrot.slane %v452, 1
      %v454 = vmax.f32 %v452, %v453
      %v455 = vsel %vm251, %v152, -inf
      %v456 = vrot.slane %v455, 4
      %v457 = vmax.f32 %v455, %v456
      %v458 = vrot.slane %v457, 2
      %v459 = vmax.f32 %v457, %v458
      %v460 = vrot.slane %v459, 1
      %v461 = vmax.f32 %v459, %v460
      %v462 = vsel %vm251, %v153, -inf
      %v463 = vrot.slane %v462, 4
      %v464 = vmax.f32 %v462, %v463
      %v465 = vrot.slane %v464, 2
      %v466 = vmax.f32 %v464, %v465
      %v467 = vrot.slane %v466, 1
      %v468 = vmax.f32 %v466, %v467
      %v469 = vsel %vm251, %v154, -inf
      %v470 = vrot.slane %v469, 4
      %v471 = vmax.f32 %v469, %v470
      %v472 = vrot.slane %v471, 2
      %v473 = vmax.f32 %v471, %v472
      %v474 = vrot.slane %v473, 1
      %v475 = vmax.f32 %v473, %v474
      %v476 = vsel %vm251, %v155, -inf
      %v477 = vrot.slane %v476, 4
      %v478 = vmax.f32 %v476, %v477
      %v479 = vrot.slane %v478, 2
      %v480 = vmax.f32 %v478, %v479
      %v481 = vrot.slane %v480, 1
      %v482 = vmax.f32 %v480, %v481
      %v483 = vsel %vm251, %v156, -inf
      %v484 = vrot.slane %v483, 4
      %v485 = vmax.f32 %v483, %v484
      %v486 = vrot.slane %v485, 2
      %v487 = vmax.f32 %v485, %v486
      %v488 = vrot.slane %v487, 1
      %v489 = vmax.f32 %v487, %v488
      %v490 = vsel %vm251, %v157, -inf
      %v491 = vrot.slane %v490, 4
      %v492 = vmax.f32 %v490, %v491
      %v493 = vrot.slane %v492, 2
      %v494 = vmax.f32 %v492, %v493
      %v495 = vrot.slane %v494, 1
      %v496 = vmax.f32 %v494, %v495
      %v497 = vsel %vm251, %v158, -inf
      %v498 = vrot.slane %v497, 4
      %v499 = vmax.f32 %v497, %v498
      %v500 = vrot.slane %v499, 2
      %v501 = vmax.f32 %v499, %v500
      %v502 = vrot.slane %v501, 1
      %v503 = vmax.f32 %v501, %v502
      %v504 = vsel %vm251, %v159, -inf
      %v505 = vrot.slane %v504, 4
      %v506 = vmax.f32 %v504, %v505
      %v507 = vrot.slane %v506, 2
      %v508 = vmax.f32 %v506, %v507
      %v509 = vrot.slane %v508, 1
      %v510 = vmax.f32 %v508, %v509
      %v511 = vsel %vm251, %v160, -inf
      %v512 = vrot.slane %v511, 4
      %v513 = vmax.f32 %v511, %v512
      %v514 = vrot.slane %v513, 2
      %v515 = vmax.f32 %v513, %v514
      %v516 = vrot.slane %v515, 1
      %v517 = vmax.f32 %v515, %v516
      %v518 = vsel %vm251, %v161, -inf
      %v519 = vrot.slane %v518, 4
      %v520 = vmax.f32 %v518, %v519
      %v521 = vrot.slane %v520, 2
      %v522 = vmax.f32 %v520, %v521
      %v523 = vrot.slane %v522, 1
      %v524 = vmax.f32 %v522, %v523
      %v525 = vsel %vm251, %v162, -inf
      %v526 = vrot.slane %v525, 4
      %v527 = vmax.f32 %v525, %v526
      %v528 = vrot.slane %v527, 2
      %v529 = vmax.f32 %v527, %v528
      %v530 = vrot.slane %v529, 1
      %v531 = vmax.f32 %v529, %v530
      %v532 = vsel %vm251, %v163, -inf
      %v533 = vrot.slane %v532, 4
      %v534 = vmax.f32 %v532, %v533
      %v535 = vrot.slane %v534, 2
      %v536 = vmax.f32 %v534, %v535
      %v537 = vrot.slane %v536, 1
      %v538 = vmax.f32 %v536, %v537
      %v539 = vsel %vm251, %v164, -inf
      %v540 = vrot.slane %v539, 4
      %v541 = vmax.f32 %v539, %v540
      %v542 = vrot.slane %v541, 2
      %v543 = vmax.f32 %v541, %v542
      %v544 = vrot.slane %v543, 1
      %v545 = vmax.f32 %v543, %v544
      %v546 = vsel %vm251, %v165, -inf
      %v547 = vrot.slane %v546, 4
      %v548 = vmax.f32 %v546, %v547
      %v549 = vrot.slane %v548, 2
      %v550 = vmax.f32 %v548, %v549
      %v551 = vrot.slane %v550, 1
      %v552 = vmax.f32 %v550, %v551
      %v553 = vsel %vm251, %v166, -inf
      %v554 = vrot.slane %v553, 4
      %v555 = vmax.f32 %v553, %v554
      %v556 = vrot.slane %v555, 2
      %v557 = vmax.f32 %v555, %v556
      %v558 = vrot.slane %v557, 1
      %v559 = vmax.f32 %v557, %v558
      %v560 = vsel %vm251, %v167, -inf
      %v561 = vrot.slane %v560, 4
      %v562 = vmax.f32 %v560, %v561
      %v563 = vrot.slane %v562, 2
      %v564 = vmax.f32 %v562, %v563
      %v565 = vrot.slane %v564, 1
      %v566 = vmax.f32 %v564, %v565
      %v567 = vsel %vm251, %v168, -inf
      %v568 = vrot.slane %v567, 4
      %v569 = vmax.f32 %v567, %v568
      %v570 = vrot.slane %v569, 2
      %v571 = vmax.f32 %v569, %v570
      %v572 = vrot.slane %v571, 1
      %v573 = vmax.f32 %v571, %v572
      %v574 = vsel %vm251, %v169, -inf
      %v575 = vrot.slane %v574, 4
      %v576 = vmax.f32 %v574, %v575
      %v577 = vrot.slane %v576, 2
      %v578 = vmax.f32 %v576, %v577
      %v579 = vrot.slane %v578, 1
      %v580 = vmax.f32 %v578, %v579
      %v581 = vsel %vm251, %v170, -inf
      %v582 = vrot.slane %v581, 4
      %v583 = vmax.f32 %v581, %v582
      %v584 = vrot.slane %v583, 2
      %v585 = vmax.f32 %v583, %v584
      %v586 = vrot.slane %v585, 1
      %v587 = vmax.f32 %v585, %v586
      %v588 = vsel %vm251, %v171, -inf
      %v589 = vrot.slane %v588, 4
      %v590 = vmax.f32 %v588, %v589
      %v591 = vrot.slane %v590, 2
      %v592 = vmax.f32 %v590, %v591
      %v593 = vrot.slane %v592, 1
      %v594 = vmax.f32 %v592, %v593
      %v595 = vsel %vm251, %v172, -inf
      %v596 = vrot.slane %v595, 4
      %v597 = vmax.f32 %v595, %v596
      %v598 = vrot.slane %v597, 2
      %v599 = vmax.f32 %v597, %v598
      %v600 = vrot.slane %v599, 1
      %v601 = vmax.f32 %v599, %v600
      %v602 = vsel %vm251, %v173, -inf
      %v603 = vrot.slane %v602, 4
      %v604 = vmax.f32 %v602, %v603
      %v605 = vrot.slane %v604, 2
      %v606 = vmax.f32 %v604, %v605
      %v607 = vrot.slane %v606, 1
      %v608 = vmax.f32 %v606, %v607
      %v609 = vsel %vm251, %v174, -inf
      %v610 = vrot.slane %v609, 4
      %v611 = vmax.f32 %v609, %v610
      %v612 = vrot.slane %v611, 2
      %v613 = vmax.f32 %v611, %v612
      %v614 = vrot.slane %v613, 1
      %v615 = vmax.f32 %v613, %v614
      %v616 = vsel %vm251, %v175, -inf
      %v617 = vrot.slane %v616, 4
      %v618 = vmax.f32 %v616, %v617
      %v619 = vrot.slane %v618, 2
      %v620 = vmax.f32 %v618, %v619
      %v621 = vrot.slane %v620, 1
      %v622 = vmax.f32 %v620, %v621
      %v623 = vsel %vm251, %v176, -inf
      %v624 = vrot.slane %v623, 4
      %v625 = vmax.f32 %v623, %v624
      %v626 = vrot.slane %v625, 2
      %v627 = vmax.f32 %v625, %v626
      %v628 = vrot.slane %v627, 1
      %v629 = vmax.f32 %v627, %v628
      %v630 = vsel %vm251, %v177, -inf
      %v631 = vrot.slane %v630, 4
      %v632 = vmax.f32 %v630, %v631
      %v633 = vrot.slane %v632, 2
      %v634 = vmax.f32 %v632, %v633
      %v635 = vrot.slane %v634, 1
      %v636 = vmax.f32 %v634, %v635
      %v637 = vsel %vm251, %v178, -inf
      %v638 = vrot.slane %v637, 4
      %v639 = vmax.f32 %v637, %v638
      %v640 = vrot.slane %v639, 2
      %v641 = vmax.f32 %v639, %v640
      %v642 = vrot.slane %v641, 1
      %v643 = vmax.f32 %v641, %v642
      %v644 = vsel %vm251, %v179, -inf
      %v645 = vrot.slane %v644, 4
      %v646 = vmax.f32 %v644, %v645
      %v647 = vrot.slane %v646, 2
      %v648 = vmax.f32 %v646, %v647
      %v649 = vrot.slane %v648, 1
      %v650 = vmax.f32 %v648, %v649
      %v651 = vsel %vm251, %v180, -inf
      %v652 = vrot.slane %v651, 4
      %v653 = vmax.f32 %v651, %v652
      %v654 = vrot.slane %v653, 2
      %v655 = vmax.f32 %v653, %v654
      %v656 = vrot.slane %v655, 1
      %v657 = vmax.f32 %v655, %v656
      %v658 = vsel %vm251, %v181, -inf
      %v659 = vrot.slane %v658, 4
      %v660 = vmax.f32 %v658, %v659
      %v661 = vrot.slane %v660, 2
      %v662 = vmax.f32 %v660, %v661
      %v663 = vrot.slane %v662, 1
      %v664 = vmax.f32 %v662, %v663
      %v665 = vsel %vm251, %v182, -inf
      %v666 = vrot.slane %v665, 4
      %v667 = vmax.f32 %v665, %v666
      %v668 = vrot.slane %v667, 2
      %v669 = vmax.f32 %v667, %v668
      %v670 = vrot.slane %v669, 1
      %v671 = vmax.f32 %v669, %v670
      %v672 = vsel %vm251, %v183, -inf
      %v673 = vrot.slane %v672, 4
      %v674 = vmax.f32 %v672, %v673
      %v675 = vrot.slane %v674, 2
      %v676 = vmax.f32 %v674, %v675
      %v677 = vrot.slane %v676, 1
      %v678 = vmax.f32 %v676, %v677
      %v679 = vsel %vm251, %v184, -inf
      %v680 = vrot.slane %v679, 4
      %v681 = vmax.f32 %v679, %v680
      %v682 = vrot.slane %v681, 2
      %v683 = vmax.f32 %v681, %v682
      %v684 = vrot.slane %v683, 1
      %v685 = vmax.f32 %v683, %v684
      %v686 = vsel %vm251, %v185, -inf
      %v687 = vrot.slane %v686, 4
      %v688 = vmax.f32 %v686, %v687
      %v689 = vrot.slane %v688, 2
      %v690 = vmax.f32 %v688, %v689
      %v691 = vrot.slane %v690, 1
      %v692 = vmax.f32 %v690, %v691
      %v693 = vsel %vm251, %v186, -inf
      %v694 = vrot.slane %v693, 4
      %v695 = vmax.f32 %v693, %v694
      %v696 = vrot.slane %v695, 2
      %v697 = vmax.f32 %v695, %v696
      %v698 = vrot.slane %v697, 1
      %v699 = vmax.f32 %v697, %v698
      %v700 = vsel %vm251, %v187, -inf
      %v701 = vrot.slane %v700, 4
      %v702 = vmax.f32 %v700, %v701
      %v703 = vrot.slane %v702, 2
      %v704 = vmax.f32 %v702, %v703
      %v705 = vrot.slane %v704, 1
      %v706 = vmax.f32 %v704, %v705
      %v707 = vsel %vm251, %v188, -inf
      %v708 = vrot.slane %v707, 4
      %v709 = vmax.f32 %v707, %v708
      %v710 = vrot.slane %v709, 2
      %v711 = vmax.f32 %v709, %v710
      %v712 = vrot.slane %v711, 1
      %v713 = vmax.f32 %v711, %v712
      %v714 = vsel %vm251, %v189, -inf
      %v715 = vrot.slane %v714, 4
      %v716 = vmax.f32 %v714, %v715
      %v717 = vrot.slane %v716, 2
      %v718 = vmax.f32 %v716, %v717
      %v719 = vrot.slane %v718, 1
      %v720 = vmax.f32 %v718, %v719
      %v721 = vsel %vm251, %v190, -inf
      %v722 = vrot.slane %v721, 4
      %v723 = vmax.f32 %v721, %v722
      %v724 = vrot.slane %v723, 2
      %v725 = vmax.f32 %v723, %v724
      %v726 = vrot.slane %v725, 1
      %v727 = vmax.f32 %v725, %v726
      %v728 = vsel %vm251, %v191, -inf
      %v729 = vrot.slane %v728, 4
      %v730 = vmax.f32 %v728, %v729
      %v731 = vrot.slane %v730, 2
      %v732 = vmax.f32 %v730, %v731
      %v733 = vrot.slane %v732, 1
      %v734 = vmax.f32 %v732, %v733
      %v735 = vsel %vm251, %v192, -inf
      %v736 = vrot.slane %v735, 4
      %v737 = vmax.f32 %v735, %v736
      %v738 = vrot.slane %v737, 2
      %v739 = vmax.f32 %v737, %v738
      %v740 = vrot.slane %v739, 1
      %v741 = vmax.f32 %v739, %v740
      %v742 = vsel %vm251, %v193, -inf
      %v743 = vrot.slane %v742, 4
      %v744 = vmax.f32 %v742, %v743
      %v745 = vrot.slane %v744, 2
      %v746 = vmax.f32 %v744, %v745
      %v747 = vrot.slane %v746, 1
      %v748 = vmax.f32 %v746, %v747
      %v749 = vsel %vm251, %v194, -inf
      %v750 = vrot.slane %v749, 4
      %v751 = vmax.f32 %v749, %v750
      %v752 = vrot.slane %v751, 2
      %v753 = vmax.f32 %v751, %v752
      %v754 = vrot.slane %v753, 1
      %v755 = vmax.f32 %v753, %v754
      %v756 = vsel %vm251, %v195, -inf
      %v757 = vrot.slane %v756, 4
      %v758 = vmax.f32 %v756, %v757
      %v759 = vrot.slane %v758, 2
      %v760 = vmax.f32 %v758, %v759
      %v761 = vrot.slane %v760, 1
      %v762 = vmax.f32 %v760, %v761
      %v763 = vsel %vm251, %v196, -inf
      %v764 = vrot.slane %v763, 4
      %v765 = vmax.f32 %v763, %v764
      %v766 = vrot.slane %v765, 2
      %v767 = vmax.f32 %v765, %v766
      %v768 = vrot.slane %v767, 1
      %v769 = vmax.f32 %v767, %v768
      %v770 = vsel %vm251, %v197, -inf
      %v771 = vrot.slane %v770, 4
      %v772 = vmax.f32 %v770, %v771
      %v773 = vrot.slane %v772, 2
      %v774 = vmax.f32 %v772, %v773
      %v775 = vrot.slane %v774, 1
      %v776 = vmax.f32 %v774, %v775
      %v777 = vsel %vm251, %v198, -inf
      %v778 = vrot.slane %v777, 4
      %v779 = vmax.f32 %v777, %v778
      %v780 = vrot.slane %v779, 2
      %v781 = vmax.f32 %v779, %v780
      %v782 = vrot.slane %v781, 1
      %v783 = vmax.f32 %v781, %v782
      %v784 = vsel %vm251, %v199, -inf
      %v785 = vrot.slane %v784, 4
      %v786 = vmax.f32 %v784, %v785
      %v787 = vrot.slane %v786, 2
      %v788 = vmax.f32 %v786, %v787
      %v789 = vrot.slane %v788, 1
      %v790 = vmax.f32 %v788, %v789
      %v791 = vsel %vm251, %v200, -inf
      %v792 = vrot.slane %v791, 4
      %v793 = vmax.f32 %v791, %v792
      %v794 = vrot.slane %v793, 2
      %v795 = vmax.f32 %v793, %v794
      %v796 = vrot.slane %v795, 1
      %v797 = vmax.f32 %v795, %v796
      %v798 = vsel %vm251, %v201, -inf
      %v799 = vrot.slane %v798, 4
      %v800 = vmax.f32 %v798, %v799
      %v801 = vrot.slane %v800, 2
      %v802 = vmax.f32 %v800, %v801
      %v803 = vrot.slane %v802, 1
      %v804 = vmax.f32 %v802, %v803
      %v805 = vsel %vm251, %v202, -inf
      %v806 = vrot.slane %v805, 4
      %v807 = vmax.f32 %v805, %v806
      %v808 = vrot.slane %v807, 2
      %v809 = vmax.f32 %v807, %v808
      %v810 = vrot.slane %v809, 1
      %v811 = vmax.f32 %v809, %v810
      %v812 = vsel %vm251, %v203, -inf
      %v813 = vrot.slane %v812, 4
      %v814 = vmax.f32 %v812, %v813
      %v815 = vrot.slane %v814, 2
      %v816 = vmax.f32 %v814, %v815
      %v817 = vrot.slane %v816, 1
      %v818 = vmax.f32 %v816, %v817
      %v819 = vsel %vm251, %v204, -inf
      %v820 = vrot.slane %v819, 4
      %v821 = vmax.f32 %v819, %v820
      %v822 = vrot.slane %v821, 2
      %v823 = vmax.f32 %v821, %v822
      %v824 = vrot.slane %v823, 1
      %v825 = vmax.f32 %v823, %v824
      %v826 = vsel %vm251, %v205, -inf
      %v827 = vrot.slane %v826, 4
      %v828 = vmax.f32 %v826, %v827
      %v829 = vrot.slane %v828, 2
      %v830 = vmax.f32 %v828, %v829
      %v831 = vrot.slane %v830, 1
      %v832 = vmax.f32 %v830, %v831
      %v833 = vsel %vm251, %v206, -inf
      %v834 = vrot.slane %v833, 4
      %v835 = vmax.f32 %v833, %v834
      %v836 = vrot.slane %v835, 2
      %v837 = vmax.f32 %v835, %v836
      %v838 = vrot.slane %v837, 1
      %v839 = vmax.f32 %v837, %v838
      %v840 = vsel %vm251, %v207, -inf
      %v841 = vrot.slane %v840, 4
      %v842 = vmax.f32 %v840, %v841
      %v843 = vrot.slane %v842, 2
      %v844 = vmax.f32 %v842, %v843
      %v845 = vrot.slane %v844, 1
      %v846 = vmax.f32 %v844, %v845
      %v847 = vsel %vm251, %v208, -inf
      %v848 = vrot.slane %v847, 4
      %v849 = vmax.f32 %v847, %v848
      %v850 = vrot.slane %v849, 2
      %v851 = vmax.f32 %v849, %v850
      %v852 = vrot.slane %v851, 1
      %v853 = vmax.f32 %v851, %v852
      %v854 = vsel %vm251, %v209, -inf
      %v855 = vrot.slane %v854, 4
      %v856 = vmax.f32 %v854, %v855
      %v857 = vrot.slane %v856, 2
      %v858 = vmax.f32 %v856, %v857
      %v859 = vrot.slane %v858, 1
      %v860 = vmax.f32 %v858, %v859
      %v861 = vsel %vm251, %v210, -inf
      %v862 = vrot.slane %v861, 4
      %v863 = vmax.f32 %v861, %v862
      %v864 = vrot.slane %v863, 2
      %v865 = vmax.f32 %v863, %v864
      %v866 = vrot.slane %v865, 1
      %v867 = vmax.f32 %v865, %v866
      %v868 = vsel %vm251, %v211, -inf
      %v869 = vrot.slane %v868, 4
      %v870 = vmax.f32 %v868, %v869
      %v871 = vrot.slane %v870, 2
      %v872 = vmax.f32 %v870, %v871
      %v873 = vrot.slane %v872, 1
      %v874 = vmax.f32 %v872, %v873
      %v875 = vsel %vm251, %v212, -inf
      %v876 = vrot.slane %v875, 4
      %v877 = vmax.f32 %v875, %v876
      %v878 = vrot.slane %v877, 2
      %v879 = vmax.f32 %v877, %v878
      %v880 = vrot.slane %v879, 1
      %v881 = vmax.f32 %v879, %v880
      %v882 = vsel %vm251, %v213, -inf
      %v883 = vrot.slane %v882, 4
      %v884 = vmax.f32 %v882, %v883
      %v885 = vrot.slane %v884, 2
      %v886 = vmax.f32 %v884, %v885
      %v887 = vrot.slane %v886, 1
      %v888 = vmax.f32 %v886, %v887
      %v889 = vsel %vm251, %v214, -inf
      %v890 = vrot.slane %v889, 4
      %v891 = vmax.f32 %v889, %v890
      %v892 = vrot.slane %v891, 2
      %v893 = vmax.f32 %v891, %v892
      %v894 = vrot.slane %v893, 1
      %v895 = vmax.f32 %v893, %v894
      %v896 = vsel %vm251, %v215, -inf
      %v897 = vrot.slane %v896, 4
      %v898 = vmax.f32 %v896, %v897
      %v899 = vrot.slane %v898, 2
      %v900 = vmax.f32 %v898, %v899
      %v901 = vrot.slane %v900, 1
      %v902 = vmax.f32 %v900, %v901
      %v903 = vsel %vm251, %v216, -inf
      %v904 = vrot.slane %v903, 4
      %v905 = vmax.f32 %v903, %v904
      %v906 = vrot.slane %v905, 2
      %v907 = vmax.f32 %v905, %v906
      %v908 = vrot.slane %v907, 1
      %v909 = vmax.f32 %v907, %v908
      %v910 = vsel %vm251, %v217, -inf
      %v911 = vrot.slane %v910, 4
      %v912 = vmax.f32 %v910, %v911
      %v913 = vrot.slane %v912, 2
      %v914 = vmax.f32 %v912, %v913
      %v915 = vrot.slane %v914, 1
      %v916 = vmax.f32 %v914, %v915
      %v917 = vsel %vm251, %v218, -inf
      %v918 = vrot.slane %v917, 4
      %v919 = vmax.f32 %v917, %v918
      %v920 = vrot.slane %v919, 2
      %v921 = vmax.f32 %v919, %v920
      %v922 = vrot.slane %v921, 1
      %v923 = vmax.f32 %v921, %v922
      %v924 = vsel %vm251, %v219, -inf
      %v925 = vrot.slane %v924, 4
      %v926 = vmax.f32 %v924, %v925
      %v927 = vrot.slane %v926, 2
      %v928 = vmax.f32 %v926, %v927
      %v929 = vrot.slane %v928, 1
      %v930 = vmax.f32 %v928, %v929
      %v931 = vsel %vm251, %v220, -inf
      %v932 = vrot.slane %v931, 4
      %v933 = vmax.f32 %v931, %v932
      %v934 = vrot.slane %v933, 2
      %v935 = vmax.f32 %v933, %v934
      %v936 = vrot.slane %v935, 1
      %v937 = vmax.f32 %v935, %v936
      %v938 = vsel %vm251, %v221, -inf
      %v939 = vrot.slane %v938, 4
      %v940 = vmax.f32 %v938, %v939
      %v941 = vrot.slane %v940, 2
      %v942 = vmax.f32 %v940, %v941
      %v943 = vrot.slane %v942, 1
      %v944 = vmax.f32 %v942, %v943
      %v945 = vsel %vm251, %v222, -inf
      %v946 = vrot.slane %v945, 4
      %v947 = vmax.f32 %v945, %v946
      %v948 = vrot.slane %v947, 2
      %v949 = vmax.f32 %v947, %v948
      %v950 = vrot.slane %v949, 1
      %v951 = vmax.f32 %v949, %v950
      %v952 = vsel %vm251, %v223, -inf
      %v953 = vrot.slane %v952, 4
      %v954 = vmax.f32 %v952, %v953
      %v955 = vrot.slane %v954, 2
      %v956 = vmax.f32 %v954, %v955
      %v957 = vrot.slane %v956, 1
      %v958 = vmax.f32 %v956, %v957
      %v959 = vsel %vm251, %v224, -inf
      %v960 = vrot.slane %v959, 4
      %v961 = vmax.f32 %v959, %v960
      %v962 = vrot.slane %v961, 2
      %v963 = vmax.f32 %v961, %v962
      %v964 = vrot.slane %v963, 1
      %v965 = vmax.f32 %v963, %v964
      %v966 = vsel %vm251, %v225, -inf
      %v967 = vrot.slane %v966, 4
      %v968 = vmax.f32 %v966, %v967
      %v969 = vrot.slane %v968, 2
      %v970 = vmax.f32 %v968, %v969
      %v971 = vrot.slane %v970, 1
      %v972 = vmax.f32 %v970, %v971
      %v973 = vsel %vm251, %v226, -inf
      %v974 = vrot.slane %v973, 4
      %v975 = vmax.f32 %v973, %v974
      %v976 = vrot.slane %v975, 2
      %v977 = vmax.f32 %v975, %v976
      %v978 = vrot.slane %v977, 1
      %v979 = vmax.f32 %v977, %v978
      %v980 = vsel %vm251, %v227, -inf
      %v981 = vrot.slane %v980, 4
      %v982 = vmax.f32 %v980, %v981
      %v983 = vrot.slane %v982, 2
      %v984 = vmax.f32 %v982, %v983
      %v985 = vrot.slane %v984, 1
      %v986 = vmax.f32 %v984, %v985
      %v987 = vsel %vm251, %v228, -inf
      %v988 = vrot.slane %v987, 4
      %v989 = vmax.f32 %v987, %v988
      %v990 = vrot.slane %v989, 2
      %v991 = vmax.f32 %v989, %v990
      %v992 = vrot.slane %v991, 1
      %v993 = vmax.f32 %v991, %v992
      %v994 = vsel %vm251, %v229, -inf
      %v995 = vrot.slane %v994, 4
      %v996 = vmax.f32 %v994, %v995
      %v997 = vrot.slane %v996, 2
      %v998 = vmax.f32 %v996, %v997
      %v999 = vrot.slane %v998, 1
      %v1000 = vmax.f32 %v998, %v999
      %v1001 = vsel %vm251, %v230, -inf
      %v1002 = vrot.slane %v1001, 4
      %v1003 = vmax.f32 %v1001, %v1002
      %v1004 = vrot.slane %v1003, 2
      %v1005 = vmax.f32 %v1003, %v1004
      %v1006 = vrot.slane %v1005, 1
      %v1007 = vmax.f32 %v1005, %v1006
      %v1008 = vsel %vm251, %v231, -inf
      %v1009 = vrot.slane %v1008, 4
      %v1010 = vmax.f32 %v1008, %v1009
      %v1011 = vrot.slane %v1010, 2
      %v1012 = vmax.f32 %v1010, %v1011
      %v1013 = vrot.slane %v1012, 1
      %v1014 = vmax.f32 %v1012, %v1013
      %v1015 = vsel %vm251, %v232, -inf
      %v1016 = vrot.slane %v1015, 4
      %v1017 = vmax.f32 %v1015, %v1016
      %v1018 = vrot.slane %v1017, 2
      %v1019 = vmax.f32 %v1017, %v1018
      %v1020 = vrot.slane %v1019, 1
      %v1021 = vmax.f32 %v1019, %v1020
      %v1022 = vsel %vm251, %v233, -inf
      %v1023 = vrot.slane %v1022, 4
      %v1024 = vmax.f32 %v1022, %v1023
      %v1025 = vrot.slane %v1024, 2
      %v1026 = vmax.f32 %v1024, %v1025
      %v1027 = vrot.slane %v1026, 1
      %v1028 = vmax.f32 %v1026, %v1027
      %v1029 = vsel %vm251, %v234, -inf
      %v1030 = vrot.slane %v1029, 4
      %v1031 = vmax.f32 %v1029, %v1030
      %v1032 = vrot.slane %v1031, 2
      %v1033 = vmax.f32 %v1031, %v1032
      %v1034 = vrot.slane %v1033, 1
      %v1035 = vmax.f32 %v1033, %v1034
      %v1036 = vsel %vm251, %v235, -inf
      %v1037 = vrot.slane %v1036, 4
      %v1038 = vmax.f32 %v1036, %v1037
      %v1039 = vrot.slane %v1038, 2
      %v1040 = vmax.f32 %v1038, %v1039
      %v1041 = vrot.slane %v1040, 1
      %v1042 = vmax.f32 %v1040, %v1041
      %v1043 = vsel %vm251, %v236, -inf
      %v1044 = vrot.slane %v1043, 4
      %v1045 = vmax.f32 %v1043, %v1044
      %v1046 = vrot.slane %v1045, 2
      %v1047 = vmax.f32 %v1045, %v1046
      %v1048 = vrot.slane %v1047, 1
      %v1049 = vmax.f32 %v1047, %v1048
      %v1050 = vsel %vm251, %v237, -inf
      %v1051 = vrot.slane %v1050, 4
      %v1052 = vmax.f32 %v1050, %v1051
      %v1053 = vrot.slane %v1052, 2
      %v1054 = vmax.f32 %v1052, %v1053
      %v1055 = vrot.slane %v1054, 1
      %v1056 = vmax.f32 %v1054, %v1055
      %v1057 = vsel %vm251, %v238, -inf
      %v1058 = vrot.slane %v1057, 4
      %v1059 = vmax.f32 %v1057, %v1058
      %v1060 = vrot.slane %v1059, 2
      %v1061 = vmax.f32 %v1059, %v1060
      %v1062 = vrot.slane %v1061, 1
      %v1063 = vmax.f32 %v1061, %v1062
      %v1064 = vsel %vm251, %v239, -inf
      %v1065 = vrot.slane %v1064, 4
      %v1066 = vmax.f32 %v1064, %v1065
      %v1067 = vrot.slane %v1066, 2
      %v1068 = vmax.f32 %v1066, %v1067
      %v1069 = vrot.slane %v1068, 1
      %v1070 = vmax.f32 %v1068, %v1069
      %v1071 = vsel %vm251, %v240, -inf
      %v1072 = vrot.slane %v1071, 4
      %v1073 = vmax.f32 %v1071, %v1072
      %v1074 = vrot.slane %v1073, 2
      %v1075 = vmax.f32 %v1073, %v1074
      %v1076 = vrot.slane %v1075, 1
      %v1077 = vmax.f32 %v1075, %v1076
      %v1078 = vsel %vm251, %v241, -inf
      %v1079 = vrot.slane %v1078, 4
      %v1080 = vmax.f32 %v1078, %v1079
      %v1081 = vrot.slane %v1080, 2
      %v1082 = vmax.f32 %v1080, %v1081
      %v1083 = vrot.slane %v1082, 1
      %v1084 = vmax.f32 %v1082, %v1083
      %v1085 = vsel %vm251, %v242, -inf
      %v1086 = vrot.slane %v1085, 4
      %v1087 = vmax.f32 %v1085, %v1086
      %v1088 = vrot.slane %v1087, 2
      %v1089 = vmax.f32 %v1087, %v1088
      %v1090 = vrot.slane %v1089, 1
      %v1091 = vmax.f32 %v1089, %v1090
      %v1092 = vsel %vm251, %v243, -inf
      %v1093 = vrot.slane %v1092, 4
      %v1094 = vmax.f32 %v1092, %v1093
      %v1095 = vrot.slane %v1094, 2
      %v1096 = vmax.f32 %v1094, %v1095
      %v1097 = vrot.slane %v1096, 1
      %v1098 = vmax.f32 %v1096, %v1097
      %v1099 = vsel %vm251, %v244, -inf
      %v1100 = vrot.slane %v1099, 4
      %v1101 = vmax.f32 %v1099, %v1100
      %v1102 = vrot.slane %v1101, 2
      %v1103 = vmax.f32 %v1101, %v1102
      %v1104 = vrot.slane %v1103, 1
      %v1105 = vmax.f32 %v1103, %v1104
      %v1106 = vsel %vm251, %v245, -inf
      %v1107 = vrot.slane %v1106, 4
      %v1108 = vmax.f32 %v1106, %v1107
      %v1109 = vrot.slane %v1108, 2
      %v1110 = vmax.f32 %v1108, %v1109
      %v1111 = vrot.slane %v1110, 1
      %v1112 = vmax.f32 %v1110, %v1111
      %v1113 = vsel %vm251, %v246, -inf
      %v1114 = vrot.slane %v1113, 4
      %v1115 = vmax.f32 %v1113, %v1114
      %v1116 = vrot.slane %v1115, 2
      %v1117 = vmax.f32 %v1115, %v1116
      %v1118 = vrot.slane %v1117, 1
      %v1119 = vmax.f32 %v1117, %v1118
      %v1120 = vsel %vm251, %v247, -inf
      %v1121 = vrot.slane %v1120, 4
      %v1122 = vmax.f32 %v1120, %v1121
      %v1123 = vrot.slane %v1122, 2
      %v1124 = vmax.f32 %v1122, %v1123
      %v1125 = vrot.slane %v1124, 1
      %v1126 = vmax.f32 %v1124, %v1125
      %v1127 = vsel %vm251, %v248, -inf
      %v1128 = vrot.slane %v1127, 4
      %v1129 = vmax.f32 %v1127, %v1128
      %v1130 = vrot.slane %v1129, 2
      %v1131 = vmax.f32 %v1129, %v1130
      %v1132 = vrot.slane %v1131, 1
      %v1133 = vmax.f32 %v1131, %v1132
      %v1134 = vsel %vm251, %v249, -inf
      %v1135 = vrot.slane %v1134, 4
      %v1136 = vmax.f32 %v1134, %v1135
      %v1137 = vrot.slane %v1136, 2
      %v1138 = vmax.f32 %v1136, %v1137
      %v1139 = vrot.slane %v1138, 1
      %v1140 = vmax.f32 %v1138, %v1139
      %v1141 = vsel %vm251, %v250, -inf
      %v1142 = vrot.slane %v1141, 4
      %v1143 = vmax.f32 %v1141, %v1142
      %v1144 = vrot.slane %v1143, 2
      %v1145 = vmax.f32 %v1143, %v1144
      %v1146 = vrot.slane %v1145, 1
      %v1147 = vmax.f32 %v1145, %v1146
      %v1148 = vmax.f32 %v258, %v314
      %v1149 = vmax.f32 %v265, %v321
      %v1150 = vmax.f32 %v272, %v328
      %v1151 = vmax.f32 %v279, %v335
      %v1152 = vmax.f32 %v286, %v342
      %v1153 = vmax.f32 %v293, %v349
      %v1154 = vmax.f32 %v300, %v356
      %v1155 = vmax.f32 %v307, %v363
      %v1156 = vmax.f32 %v370, %v426
      %v1157 = vmax.f32 %v377, %v433
      %v1158 = vmax.f32 %v384, %v440
      %v1159 = vmax.f32 %v391, %v447
      %v1160 = vmax.f32 %v398, %v454
      %v1161 = vmax.f32 %v405, %v461
      %v1162 = vmax.f32 %v412, %v468
      %v1163 = vmax.f32 %v419, %v475
      %v1164 = vmax.f32 %v482, %v538
      %v1165 = vmax.f32 %v489, %v545
      %v1166 = vmax.f32 %v496, %v552
      %v1167 = vmax.f32 %v503, %v559
      %v1168 = vmax.f32 %v510, %v566
      %v1169 = vmax.f32 %v517, %v573
      %v1170 = vmax.f32 %v524, %v580
      %v1171 = vmax.f32 %v531, %v587
      %v1172 = vmax.f32 %v594, %v650
      %v1173 = vmax.f32 %v601, %v657
      %v1174 = vmax.f32 %v608, %v664
      %v1175 = vmax.f32 %v615, %v671
      %v1176 = vmax.f32 %v622, %v678
      %v1177 = vmax.f32 %v629, %v685
      %v1178 = vmax.f32 %v636, %v692
      %v1179 = vmax.f32 %v643, %v699
      %v1180 = vmax.f32 %v706, %v762
      %v1181 = vmax.f32 %v713, %v769
      %v1182 = vmax.f32 %v720, %v776
      %v1183 = vmax.f32 %v727, %v783
      %v1184 = vmax.f32 %v734, %v790
      %v1185 = vmax.f32 %v741, %v797
      %v1186 = vmax.f32 %v748, %v804
      %v1187 = vmax.f32 %v755, %v811
      %v1188 = vmax.f32 %v818, %v874
      %v1189 = vmax.f32 %v825, %v881
      %v1190 = vmax.f32 %v832, %v888
      %v1191 = vmax.f32 %v839, %v895
      %v1192 = vmax.f32 %v846, %v902
      %v1193 = vmax.f32 %v853, %v909
      %v1194 = vmax.f32 %v860, %v916
      %v1195 = vmax.f32 %v867, %v923
      %v1196 = vmax.f32 %v930, %v986
      %v1197 = vmax.f32 %v937, %v993
      %v1198 = vmax.f32 %v944, %v1000
      %v1199 = vmax.f32 %v951, %v1007
      %v1200 = vmax.f32 %v958, %v1014
      %v1201 = vmax.f32 %v965, %v1021
      %v1202 = vmax.f32 %v972, %v1028
      %v1203 = vmax.f32 %v979, %v1035
      %v1204 = vmax.f32 %v1042, %v1098
      %v1205 = vmax.f32 %v1049, %v1105
      %v1206 = vmax.f32 %v1056, %v1112
      %v1207 = vmax.f32 %v1063, %v1119
      %v1208 = vmax.f32 %v1070, %v1126
      %v1209 = vmax.f32 %v1077, %v1133
      %v1210 = vmax.f32 %v1084, %v1140
      %v1211 = vmax.f32 %v1091, %v1147
      %vm1276 = vcmask 1041409
      %v1277 = vsel %vm1276, %v1149, %v1148
      %vm1278 = vcmask 1042434
      %v1279 = vsel %vm1278, %v1150, %v1277
      %vm1280 = vcmask 1043459
      %v1281 = vsel %vm1280, %v1151, %v1279
      %vm1282 = vcmask 1044484
      %v1283 = vsel %vm1282, %v1152, %v1281
      %vm1284 = vcmask 1045509
      %v1285 = vsel %vm1284, %v1153, %v1283
      %vm1286 = vcmask 1046534
      %v1287 = vsel %vm1286, %v1154, %v1285
      %vm1288 = vcmask 1047559
      %v1289 = vsel %vm1288, %v1155, %v1287
      %v1290 = vsel %vm1276, %v1157, %v1156
      %v1291 = vsel %vm1278, %v1158, %v1290
      %v1292 = vsel %vm1280, %v1159, %v1291
      %v1293 = vsel %vm1282, %v1160, %v1292
      %v1294 = vsel %vm1284, %v1161, %v1293
      %v1295 = vsel %vm1286, %v1162, %v1294
      %v1296 = vsel %vm1288, %v1163, %v1295
      %v1297 = vsel %vm1276, %v1165, %v1164
      %v1298 = vsel %vm1278, %v1166, %v1297
      %v1299 = vsel %vm1280, %v1167, %v1298
      %v1300 = vsel %vm1282, %v1168, %v1299
      %v1301 = vsel %vm1284, %v1169, %v1300
      %v1302 = vsel %vm1286, %v1170, %v1301
      %v1303 = vsel %vm1288, %v1171, %v1302
      %v1304 = vsel %vm1276, %v1173, %v1172
      %v1305 = vsel %vm1278, %v1174, %v1304
      %v1306 = vsel %vm1280, %v1175, %v1305
      %v1307 = vsel %vm1282, %v1176, %v1306
      %v1308 = vsel %vm1284, %v1177, %v1307
      %v1309 = vsel %vm1286, %v1178, %v1308
      %v1310 = vsel %vm1288, %v1179, %v1309
      %v1311 = vsel %vm1276, %v1181, %v1180
      %v1312 = vsel %vm1278, %v1182, %v1311
      %v1313 = vsel %vm1280, %v1183, %v1312
      %v1314 = vsel %vm1282, %v1184, %v1313
      %v1315 = vsel %vm1284, %v1185, %v1314
      %v1316 = vsel %vm1286, %v1186, %v1315
      %v1317 = vsel %vm1288, %v1187, %v1316
      %v1318 = vsel %vm1276, %v1189, %v1188
      %v1319 = vsel %vm1278, %v1190, %v1318
      %v1320 = vsel %vm1280, %v1191, %v1319
      %v1321 = vsel %vm1282, %v1192, %v1320
      %v1322 = vsel %vm1284, %v1193, %v1321
      %v1323 = vsel %vm1286, %v1194, %v1322
      %v1324 = vsel %vm1288, %v1195, %v1323
      %v1325 = vsel %vm1276, %v1197, %v1196
      %v1326 = vsel %vm1278, %v1198, %v1325
      %v1327 = vsel %vm1280, %v1199, %v1326
      %v1328 = vsel %vm1282, %v1200, %v1327
      %v1329 = vsel %vm1284, %v1201, %v1328
      %v1330 = vsel %vm1286, %v1202, %v1329
      %v1331 = vsel %vm1288, %v1203, %v1330
      %v1332 = vsel %vm1276, %v1205, %v1204
      %v1333 = vsel %vm1278, %v1206, %v1332
      %v1334 = vsel %vm1280, %v1207, %v1333
      %v1335 = vsel %vm1282, %v1208, %v1334
      %v1336 = vsel %vm1284, %v1209, %v1335
      %v1337 = vsel %vm1286, %v1210, %v1336
      %v1338 = vsel %vm1288, %v1211, %v1337
      %1347 = vst [vmem:[%s121] sm:$0xff] %v1289
      %1348 = vst [vmem:[%s121 + $0x8] sm:$0xff] %v1296
      %1349 = vst [vmem:[%s121 + $0x10] sm:$0xff] %v1303
      %1350 = vst [vmem:[%s121 + $0x18] sm:$0xff] %v1310
      %1351 = vst [vmem:[%s121 + $0x20] sm:$0xff] %v1317
      %1352 = vst [vmem:[%s121 + $0x28] sm:$0xff] %v1324
      %1353 = vst [vmem:[%s121 + $0x30] sm:$0xff] %v1331
      %1354 = vst [vmem:[%s121 + $0x38] sm:$0xff] %v1338
      %s1355 = smul.u32 8, %s12
      %p1356 = scmp.lt.s32.totalorder %s1355, 15
      %s1357 = scalar_select %p1356, %s1355, 15
      %s1358 = smul.addr %s1357, 8
      %s1359 = scalar_lea.vmem %s1, %s1358
      // Predicated region
      $region25: #{down_forward.4} parent=23 // pred_check
        %p1360 = pneg %p56
      $region26: #{down_forward.4} parent=23 // pred_check_branch
        %1362 = sbr.rel (%p1360) target = $region28
      $region27: #{down_forward.4} parent=23 // pred_region
        %s1363 = smul.u32 8, %s12
      $region28: #{down_forward.4} parent=23 // pred_fallthru
        _
    $region24: #{down_forward.4} parent=5 // pred_fallthru
      _
    %p1364 = scmp.le.s32.totalorder 2, %s7
    // Predicated region
    $region29: #{down_forward.4} parent=5 // pred_check
      %p1365 = pneg %p1364
    $region30: #{down_forward.4} parent=5 // pred_check_branch
      %1367 = sbr.rel (%p1365) target = $region32
    $region31: #{down_forward.4} parent=5 // pred_region
      %s1368 = ssub.s32 %s7, 2
      // Predicated region
      $region33: #{down_forward.4} parent=31 // pred_check
        %p1369 = pneg %p62
      $region34: #{down_forward.4} parent=31 // pred_check_branch
        %1371 = sbr.rel (%p1369) target = $region36
      $region35: #{down_forward.4} parent=31 // pred_region
        %s1372 = smul.u32 8, %s13
        %p1373 = scmp.lt.s32.totalorder %s1372, 15
        %s1374 = scalar_select %p1373, %s1372, 15
        %s1375 = smul.addr %s1374, 8
        %s1376 = scalar_lea.vmem %s1, %s1375
      $region36: #{down_forward.4} parent=31 // pred_fallthru
        _
    $region32: #{down_forward.4} parent=5 // pred_fallthru
      _
  $region6: #{down_forward.4} parent=0 // loop_footer
    %s11 = sadd.s32 1, %s7
  $region7: #{down_forward.4} parent=0 // loop_footer_branch
    %6 = sbr.rel target = $region3
  $region8: #{down_forward.4} parent=0 // loop_exit
    _

// kernel: down_forward.7
$region0: #{down_forward.7}
  #allocation0 [shape = 'u32[]', space=smem, size = 0x4, offset = 0x4, fixed_abs, tag = 'smem constant byte address 0x4 - core index']
  #allocation1 [shape = 'u32[144,128]{1,0:T(1,128)}', space=vmem, size = 0x12000, scoped, tag = 'internal scratch']
  %s0 = inlined_call_operand.vmem [shape: f32[2,4,4,128], index: 0, kind: input, shape index: {}]
  %s1 = inlined_call_operand.vmem [shape: f32[1,128], index: 1, kind: input, shape index: {}]
  %s2 = inlined_call_operand.vmem [shape: f32[1,128], index: 2, kind: input, shape index: {}]
  %s3 = inlined_call_operand.vmem [shape: f32[2,4,4,128], index: 3, kind: output, shape index: {}]
  %s4 = sld [smem:[#allocation0]]
  $region45: #{down_forward.7} parent=0
    _
  %s6 = ssub.s32 1, %s4
  %s7 = scalar_select 0, %s6, %s4
  loop: start=0, step=1, limit=4
  $region2: #{down_forward.7} parent=0 // loop_pre_header
    _
  $region3: #{down_forward.7} parent=0 // loop_header
    %s9 = sphi 0, %s13
    %p10 = scmp.ge.s32.totalorder %s9, 4
    %s19 = sphi 0, %s21
    %s22 = sphi 0, %s19
    %s23 = sphi 0, %s22
    %s39 = sphi 0, %s23
    %s43 = sphi 0, %s43
    %s45 = sphi 0, %s43
    %s46 = sphi 0, %s45
    %s60 = sphi 0, %s46
    %s64 = sphi 0, %s64
    %s66 = sphi 0, %s64
    %s67 = sphi 0, %s66
    %s81 = sphi 0, %s67
    %s87 = sphi 0, %s89
    %s90 = sphi 0, %s87
    %s91 = sphi 0, %s90
    %s107 = sphi 0, %s91
  $region4: #{down_forward.7} parent=0 // loop_header_branch
    %12 = sbr.rel (%p10) target = $region8
  $region5: #{down_forward.7} parent=0 // loop_body
    %s14 = ssub.s32 %s9, 1
    %s15 = ssub.s32 %s9, 2
    %s16 = sadd.s32 %s9, 1
    %s17 = ssub.s32 %s9, %s16
    %p18 = scmp.eq.s32.totalorder %s17, 0
    %s20 = sadd.s32 %s19, 1
    %s21 = scalar_select %p18, %s19, %s20
    %p24 = pneg %p18
    %p25 = scmp.eq.s32.totalorder %s9, 1
    %p26 = por %p24, %p25
    %p27 = scmp.ne.s32.totalorder %s19, %s22
    %p28 = scmp.eq.s32.totalorder %s9, 0
    %p29 = por %p27, %p28
    %p30 = scmp.ne.s32.totalorder %s19, %s22
    %p31 = scmp.eq.s32.totalorder %s14, 1
    %p32 = por %p30, %p31
    %p33 = scmp.ne.s32.totalorder %s22, %s23
    %p34 = scmp.eq.s32.totalorder %s14, 0
    %p35 = por %p33, %p34
    %p36 = scmp.ne.s32.totalorder %s22, %s23
    %p37 = scmp.eq.s32.totalorder %s15, 1
    %p38 = por %p36, %p37
    %p40 = scmp.ne.s32.totalorder %s23, %s39
    %p41 = scmp.eq.s32.totalorder %s15, 0
    %p42 = por %p40, %p41
    %s44 = sadd.s32 %s43, 1
    %p47 = scmp.eq.s32.totalorder %s9, 1
    %p48 = scmp.ne.s32.totalorder %s43, %s45
    %p49 = scmp.eq.s32.totalorder %s9, 0
    %p50 = por %p48, %p49
    %p51 = scmp.ne.s32.totalorder %s43, %s45
    %p52 = scmp.eq.s32.totalorder %s14, 1
    %p53 = por %p51, %p52
    %p54 = scmp.ne.s32.totalorder %s45, %s46
    %p55 = scmp.eq.s32.totalorder %s14, 0
    %p56 = por %p54, %p55
    %p57 = scmp.ne.s32.totalorder %s45, %s46
    %p58 = scmp.eq.s32.totalorder %s15, 1
    %p59 = por %p57, %p58
    %p61 = scmp.ne.s32.totalorder %s46, %s60
    %p62 = scmp.eq.s32.totalorder %s15, 0
    %p63 = por %p61, %p62
    %s65 = sadd.s32 %s64, 1
    %p68 = scmp.eq.s32.totalorder %s9, 1
    %p69 = scmp.ne.s32.totalorder %s64, %s66
    %p70 = scmp.eq.s32.totalorder %s9, 0
    %p71 = por %p69, %p70
    %p72 = scmp.ne.s32.totalorder %s64, %s66
    %p73 = scmp.eq.s32.totalorder %s14, 1
    %p74 = por %p72, %p73
    %p75 = scmp.ne.s32.totalorder %s66, %s67
    %p76 = scmp.eq.s32.totalorder %s14, 0
    %p77 = por %p75, %p76
    %p78 = scmp.ne.s32.totalorder %s66, %s67
    %p79 = scmp.eq.s32.totalorder %s15, 1
    %p80 = por %p78, %p79
    %p82 = scmp.ne.s32.totalorder %s67, %s81
    %p83 = scmp.eq.s32.totalorder %s15, 0
    %p84 = por %p82, %p83
    %s85 = ssub.s32 %s9, %s16
    %p86 = scmp.eq.s32.totalorder %s85, 0
    %s88 = sadd.s32 %s87, 1
    %s89 = scalar_select %p86, %s87, %s88
    %p92 = pneg %p86
    %p93 = scmp.eq.s32.totalorder %s9, 1
    %p94 = por %p92, %p93
    %p95 = scmp.ne.s32.totalorder %s87, %s90
    %p96 = scmp.eq.s32.totalorder %s9, 0
    %p97 = por %p95, %p96
    %p98 = scmp.ne.s32.totalorder %s87, %s90
    %p99 = scmp.eq.s32.totalorder %s14, 1
    %p100 = por %p98, %p99
    %p101 = scmp.ne.s32.totalorder %s90, %s91
    %p102 = scmp.eq.s32.totalorder %s14, 0
    %p103 = por %p101, %p102
    %p104 = scmp.ne.s32.totalorder %s90, %s91
    %p105 = scmp.eq.s32.totalorder %s15, 1
    %p106 = por %p104, %p105
    %p108 = scmp.ne.s32.totalorder %s91, %s107
    %p109 = scmp.eq.s32.totalorder %s15, 0
    %p110 = por %p108, %p109
    %p111 = scmp.le.s32.totalorder 1, %s9
    %p112 = scmp.lt.s32.totalorder %s9, 3
    %p113 = pnand %p111, %p112
    %p114 = pneg %p113
    // Predicated region
    $region9: #{down_forward.7} parent=5 // pred_check
      _
    $region10: #{down_forward.7} parent=5 // pred_check_branch
      %116 = sbr.rel (%p113) target = $region12
    $region11: #{down_forward.7} parent=5 // pred_region
      %s117 = ssub.s32 %s9, 1
      // Predicated region
      $region13: #{down_forward.7} parent=11 // pred_check
        %p118 = pneg %p56
      $region14: #{down_forward.7} parent=11 // pred_check_branch
        %120 = sbr.rel (%p118) target = $region16
      $region15: #{down_forward.7} parent=11 // pred_region
        _
      $region16: #{down_forward.7} parent=11 // pred_fallthru
        _
      // Predicated region
      $region17: #{down_forward.7} parent=11 // pred_check
        %p121 = pneg %p77
      $region18: #{down_forward.7} parent=11 // pred_check_branch
        %123 = sbr.rel (%p121) target = $region20
      $region19: #{down_forward.7} parent=11 // pred_region
        _
      $region20: #{down_forward.7} parent=11 // pred_fallthru
        _
    $region12: #{down_forward.7} parent=5 // pred_fallthru
      _
    %p124 = scmp.lt.s32.totalorder %s9, 2
    // Predicated region
    $region21: #{down_forward.7} parent=5 // pred_check
      %p125 = pneg %p124
    $region22: #{down_forward.7} parent=5 // pred_check_branch
      %127 = sbr.rel (%p125) target = $region24
    $region23: #{down_forward.7} parent=5 // pred_region
      // Predicated region
      $region25: #{down_forward.7} parent=23 // pred_check
        %p128 = pneg %p29
      $region26: #{down_forward.7} parent=23 // pred_check_branch
        %130 = sbr.rel (%p128) target = $region28
      $region27: #{down_forward.7} parent=23 // pred_region
        %p131 = scmp.lt.s32.totalorder %s9, 1
        %s132 = scalar_select %p131, %s9, 1
        %s133 = smul.addr %s132, 4
        %s134 = smul.addr %s133, 4
        %s135 = scalar_lea.vmem %s0, %s134
      $region28: #{down_forward.7} parent=23 // pred_fallthru
        _
    $region24: #{down_forward.7} parent=5 // pred_fallthru
      _
    %p136 = scmp.le.s32.totalorder 1, %s9
    %p137 = scmp.lt.s32.totalorder %s9, 3
    %p138 = pnand %p136, %p137
    %p139 = pneg %p138
    // Predicated region
    $region29: #{down_forward.7} parent=5 // pred_check
      _
    $region30: #{down_forward.7} parent=5 // pred_check_branch
      %141 = sbr.rel (%p138) target = $region32
    $region31: #{down_forward.7} parent=5 // pred_region
      %s142 = ssub.s32 %s9, 1
      %p143 = scmp.lt.s32.totalorder %s14, 1
      %s144 = scalar_select %p143, %s14, 1
      %s145 = smul.addr %s144, 4
      %s146 = smul.addr %s145, 4
      %s147 = scalar_lea.vmem %s0, %s146
      %p148 = pneg %p35
      %p149 = pneg %p32
      %p150 = pneg %p56
      %p151 = pneg %p53
      %p152 = pneg %p77
      %p153 = pneg %p74
      %p154 = pneg %p103
      %p155 = pneg %p100
      %p156 = scmp.lt.s32.totalorder %s14, 1
      %s157 = scalar_select %p156, %s14, 1
      %s158 = smul.addr %s157, 4
      %s159 = smul.addr %s158, 4
      %s160 = scalar_lea.vmem %s3, %s159
      %p161 = scmp.lt.s32.totalorder %s14, 1
      %s162 = scalar_select %p161, %s14, 1
      %s163 = smul.addr %s162, 4
      %s164 = smul.addr %s163, 4
      %s165 = scalar_lea.vmem %s0, %s164
      %p166 = scmp.lt.s32.totalorder %s14, 1
      %s167 = scalar_select %p166, %s14, 1
      %s168 = smul.addr %s167, 4
      %s169 = smul.addr %s168, 4
      %s170 = scalar_lea.vmem %s3, %s169
      %v171 = vld [vmem:[%s165] sm:$0xf]
      %v172 = vld [vmem:[%s165 + $0x4] sm:$0xf]
      %v173 = vld [vmem:[%s165 + $0x8] sm:$0xf]
      %v174 = vld [vmem:[%s165 + $0xc] sm:$0xf]
      %v175 = vld [vmem:[%s1] sm:$0x1]
      %v177 = vlaneseq
      %v178 = vshrl.u32 %v177, 7
      %v179 = vsub.s32 0, %v178
      %v180 = vrot.slane %v175, %v179
      %v182 = vmul.f32 %v171, %v180
      %v183 = vmul.f32 %v172, %v180
      %v184 = vmul.f32 %v173, %v180
      %v185 = vmul.f32 %v174, %v180
      %v186 = vld [vmem:[%s2] sm:$0x1]
      %v188 = vlaneseq
      %v189 = vshrl.u32 %v188, 7
      %v190 = vsub.s32 0, %v189
      %v191 = vrot.slane %v186, %v190
      %v193 = vadd.f32 %v182, %v191
      %v194 = vadd.f32 %v183, %v191
      %v195 = vadd.f32 %v184, %v191
      %v196 = vadd.f32 %v185, %v191
      %v197 = vmax.f32 %v193, 0.0
      %v198 = vmax.f32 %v194, 0.0
      %v199 = vmax.f32 %v195, 0.0
      %v200 = vmax.f32 %v196, 0.0
      %201 = vst [vmem:[%s170] sm:$0xf] %v197
      %202 = vst [vmem:[%s170 + $0x4] sm:$0xf] %v198
      %203 = vst [vmem:[%s170 + $0x8] sm:$0xf] %v199
      %204 = vst [vmem:[%s170 + $0xc] sm:$0xf] %v200
      %p205 = scmp.lt.s32.totalorder %s14, 1
      %s206 = scalar_select %p205, %s14, 1
      %s207 = smul.addr %s206, 4
      %s208 = smul.addr %s207, 4
      %s209 = scalar_lea.vmem %s3, %s208
      // Predicated region
      $region33: #{down_forward.7} parent=31 // pred_check
        %p210 = pneg %p100
      $region34: #{down_forward.7} parent=31 // pred_check_branch
        %212 = sbr.rel (%p210) target = $region36
      $region35: #{down_forward.7} parent=31 // pred_region
        _
      $region36: #{down_forward.7} parent=31 // pred_fallthru
        _
    $region32: #{down_forward.7} parent=5 // pred_fallthru
      _
    %p213 = scmp.le.s32.totalorder 2, %s9
    // Predicated region
    $region37: #{down_forward.7} parent=5 // pred_check
      %p214 = pneg %p213
    $region38: #{down_forward.7} parent=5 // pred_check_branch
      %216 = sbr.rel (%p214) target = $region40
    $region39: #{down_forward.7} parent=5 // pred_region
      %s217 = ssub.s32 %s9, 2
      // Predicated region
      $region41: #{down_forward.7} parent=39 // pred_check
        %p218 = pneg %p106
      $region42: #{down_forward.7} parent=39 // pred_check_branch
        %220 = sbr.rel (%p218) target = $region44
      $region43: #{down_forward.7} parent=39 // pred_region
        %p221 = scmp.lt.s32.totalorder %s15, 1
        %s222 = scalar_select %p221, %s15, 1
        %s223 = smul.addr %s222, 4
        %s224 = smul.addr %s223, 4
        %s225 = scalar_lea.vmem %s3, %s224
      $region44: #{down_forward.7} parent=39 // pred_fallthru
        _
    $region40: #{down_forward.7} parent=5 // pred_fallthru
      _
  $region6: #{down_forward.7} parent=0 // loop_footer
    %s13 = sadd.s32 1, %s9
  $region7: #{down_forward.7} parent=0 // loop_footer_branch
    %8 = sbr.rel target = $region3
  $region8: #{down_forward.7} parent=0 // loop_exit
    _

// kernel: down_forward.5
$region0: #{down_forward.5}
  #allocation0 [shape = 'u32[]', space=smem, size = 0x4, offset = 0x4, fixed_abs, tag = 'smem constant byte address 0x4 - core index']
  #allocation1 [shape = 'u32[144,128]{1,0:T(1,128)}', space=vmem, size = 0x12000, scoped, tag = 'internal scratch']
  %s0 = inlined_call_operand.vmem [shape: f32[2,8,8,128], index: 0, kind: input, shape index: {}, may-alias: {0,1,2}]
  %s1 = inlined_call_operand.vmem [shape: f32[2,8,8,128], index: 1, kind: input, shape index: {}, may-alias: {0,1,2}]
  %s2 = inlined_call_operand.vmem [shape: f32[2,8,8,128], index: 2, kind: input, shape index: {}, may-alias: {0,1,2}]
  %s3 = inlined_call_operand.vmem [shape: bf16[9,128,128], index: 3, kind: input, shape index: {}]
  %s4 = inlined_call_operand.vmem [shape: f32[1,128], index: 4, kind: input, shape index: {}]
  %s5 = inlined_call_operand.vmem [shape: f32[1,128], index: 5, kind: input, shape index: {}]
  %s6 = inlined_call_operand.vmem [shape: f32[2,6,6,128], index: 6, kind: output, shape index: {0}]
  %s7 = inlined_call_operand.vmem [shape: f32[2,2,128], index: 7, kind: output, shape index: {1}]
  %8 = xla_tuple %s6, %s7
  %s9 = sld [smem:[#allocation0]]
  $region69: #{down_forward.5} parent=0
    _
  %s11 = ssub.s32 1, %s9
  %s12 = scalar_select 0, %s11, %s9
  loop: start=0, step=1, limit=14
  $region2: #{down_forward.5} parent=0 // loop_pre_header
    _
  $region3: #{down_forward.5} parent=0 // loop_header
    %s14 = sphi 0, %s18
    %p15 = scmp.ge.s32.totalorder %s14, 14
    %s21 = sphi 0, %s33
    %s22 = sphi 0, %s29
    %s23 = sphi 0, %s21
    %s24 = sphi 0, %s22
    %s25 = sphi 0, %s23
    %s26 = sphi 0, %s24
    %s38 = sphi 0, %s40
    %s41 = sphi 0, %s38
    %s42 = sphi 0, %s41
    %s58 = sphi 0, %s42
    %s68 = sphi 0, %s70
    %s71 = sphi 0, %s68
    %s72 = sphi 0, %s71
    %s88 = sphi 0, %s72
    %s98 = sphi 0, %s100
    %s101 = sphi 0, %s98
    %s102 = sphi 0, %s101
    %s118 = sphi 0, %s102
    %s122 = sphi 0, %s122
    %s124 = sphi 0, %s122
    %s125 = sphi 0, %s124
    %s139 = sphi 0, %s125
    %s143 = sphi 0, %s143
    %s145 = sphi 0, %s143
    %s146 = sphi 0, %s145
    %s160 = sphi 0, %s146
    %s164 = sphi 0, %s164
    %s166 = sphi 0, %s164
    %s167 = sphi 0, %s166
    %s181 = sphi 0, %s167
    %s189 = sphi 0, %s191
    %s192 = sphi 0, %s189
    %s193 = sphi 0, %s192
    %s209 = sphi 0, %s193
    %s215 = sphi 0, %s217
    %s218 = sphi 0, %s215
    %s219 = sphi 0, %s218
    %s235 = sphi 0, %s219
  $region4: #{down_forward.5} parent=0 // loop_header_branch
    %17 = sbr.rel (%p15) target = $region8
  $region5: #{down_forward.5} parent=0 // loop_body
    %s19 = ssub.s32 %s14, 1
    %s20 = ssub.s32 %s14, 2
    %s27 = sadd.s32 1, %s22
    %p28 = scmp.ge.s32.totalorder %s27, 6
    %s29 = scalar_select %p28, 0, %s27
    %s30 = sadd.s32 1, %s21
    %s31 = scalar_select %p28, %s30, %s21
    %p32 = scmp.ge.s32.totalorder %s31, 2
    %s33 = scalar_select %p32, 0, %s31
    %s34 = ssub.s32 %s21, %s33
    %s35 = ssub.s32 %s22, %s29
    %s36 = sor.u32 %s34, %s35
    %p37 = scmp.eq.s32.totalorder %s36, 0
    %s39 = sadd.s32 %s38, 1
    %s40 = scalar_select %p37, %s38, %s39
    %p43 = pneg %p37
    %p44 = scmp.eq.s32.totalorder %s14, 11
    %p45 = por %p43, %p44
    %p46 = scmp.ne.s32.totalorder %s38, %s41
    %p47 = scmp.eq.s32.totalorder %s14, 0
    %p48 = por %p46, %p47
    %p49 = scmp.ne.s32.totalorder %s38, %s41
    %p50 = scmp.eq.s32.totalorder %s19, 11
    %p51 = por %p49, %p50
    %p52 = scmp.ne.s32.totalorder %s41, %s42
    %p53 = scmp.eq.s32.totalorder %s19, 0
    %p54 = por %p52, %p53
    %p55 = scmp.ne.s32.totalorder %s41, %s42
    %p56 = scmp.eq.s32.totalorder %s20, 11
    %p57 = por %p55, %p56
    %p59 = scmp.ne.s32.totalorder %s42, %s58
    %p60 = scmp.eq.s32.totalorder %s20, 0
    %p61 = por %p59, %p60
    %s62 = sadd.s32 %s22, 1
    %s63 = sadd.s32 %s29, 1
    %s64 = ssub.s32 %s21, %s33
    %s65 = ssub.s32 %s62, %s63
    %s66 = sor.u32 %s64, %s65
    %p67 = scmp.eq.s32.totalorder %s66, 0
    %s69 = sadd.s32 %s68, 1
    %s70 = scalar_select %p67, %s68, %s69
    %p73 = pneg %p67
    %p74 = scmp.eq.s32.totalorder %s14, 11
    %p75 = por %p73, %p74
    %p76 = scmp.ne.s32.totalorder %s68, %s71
    %p77 = scmp.eq.s32.totalorder %s14, 0
    %p78 = por %p76, %p77
    %p79 = scmp.ne.s32.totalorder %s68, %s71
    %p80 = scmp.eq.s32.totalorder %s19, 11
    %p81 = por %p79, %p80
    %p82 = scmp.ne.s32.totalorder %s71, %s72
    %p83 = scmp.eq.s32.totalorder %s19, 0
    %p84 = por %p82, %p83
    %p85 = scmp.ne.s32.totalorder %s71, %s72
    %p86 = scmp.eq.s32.totalorder %s20, 11
    %p87 = por %p85, %p86
    %p89 = scmp.ne.s32.totalorder %s72, %s88
    %p90 = scmp.eq.s32.totalorder %s20, 0
    %p91 = por %p89, %p90
    %s92 = sadd.s32 %s22, 2
    %s93 = sadd.s32 %s29, 2
    %s94 = ssub.s32 %s21, %s33
    %s95 = ssub.s32 %s92, %s93
    %s96 = sor.u32 %s94, %s95
    %p97 = scmp.eq.s32.totalorder %s96, 0
    %s99 = sadd.s32 %s98, 1
    %s100 = scalar_select %p97, %s98, %s99
    %p103 = pneg %p97
    %p104 = scmp.eq.s32.totalorder %s14, 11
    %p105 = por %p103, %p104
    %p106 = scmp.ne.s32.totalorder %s98, %s101
    %p107 = scmp.eq.s32.totalorder %s14, 0
    %p108 = por %p106, %p107
    %p109 = scmp.ne.s32.totalorder %s98, %s101
    %p110 = scmp.eq.s32.totalorder %s19, 11
    %p111 = por %p109, %p110
    %p112 = scmp.ne.s32.totalorder %s101, %s102
    %p113 = scmp.eq.s32.totalorder %s19, 0
    %p114 = por %p112, %p113
    %p115 = scmp.ne.s32.totalorder %s101, %s102
    %p116 = scmp.eq.s32.totalorder %s20, 11
    %p117 = por %p115, %p116
    %p119 = scmp.ne.s32.totalorder %s102, %s118
    %p120 = scmp.eq.s32.totalorder %s20, 0
    %p121 = por %p119, %p120
    %s123 = sadd.s32 %s122, 1
    %p126 = scmp.eq.s32.totalorder %s14, 11
    %p127 = scmp.ne.s32.totalorder %s122, %s124
    %p128 = scmp.eq.s32.totalorder %s14, 0
    %p129 = por %p127, %p128
    %p130 = scmp.ne.s32.totalorder %s122, %s124
    %p131 = scmp.eq.s32.totalorder %s19, 11
    %p132 = por %p130, %p131
    %p133 = scmp.ne.s32.totalorder %s124, %s125
    %p134 = scmp.eq.s32.totalorder %s19, 0
    %p135 = por %p133, %p134
    %p136 = scmp.ne.s32.totalorder %s124, %s125
    %p137 = scmp.eq.s32.totalorder %s20, 11
    %p138 = por %p136, %p137
    %p140 = scmp.ne.s32.totalorder %s125, %s139
    %p141 = scmp.eq.s32.totalorder %s20, 0
    %p142 = por %p140, %p141
    %s144 = sadd.s32 %s143, 1
    %p147 = scmp.eq.s32.totalorder %s14, 11
    %p148 = scmp.ne.s32.totalorder %s143, %s145
    %p149 = scmp.eq.s32.totalorder %s14, 0
    %p150 = por %p148, %p149
    %p151 = scmp.ne.s32.totalorder %s143, %s145
    %p152 = scmp.eq.s32.totalorder %s19, 11
    %p153 = por %p151, %p152
    %p154 = scmp.ne.s32.totalorder %s145, %s146
    %p155 = scmp.eq.s32.totalorder %s19, 0
    %p156 = por %p154, %p155
    %p157 = scmp.ne.s32.totalorder %s145, %s146
    %p158 = scmp.eq.s32.totalorder %s20, 11
    %p159 = por %p157, %p158
    %p161 = scmp.ne.s32.totalorder %s146, %s160
    %p162 = scmp.eq.s32.totalorder %s20, 0
    %p163 = por %p161, %p162
    %s165 = sadd.s32 %s164, 1
    %p168 = scmp.eq.s32.totalorder %s14, 11
    %p169 = scmp.ne.s32.totalorder %s164, %s166
    %p170 = scmp.eq.s32.totalorder %s14, 0
    %p171 = por %p169, %p170
    %p172 = scmp.ne.s32.totalorder %s164, %s166
    %p173 = scmp.eq.s32.totalorder %s19, 11
    %p174 = por %p172, %p173
    %p175 = scmp.ne.s32.totalorder %s166, %s167
    %p176 = scmp.eq.s32.totalorder %s19, 0
    %p177 = por %p175, %p176
    %p178 = scmp.ne.s32.totalorder %s166, %s167
    %p179 = scmp.eq.s32.totalorder %s20, 11
    %p180 = por %p178, %p179
    %p182 = scmp.ne.s32.totalorder %s167, %s181
    %p183 = scmp.eq.s32.totalorder %s20, 0
    %p184 = por %p182, %p183
    %s185 = ssub.s32 %s21, %s33
    %s186 = ssub.s32 %s22, %s29
    %s187 = sor.u32 %s185, %s186
    %p188 = scmp.eq.s32.totalorder %s187, 0
    %s190 = sadd.s32 %s189, 1
    %s191 = scalar_select %p188, %s189, %s190
    %p194 = pneg %p188
    %p195 = scmp.eq.s32.totalorder %s14, 11
    %p196 = por %p194, %p195
    %p197 = scmp.ne.s32.totalorder %s189, %s192
    %p198 = scmp.eq.s32.totalorder %s14, 0
    %p199 = por %p197, %p198
    %p200 = scmp.ne.s32.totalorder %s189, %s192
    %p201 = scmp.eq.s32.totalorder %s19, 11
    %p202 = por %p200, %p201
    %p203 = scmp.ne.s32.totalorder %s192, %s193
    %p204 = scmp.eq.s32.totalorder %s19, 0
    %p205 = por %p203, %p204
    %p206 = scmp.ne.s32.totalorder %s192, %s193
    %p207 = scmp.eq.s32.totalorder %s20, 11
    %p208 = por %p206, %p207
    %p210 = scmp.ne.s32.totalorder %s193, %s209
    %p211 = scmp.eq.s32.totalorder %s20, 0
    %p212 = por %p210, %p211
    %s213 = ssub.s32 %s21, %s33
    %p214 = scmp.eq.s32.totalorder %s213, 0
    %s216 = sadd.s32 %s215, 1
    %s217 = scalar_select %p214, %s215, %s216
    %p220 = pneg %p214
    %p221 = scmp.eq.s32.totalorder %s14, 11
    %p222 = por %p220, %p221
    %p223 = scmp.ne.s32.totalorder %s215, %s218
    %p224 = scmp.eq.s32.totalorder %s14, 0
    %p225 = por %p223, %p224
    %p226 = scmp.ne.s32.totalorder %s215, %s218
    %p227 = scmp.eq.s32.totalorder %s19, 11
    %p228 = por %p226, %p227
    %p229 = scmp.ne.s32.totalorder %s218, %s219
    %p230 = scmp.eq.s32.totalorder %s19, 0
    %p231 = por %p229, %p230
    %p232 = scmp.ne.s32.totalorder %s218, %s219
    %p233 = scmp.eq.s32.totalorder %s20, 11
    %p234 = por %p232, %p233
    %p236 = scmp.ne.s32.totalorder %s219, %s235
    %p237 = scmp.eq.s32.totalorder %s20, 0
    %p238 = por %p236, %p237
    %p239 = scmp.le.s32.totalorder 1, %s14
    %p240 = scmp.lt.s32.totalorder %s14, 13
    %p241 = pnand %p239, %p240
    %p242 = pneg %p241
    // Predicated region
    $region9: #{down_forward.5} parent=5 // pred_check
      _
    $region10: #{down_forward.5} parent=5 // pred_check_branch
      %244 = sbr.rel (%p241) target = $region12
    $region11: #{down_forward.5} parent=5 // pred_region
      %s245 = ssub.s32 %s14, 1
      // Predicated region
      $region13: #{down_forward.5} parent=11 // pred_check
        %p246 = pneg %p135
      $region14: #{down_forward.5} parent=11 // pred_check_branch
        %248 = sbr.rel (%p246) target = $region16
      $region15: #{down_forward.5} parent=11 // pred_region
        _
      $region16: #{down_forward.5} parent=11 // pred_fallthru
        _
      // Predicated region
      $region17: #{down_forward.5} parent=11 // pred_check
        %p249 = pneg %p156
      $region18: #{down_forward.5} parent=11 // pred_check_branch
        %251 = sbr.rel (%p249) target = $region20
      $region19: #{down_forward.5} parent=11 // pred_region
        _
      $region20: #{down_forward.5} parent=11 // pred_fallthru
        _
      // Predicated region
      $region21: #{down_forward.5} parent=11 // pred_check
        %p252 = pneg %p177
      $region22: #{down_forward.5} parent=11 // pred_check_branch
        %254 = sbr.rel (%p252) target = $region24
      $region23: #{down_forward.5} parent=11 // pred_region
        _
      $region24: #{down_forward.5} parent=11 // pred_fallthru
        _
    $region12: #{down_forward.5} parent=5 // pred_fallthru
      _
    %p255 = scmp.lt.s32.totalorder %s14, 12
    // Predicated region
    $region25: #{down_forward.5} parent=5 // pred_check
      %p256 = pneg %p255
    $region26: #{down_forward.5} parent=5 // pred_check_branch
      %258 = sbr.rel (%p256) target = $region28
    $region27: #{down_forward.5} parent=5 // pred_region
      // Predicated region
      $region29: #{down_forward.5} parent=27 // pred_check
        %p259 = pneg %p48
      $region30: #{down_forward.5} parent=27 // pred_check_branch
        %261 = sbr.rel (%p259) target = $region32
      $region31: #{down_forward.5} parent=27 // pred_region
        %p262 = scmp.lt.s32.totalorder %s21, 1
        %s263 = scalar_select %p262, %s21, 1
        %p264 = scmp.lt.s32.totalorder %s22, 7
        %s265 = scalar_select %p264, %s22, 7
        %s266 = smul.addr %s263, 8
        %s267 = sadd.s32 %s265, %s266
        %s268 = smul.addr %s267, 8
        %s269 = scalar_lea.vmem %s0, %s268
      $region32: #{down_forward.5} parent=27 // pred_fallthru
        _
      // Predicated region
      $region33: #{down_forward.5} parent=27 // pred_check
        %p270 = pneg %p78
      $region34: #{down_forward.5} parent=27 // pred_check_branch
        %272 = sbr.rel (%p270) target = $region36
      $region35: #{down_forward.5} parent=27 // pred_region
        %s273 = sadd.s32 %s22, 1
        %p274 = scmp.lt.s32.totalorder %s21, 1
        %s275 = scalar_select %p274, %s21, 1
        %p276 = scmp.lt.s32.totalorder %s273, 7
        %s277 = scalar_select %p276, %s273, 7
        %s278 = smul.addr %s275, 8
        %s279 = sadd.s32 %s277, %s278
        %s280 = smul.addr %s279, 8
        %s281 = scalar_lea.vmem %s1, %s280
        %s282 = sadd.s32 %s22, 1
      $region36: #{down_forward.5} parent=27 // pred_fallthru
        _
      // Predicated region
      $region37: #{down_forward.5} parent=27 // pred_check
        %p283 = pneg %p108
      $region38: #{down_forward.5} parent=27 // pred_check_branch
        %285 = sbr.rel (%p283) target = $region40
      $region39: #{down_forward.5} parent=27 // pred_region
        %s286 = sadd.s32 %s22, 2
        %p287 = scmp.lt.s32.totalorder %s21, 1
        %s288 = scalar_select %p287, %s21, 1
        %p289 = scmp.lt.s32.totalorder %s286, 7
        %s290 = scalar_select %p289, %s286, 7
        %s291 = smul.addr %s288, 8
        %s292 = sadd.s32 %s290, %s291
        %s293 = smul.addr %s292, 8
        %s294 = scalar_lea.vmem %s2, %s293
        %s295 = sadd.s32 %s22, 2
      $region40: #{down_forward.5} parent=27 // pred_fallthru
        _
    $region28: #{down_forward.5} parent=5 // pred_fallthru
      _
    %p296 = scmp.le.s32.totalorder 1, %s14
    %p297 = scmp.lt.s32.totalorder %s14, 13
    %p298 = pnand %p296, %p297
    %p299 = pneg %p298
    // Predicated region
    $region41: #{down_forward.5} parent=5 // pred_check
      _
    $region42: #{down_forward.5} parent=5 // pred_check_branch
      %301 = sbr.rel (%p298) target = $region44
    $region43: #{down_forward.5} parent=5 // pred_region
      %s302 = ssub.s32 %s14, 1
      %p303 = scmp.lt.s32.totalorder %s23, 1
      %s304 = scalar_select %p303, %s23, 1
      %p305 = scmp.lt.s32.totalorder %s24, 7
      %s306 = scalar_select %p305, %s24, 7
      %s307 = smul.addr %s304, 8
      %s308 = sadd.s32 %s306, %s307
      %s309 = smul.addr %s308, 8
      %s310 = scalar_lea.vmem %s0, %s309
      %p311 = pneg %p54
      %p312 = pneg %p51
      %s313 = sadd.s32 %s24, 1
      %p314 = scmp.lt.s32.totalorder %s23, 1
      %s315 = scalar_select %p314, %s23, 1
      %p316 = scmp.lt.s32.totalorder %s313, 7
      %s317 = scalar_select %p316, %s313, 7
      %s318 = smul.addr %s315, 8
      %s319 = sadd.s32 %s317, %s318
      %s320 = smul.addr %s319, 8
      %s321 = scalar_lea.vmem %s1, %s320
      %p322 = pneg %p84
      %p323 = pneg %p81
      %s324 = sadd.s32 %s24, 2
      %p325 = scmp.lt.s32.totalorder %s23, 1
      %s326 = scalar_select %p325, %s23, 1
      %p327 = scmp.lt.s32.totalorder %s324, 7
      %s328 = scalar_select %p327, %s324, 7
      %s329 = smul.addr %s326, 8
      %s330 = sadd.s32 %s328, %s329
      %s331 = smul.addr %s330, 8
      %s332 = scalar_lea.vmem %s2, %s331
      %p333 = pneg %p114
      %p334 = pneg %p111
      %p335 = pneg %p135
      %p336 = pneg %p132
      %p337 = pneg %p156
      %p338 = pneg %p153
      %p339 = pneg %p177
      %p340 = pneg %p174
      %p341 = pneg %p205
      %p342 = pneg %p202
      %p343 = scmp.lt.s32.totalorder %s23, 1
      %s344 = scalar_select %p343, %s23, 1
      %p345 = scmp.lt.s32.totalorder %s24, 5
      %s346 = scalar_select %p345, %s24, 5
      %s347 = smul.addr %s344, 6
      %s348 = sadd.s32 %s346, %s347
      %s349 = smul.addr %s348, 8
      %s350 = scalar_lea.vmem %s6, %s349
      %p351 = pneg %p231
      %p352 = pneg %p228
      %p353 = scmp.lt.s32.totalorder %s23, 1
      %s354 = scalar_select %p353, %s23, 1
      %s355 = smul.addr %s354, 2
      %s356 = scalar_lea.vmem %s7, %s355
      %p357 = scmp.lt.s32.totalorder %s23, 1
      %s358 = scalar_select %p357, %s23, 1
      %p359 = scmp.lt.s32.totalorder %s24, 7
      %s360 = scalar_select %p359, %s24, 7
      %s361 = smul.addr %s358, 8
      %s362 = sadd.s32 %s360, %s361
      %s363 = smul.addr %s362, 8
      %s364 = scalar_lea.vmem %s0, %s363
      %s365 = sadd.s32 %s24, 1
      %p366 = scmp.lt.s32.totalorder %s23, 1
      %s367 = scalar_select %p366, %s23, 1
      %p368 = scmp.lt.s32.totalorder %s365, 7
      %s369 = scalar_select %p368, %s365, 7
      %s370 = smul.addr %s367, 8
      %s371 = sadd.s32 %s369, %s370
      %s372 = smul.addr %s371, 8
      %s373 = scalar_lea.vmem %s1, %s372
      %s374 = sadd.s32 %s24, 1
      %s375 = sadd.s32 %s24, 2
      %p376 = scmp.lt.s32.totalorder %s23, 1
      %s377 = scalar_select %p376, %s23, 1
      %p378 = scmp.lt.s32.totalorder %s375, 7
      %s379 = scalar_select %p378, %s375, 7
      %s380 = smul.addr %s377, 8
      %s381 = sadd.s32 %s379, %s380
      %s382 = smul.addr %s381, 8
      %s383 = scalar_lea.vmem %s2, %s382
      %s384 = sadd.s32 %s24, 2
      %p385 = scmp.lt.s32.totalorder %s23, 1
      %s386 = scalar_select %p385, %s23, 1
      %p387 = scmp.lt.s32.totalorder %s24, 5
      %s388 = scalar_select %p387, %s24, 5
      %s389 = smul.addr %s386, 6
      %s390 = sadd.s32 %s388, %s389
      %s391 = smul.addr %s390, 8
      %s392 = scalar_lea.vmem %s6, %s391
      %p393 = scmp.lt.s32.totalorder %s23, 1
      %s394 = scalar_select %p393, %s23, 1
      %s395 = smul.addr %s394, 2
      %s396 = scalar_lea.vmem %s7, %s395
      %v398 = vld [vmem:[%s364] sm:$0xff]
      %v399 = vld [vmem:[%s373] sm:$0xff]
      %v400 = vld [vmem:[%s383] sm:$0xff]
      %v401 = vpack.c.bf16 %v398, %v398
      %v402 = vld [vmem:[%s3] sm:$0xf]
      %v403 = vld [vmem:[%s3 + $0x4] sm:$0xf]
      %v404 = vld [vmem:[%s3 + $0x8] sm:$0xf]
      %v405 = vld [vmem:[%s3 + $0xc] sm:$0xf]
      %v406 = vld [vmem:[%s3 + $0x10] sm:$0xf]
      %v407 = vld [vmem:[%s3 + $0x14] sm:$0xf]
      %v408 = vld [vmem:[%s3 + $0x18] sm:$0xf]
      %v409 = vld [vmem:[%s3 + $0x1c] sm:$0xf]
      %v410 = vld [vmem:[%s3 + $0x20] sm:$0xf]
      %v411 = vld [vmem:[%s3 + $0x24] sm:$0xf]
      %v412 = vld [vmem:[%s3 + $0x28] sm:$0xf]
      %v413 = vld [vmem:[%s3 + $0x2c] sm:$0xf]
      %v414 = vld [vmem:[%s3 + $0x30] sm:$0xf]
      %v415 = vld [vmem:[%s3 + $0x34] sm:$0xf]
      %v416 = vld [vmem:[%s3 + $0x38] sm:$0xf]
      %v417 = vld [vmem:[%s3 + $0x3c] sm:$0xf]
      %s418 = scalar_lea.vmem %s3, 64
      %v419 = vld [vmem:[%s418] sm:$0xf]
      %v420 = vld [vmem:[%s418 + $0x4] sm:$0xf]
      %v421 = vld [vmem:[%s418 + $0x8] sm:$0xf]
      %v422 = vld [vmem:[%s418 + $0xc] sm:$0xf]
      %v423 = vld [vmem:[%s418 + $0x10] sm:$0xf]
      %v424 = vld [vmem:[%s418 + $0x14] sm:$0xf]
      %v425 = vld [vmem:[%s418 + $0x18] sm:$0xf]
      %v426 = vld [vmem:[%s418 + $0x1c] sm:$0xf]
      %v427 = vld [vmem:[%s418 + $0x20] sm:$0xf]
      %v428 = vld [vmem:[%s418 + $0x24] sm:$0xf]
      %v429 = vld [vmem:[%s418 + $0x28] sm:$0xf]
      %v430 = vld [vmem:[%s418 + $0x2c] sm:$0xf]
      %v431 = vld [vmem:[%s418 + $0x30] sm:$0xf]
      %v432 = vld [vmem:[%s418 + $0x34] sm:$0xf]
      %v433 = vld [vmem:[%s418 + $0x38] sm:$0xf]
      %v434 = vld [vmem:[%s418 + $0x3c] sm:$0xf]
      %v436 = vshrl.u32 %v401, 16
      %v438 = vshll.u32 %v401, 16
      %v440 = vrot.slane %v438, 1
      %v441 = vor.u32 %v436, %v440
      %v459 = vunpack.c.l.b16 %v419
      %v460 = vunpack.c.l.b16 %v420
      %v461 = vunpack.c.l.b16 %v421
      %v462 = vunpack.c.l.b16 %v422
      %v463 = vunpack.c.l.b16 %v423
      %v464 = vunpack.c.l.b16 %v424
      %v465 = vunpack.c.l.b16 %v425
      %v466 = vunpack.c.l.b16 %v426
      %v467 = vunpack.c.l.b16 %v427
      %v468 = vunpack.c.l.b16 %v428
      %v469 = vunpack.c.l.b16 %v429
      %v470 = vunpack.c.l.b16 %v430
      %v471 = vunpack.c.l.b16 %v431
      %v472 = vunpack.c.l.b16 %v432
      %v473 = vunpack.c.l.b16 %v433
      %v474 = vunpack.c.l.b16 %v434
      %v475 = vpack.c.b16 %v460, %v459
      %v476 = vpack.c.b16 %v462, %v461
      %v477 = vpack.c.b16 %v464, %v463
      %v478 = vpack.c.b16 %v466, %v465
      %v479 = vpack.c.b16 %v468, %v467
      %v480 = vpack.c.b16 %v470, %v469
      %v481 = vpack.c.b16 %v472, %v471
      %v482 = vpack.c.b16 %v474, %v473
      %491 = vmatprep.subr.bf16.mxu0 0
      %492 = vmatpush1.bf16.msra.mxu0 %v475
      %493 = vmatprep.subr.bf16.mxu0 0
      %494 = vmatpush1.bf16.msra.mxu0 %v476
      %495 = vmatprep.subr.bf16.mxu0 0
      %496 = vmatpush1.bf16.msra.mxu0 %v477
      %497 = vmatprep.subr.bf16.mxu0 0
      %498 = vmatpush1.bf16.msra.mxu0 %v478
      %499 = vmatprep.subr.bf16.mxu0 0
      %500 = vmatpush1.bf16.msra.mxu0 %v479
      %501 = vmatprep.subr.bf16.mxu0 0
      %502 = vmatpush1.bf16.msra.mxu0 %v480
      %503 = vmatprep.subr.bf16.mxu0 0
      %504 = vmatpush1.bf16.msra.mxu0 %v481
      %505 = vmatprep.subr.bf16.mxu0 0
      %506 = vmatpush1.bf16.msra.mxu0 %v482
      %507 = vmatprep.subr.bf16.mxu0 0
      %508 = vmatpush1.bf16.msra.mxu0 0
      %509 = vmatprep.subr.bf16.mxu0 0
      %510 = vmatpush1.bf16.msra.mxu0 0
      %511 = vmatprep.subr.bf16.mxu0 0
      %512 = vmatpush1.bf16.msra.mxu0 0
      %513 = vmatprep.subr.bf16.mxu0 0
      %514 = vmatpush1.bf16.msra.mxu0 0
      %515 = vmatprep.subr.bf16.mxu0 0
      %516 = vmatpush1.bf16.msra.mxu0 0
      %517 = vmatprep.subr.bf16.mxu0 0
      %518 = vmatpush1.bf16.msra.mxu0 0
      %519 = vmatprep.subr.bf16.mxu0 0
      %520 = vmatpush1.bf16.msra.mxu0 0
      %521 = vmatprep.subr.bf16.mxu0 0
      %522 = vmatpush1.bf16.msra.mxu0 0
      %523 = vmatprep.mubr.bf16.mxu0 0
      %524 = vmatmul.mubr.bf16.gmra.mrb[0].mxu0 %v441
      %v525 = vpop.f32.mrb[0].mxu0
      %v526 = vadd.f32 0.0, %v525
      %v527 = vpop.f32.mrb[0].mxu0
      %v528 = vpop.f32.mrb[0].mxu0
      %v529 = vpop.f32.mrb[0].mxu0
      %530 = vdwg.mxu0
      %v547 = vunpack.c.l.b16 %v402
      %v548 = vunpack.c.l.b16 %v403
      %v549 = vunpack.c.l.b16 %v404
      %v550 = vunpack.c.l.b16 %v405
      %v551 = vunpack.c.l.b16 %v406
      %v552 = vunpack.c.l.b16 %v407
      %v553 = vunpack.c.l.b16 %v408
      %v554 = vunpack.c.l.b16 %v409
      %v555 = vunpack.c.l.b16 %v410
      %v556 = vunpack.c.l.b16 %v411
      %v557 = vunpack.c.l.b16 %v412
      %v558 = vunpack.c.l.b16 %v413
      %v559 = vunpack.c.l.b16 %v414
      %v560 = vunpack.c.l.b16 %v415
      %v561 = vunpack.c.l.b16 %v416
      %v562 = vunpack.c.l.b16 %v417
      %v563 = vpack.c.b16 %v548, %v547
      %v564 = vpack.c.b16 %v550, %v549
      %v565 = vpack.c.b16 %v552, %v551
      %v566 = vpack.c.b16 %v554, %v553
      %v567 = vpack.c.b16 %v556, %v555
      %v568 = vpack.c.b16 %v558, %v557
      %v569 = vpack.c.b16 %v560, %v559
      %v570 = vpack.c.b16 %v562, %v561
      %579 = vmatprep.subr.bf16.mxu0 0
      %580 = vmatpush1.bf16.msra.mxu0 %v563
      %581 = vmatprep.subr.bf16.mxu0 0
      %582 = vmatpush1.bf16.msra.mxu0 %v564
      %583 = vmatprep.subr.bf16.mxu0 0
      %584 = vmatpush1.bf16.msra.mxu0 %v565
      %585 = vmatprep.subr.bf16.mxu0 0
      %586 = vmatpush1.bf16.msra.mxu0 %v566
      %587 = vmatprep.subr.bf16.mxu0 0
      %588 = vmatpush1.bf16.msra.mxu0 %v567
      %589 = vmatprep.subr.bf16.mxu0 0
      %590 = vmatpush1.bf16.msra.mxu0 %v568
      %591 = vmatprep.subr.bf16.mxu0 0
      %592 = vmatpush1.bf16.msra.mxu0 %v569
      %593 = vmatprep.subr.bf16.mxu0 0
      %594 = vmatpush1.bf16.msra.mxu0 %v570
      %595 = vmatprep.subr.bf16.mxu0 0
      %596 = vmatpush1.bf16.msra.mxu0 0
      %597 = vmatprep.subr.bf16.mxu0 0
      %598 = vmatpush1.bf16.msra.mxu0 0
      %599 = vmatprep.subr.bf16.mxu0 0
      %600 = vmatpush1.bf16.msra.mxu0 0
      %601 = vmatprep.subr.bf16.mxu0 0
      %602 = vmatpush1.bf16.msra.mxu0 0
      %603 = vmatprep.subr.bf16.mxu0 0
      %604 = vmatpush1.bf16.msra.mxu0 0
      %605 = vmatprep.subr.bf16.mxu0 0
      %606 = vmatpush1.bf16.msra.mxu0 0
      %607 = vmatprep.subr.bf16.mxu0 0
      %608 = vmatpush1.bf16.msra.mxu0 0
      %609 = vmatprep.subr.bf16.mxu0 0
      %610 = vmatpush1.bf16.msra.mxu0 0
      %611 = vmatprep.mubr.bf16.mxu0 0
      %612 = vmatmul.mubr.bf16.gmra.mrb[0].mxu0 %v401
      %v613 = vpop.f32.mrb[0].mxu0
      %v614 = vadd.f32 %v526, %v613
      %v615 = vpop.f32.mrb[0].mxu0
      %v616 = vpop.f32.mrb[0].mxu0
      %v617 = vpop.f32.mrb[0].mxu0
      %618 = vdwg.mxu0
      %s619 = scalar_lea.vmem %s3, 128
      %v620 = vld [vmem:[%s619] sm:$0xf]
      %v621 = vld [vmem:[%s619 + $0x4] sm:$0xf]
      %v622 = vld [vmem:[%s619 + $0x8] sm:$0xf]
      %v623 = vld [vmem:[%s619 + $0xc] sm:$0xf]
      %v624 = vld [vmem:[%s619 + $0x10] sm:$0xf]
      %v625 = vld [vmem:[%s619 + $0x14] sm:$0xf]
      %v626 = vld [vmem:[%s619 + $0x18] sm:$0xf]
      %v627 = vld [vmem:[%s619 + $0x1c] sm:$0xf]
      %v628 = vld [vmem:[%s619 + $0x20] sm:$0xf]
      %v629 = vld [vmem:[%s619 + $0x24] sm:$0xf]
      %v630 = vld [vmem:[%s619 + $0x28] sm:$0xf]
      %v631 = vld [vmem:[%s619 + $0x2c] sm:$0xf]
      %v632 = vld [vmem:[%s619 + $0x30] sm:$0xf]
      %v633 = vld [vmem:[%s619 + $0x34] sm:$0xf]
      %v634 = vld [vmem:[%s619 + $0x38] sm:$0xf]
      %v635 = vld [vmem:[%s619 + $0x3c] sm:$0xf]
      %v637 = vrot.slane %v401, 1
      %v655 = vunpack.c.l.b16 %v620
      %v656 = vunpack.c.l.b16 %v621
      %v657 = vunpack.c.l.b16 %v622
      %v658 = vunpack.c.l.b16 %v623
      %v659 = vunpack.c.l.b16 %v624
      %v660 = vunpack.c.l.b16 %v625
      %v661 = vunpack.c.l.b16 %v626
      %v662 = vunpack.c.l.b16 %v627
      %v663 = vunpack.c.l.b16 %v628
      %v664 = vunpack.c.l.b16 %v629
      %v665 = vunpack.c.l.b16 %v630
      %v666 = vunpack.c.l.b16 %v631
      %v667 = vunpack.c.l.b16 %v632
      %v668 = vunpack.c.l.b16 %v633
      %v669 = vunpack.c.l.b16 %v634
      %v670 = vunpack.c.l.b16 %v635
      %v671 = vpack.c.b16 %v656, %v655
      %v672 = vpack.c.b16 %v658, %v657
      %v673 = vpack.c.b16 %v660, %v659
      %v674 = vpack.c.b16 %v662, %v661
      %v675 = vpack.c.b16 %v664, %v663
      %v676 = vpack.c.b16 %v666, %v665
      %v677 = vpack.c.b16 %v668, %v667
      %v678 = vpack.c.b16 %v670, %v669
      %687 = vmatprep.subr.bf16.mxu0 0
      %688 = vmatpush1.bf16.msra.mxu0 %v671
      %689 = vmatprep.subr.bf16.mxu0 0
      %690 = vmatpush1.bf16.msra.mxu0 %v672
      %691 = vmatprep.subr.bf16.mxu0 0
      %692 = vmatpush1.bf16.msra.mxu0 %v673
      %693 = vmatprep.subr.bf16.mxu0 0
      %694 = vmatpush1.bf16.msra.mxu0 %v674
      %695 = vmatprep.subr.bf16.mxu0 0
      %696 = vmatpush1.bf16.msra.mxu0 %v675
      %697 = vmatprep.subr.bf16.mxu0 0
      %698 = vmatpush1.bf16.msra.mxu0 %v676
      %699 = vmatprep.subr.bf16.mxu0 0
      %700 = vmatpush1.bf16.msra.mxu0 %v677
      %701 = vmatprep.subr.bf16.mxu0 0
      %702 = vmatpush1.bf16.msra.mxu0 %v678
      %703 = vmatprep.subr.bf16.mxu0 0
      %704 = vmatpush1.bf16.msra.mxu0 0
      %705 = vmatprep.subr.bf16.mxu0 0
      %706 = vmatpush1.bf16.msra.mxu0 0
      %707 = vmatprep.subr.bf16.mxu0 0
      %708 = vmatpush1.bf16.msra.mxu0 0
      %709 = vmatprep.subr.bf16.mxu0 0
      %710 = vmatpush1.bf16.msra.mxu0 0
      %711 = vmatprep.subr.bf16.mxu0 0
      %712 = vmatpush1.bf16.msra.mxu0 0
      %713 = vmatprep.subr.bf16.mxu0 0
      %714 = vmatpush1.bf16.msra.mxu0 0
      %715 = vmatprep.subr.bf16.mxu0 0
      %716 = vmatpush1.bf16.msra.mxu0 0
      %717 = vmatprep.subr.bf16.mxu0 0
      %718 = vmatpush1.bf16.msra.mxu0 0
      %719 = vmatprep.mubr.bf16.mxu0 0
      %720 = vmatmul.mubr.bf16.gmra.mrb[0].mxu0 %v637
      %v721 = vpop.f32.mrb[0].mxu0
      %v722 = vadd.f32 0.0, %v721
      %v723 = vpop.f32.mrb[0].mxu0
      %v724 = vpop.f32.mrb[0].mxu0
      %v725 = vpop.f32.mrb[0].mxu0
      %726 = vdwg.mxu0
      %v727 = vadd.f32 %v614, %v722
      %v728 = vpack.c.bf16 %v399, %v399
      %s729 = scalar_lea.vmem %s3, 192
      %v730 = vld [vmem:[%s729] sm:$0xf]
      %v731 = vld [vmem:[%s729 + $0x4] sm:$0xf]
      %v732 = vld [vmem:[%s729 + $0x8] sm:$0xf]
      %v733 = vld [vmem:[%s729 + $0xc] sm:$0xf]
      %v734 = vld [vmem:[%s729 + $0x10] sm:$0xf]
      %v735 = vld [vmem:[%s729 + $0x14] sm:$0xf]
      %v736 = vld [vmem:[%s729 + $0x18] sm:$0xf]
      %v737 = vld [vmem:[%s729 + $0x1c] sm:$0xf]
      %v738 = vld [vmem:[%s729 + $0x20] sm:$0xf]
      %v739 = vld [vmem:[%s729 + $0x24] sm:$0xf]
      %v740 = vld [vmem:[%s729 + $0x28] sm:$0xf]
      %v741 = vld [vmem:[%s729 + $0x2c] sm:$0xf]
      %v742 = vld [vmem:[%s729 + $0x30] sm:$0xf]
      %v743 = vld [vmem:[%s729 + $0x34] sm:$0xf]
      %v744 = vld [vmem:[%s729 + $0x38] sm:$0xf]
      %v745 = vld [vmem:[%s729 + $0x3c] sm:$0xf]
      %v762 = vunpack.c.l.b16 %v730
      %v763 = vunpack.c.l.b16 %v731
      %v764 = vunpack.c.l.b16 %v732
      %v765 = vunpack.c.l.b16 %v733
      %v766 = vunpack.c.l.b16 %v734
      %v767 = vunpack.c.l.b16 %v735
      %v768 = vunpack.c.l.b16 %v736
      %v769 = vunpack.c.l.b16 %v737
      %v770 = vunpack.c.l.b16 %v738
      %v771 = vunpack.c.l.b16 %v739
      %v772 = vunpack.c.l.b16 %v740
      %v773 = vunpack.c.l.b16 %v741
      %v774 = vunpack.c.l.b16 %v742
      %v775 = vunpack.c.l.b16 %v743
      %v776 = vunpack.c.l.b16 %v744
      %v777 = vunpack.c.l.b16 %v745
      %v778 = vpack.c.b16 %v763, %v762
      %v779 = vpack.c.b16 %v765, %v764
      %v780 = vpack.c.b16 %v767, %v766
      %v781 = vpack.c.b16 %v769, %v768
      %v782 = vpack.c.b16 %v771, %v770
      %v783 = vpack.c.b16 %v773, %v772
      %v784 = vpack.c.b16 %v775, %v774
      %v785 = vpack.c.b16 %v777, %v776
      %794 = vmatprep.subr.bf16.mxu0 0
      %795 = vmatpush1.bf16.msra.mxu0 %v778
      %796 = vmatprep.subr.bf16.mxu0 0
      %797 = vmatpush1.bf16.msra.mxu0 %v779
      %798 = vmatprep.subr.bf16.mxu0 0
      %799 = vmatpush1.bf16.msra.mxu0 %v780
      %800 = vmatprep.subr.bf16.mxu0 0
      %801 = vmatpush1.bf16.msra.mxu0 %v781
      %802 = vmatprep.subr.bf16.mxu0 0
      %803 = vmatpush1.bf16.msra.mxu0 %v782
      %804 = vmatprep.subr.bf16.mxu0 0
      %805 = vmatpush1.bf16.msra.mxu0 %v783
      %806 = vmatprep.subr.bf16.mxu0 0
      %807 = vmatpush1.bf16.msra.mxu0 %v784
      %808 = vmatprep.subr.bf16.mxu0 0
      %809 = vmatpush1.bf16.msra.mxu0 %v785
      %810 = vmatprep.subr.bf16.mxu0 0
      %811 = vmatpush1.bf16.msra.mxu0 0
      %812 = vmatprep.subr.bf16.mxu0 0
      %813 = vmatpush1.bf16.msra.mxu0 0
      %814 = vmatprep.subr.bf16.mxu0 0
      %815 = vmatpush1.bf16.msra.mxu0 0
      %816 = vmatprep.subr.bf16.mxu0 0
      %817 = vmatpush1.bf16.msra.mxu0 0
      %818 = vmatprep.subr.bf16.mxu0 0
      %819 = vmatpush1.bf16.msra.mxu0 0
      %820 = vmatprep.subr.bf16.mxu0 0
      %821 = vmatpush1.bf16.msra.mxu0 0
      %822 = vmatprep.subr.bf16.mxu0 0
      %823 = vmatpush1.bf16.msra.mxu0 0
      %824 = vmatprep.subr.bf16.mxu0 0
      %825 = vmatpush1.bf16.msra.mxu0 0
      %826 = vmatprep.mubr.bf16.mxu0 0
      %827 = vmatmul.mubr.bf16.gmra.mrb[0].mxu0 %v728
      %v828 = vpop.f32.mrb[0].mxu0
      %v829 = vadd.f32 0.0, %v828
      %v830 = vpop.f32.mrb[0].mxu0
      %v831 = vpop.f32.mrb[0].mxu0
      %v832 = vpop.f32.mrb[0].mxu0
      %833 = vdwg.mxu0
      %v834 = vadd.f32 %v727, %v829
      %s835 = scalar_lea.vmem %s3, 256
      %v836 = vld [vmem:[%s835] sm:$0xf]
      %v837 = vld [vmem:[%s835 + $0x4] sm:$0xf]
      %v838 = vld [vmem:[%s835 + $0x8] sm:$0xf]
      %v839 = vld [vmem:[%s835 + $0xc] sm:$0xf]
      %v840 = vld [vmem:[%s835 + $0x10] sm:$0xf]
      %v841 = vld [vmem:[%s835 + $0x14] sm:$0xf]
      %v842 = vld [vmem:[%s835 + $0x18] sm:$0xf]
      %v843 = vld [vmem:[%s835 + $0x1c] sm:$0xf]
      %v844 = vld [vmem:[%s835 + $0x20] sm:$0xf]
      %v845 = vld [vmem:[%s835 + $0x24] sm:$0xf]
      %v846 = vld [vmem:[%s835 + $0x28] sm:$0xf]
      %v847 = vld [vmem:[%s835 + $0x2c] sm:$0xf]
      %v848 = vld [vmem:[%s835 + $0x30] sm:$0xf]
      %v849 = vld [vmem:[%s835 + $0x34] sm:$0xf]
      %v850 = vld [vmem:[%s835 + $0x38] sm:$0xf]
      %v851 = vld [vmem:[%s835 + $0x3c] sm:$0xf]
      %v853 = vshrl.u32 %v728, 16
      %v855 = vshll.u32 %v728, 16
      %v857 = vrot.slane %v855, 1
      %v858 = vor.u32 %v853, %v857
      %v876 = vunpack.c.l.b16 %v836
      %v877 = vunpack.c.l.b16 %v837
      %v878 = vunpack.c.l.b16 %v838
      %v879 = vunpack.c.l.b16 %v839
      %v880 = vunpack.c.l.b16 %v840
      %v881 = vunpack.c.l.b16 %v841
      %v882 = vunpack.c.l.b16 %v842
      %v883 = vunpack.c.l.b16 %v843
      %v884 = vunpack.c.l.b16 %v844
      %v885 = vunpack.c.l.b16 %v845
      %v886 = vunpack.c.l.b16 %v846
      %v887 = vunpack.c.l.b16 %v847
      %v888 = vunpack.c.l.b16 %v848
      %v889 = vunpack.c.l.b16 %v849
      %v890 = vunpack.c.l.b16 %v850
      %v891 = vunpack.c.l.b16 %v851
      %v892 = vpack.c.b16 %v877, %v876
      %v893 = vpack.c.b16 %v879, %v878
      %v894 = vpack.c.b16 %v881, %v880
      %v895 = vpack.c.b16 %v883, %v882
      %v896 = vpack.c.b16 %v885, %v884
      %v897 = vpack.c.b16 %v887, %v886
      %v898 = vpack.c.b16 %v889, %v888
      %v899 = vpack.c.b16 %v891, %v890
      %908 = vmatprep.subr.bf16.mxu0 0
      %909 = vmatpush1.bf16.msra.mxu0 %v892
      %910 = vmatprep.subr.bf16.mxu0 0
      %911 = vmatpush1.bf16.msra.mxu0 %v893
      %912 = vmatprep.subr.bf16.mxu0 0
      %913 = vmatpush1.bf16.msra.mxu0 %v894
      %914 = vmatprep.subr.bf16.mxu0 0
      %915 = vmatpush1.bf16.msra.mxu0 %v895
      %916 = vmatprep.subr.bf16.mxu0 0
      %917 = vmatpush1.bf16.msra.mxu0 %v896
      %918 = vmatprep.subr.bf16.mxu0 0
      %919 = vmatpush1.bf16.msra.mxu0 %v897
      %920 = vmatprep.subr.bf16.mxu0 0
      %921 = vmatpush1.bf16.msra.mxu0 %v898
      %922 = vmatprep.subr.bf16.mxu0 0
      %923 = vmatpush1.bf16.msra.mxu0 %v899
      %924 = vmatprep.subr.bf16.mxu0 0
      %925 = vmatpush1.bf16.msra.mxu0 0
      %926 = vmatprep.subr.bf16.mxu0 0
      %927 = vmatpush1.bf16.msra.mxu0 0
      %928 = vmatprep.subr.bf16.mxu0 0
      %929 = vmatpush1.bf16.msra.mxu0 0
      %930 = vmatprep.subr.bf16.mxu0 0
      %931 = vmatpush1.bf16.msra.mxu0 0
      %932 = vmatprep.subr.bf16.mxu0 0
      %933 = vmatpush1.bf16.msra.mxu0 0
      %934 = vmatprep.subr.bf16.mxu0 0
      %935 = vmatpush1.bf16.msra.mxu0 0
      %936 = vmatprep.subr.bf16.mxu0 0
      %937 = vmatpush1.bf16.msra.mxu0 0
      %938 = vmatprep.subr.bf16.mxu0 0
      %939 = vmatpush1.bf16.msra.mxu0 0
      %940 = vmatprep.mubr.bf16.mxu0 0
      %941 = vmatmul.mubr.bf16.gmra.mrb[0].mxu0 %v858
      %v942 = vpop.f32.mrb[0].mxu0
      %v943 = vadd.f32 0.0, %v942
      %v944 = vpop.f32.mrb[0].mxu0
      %v945 = vpop.f32.mrb[0].mxu0
      %v946 = vpop.f32.mrb[0].mxu0
      %947 = vdwg.mxu0
      %v948 = vadd.f32 %v834, %v943
      %s949 = scalar_lea.vmem %s3, 320
      %v950 = vld [vmem:[%s949] sm:$0xf]
      %v951 = vld [vmem:[%s949 + $0x4] sm:$0xf]
      %v952 = vld [vmem:[%s949 + $0x8] sm:$0xf]
      %v953 = vld [vmem:[%s949 + $0xc] sm:$0xf]
      %v954 = vld [vmem:[%s949 + $0x10] sm:$0xf]
      %v955 = vld [vmem:[%s949 + $0x14] sm:$0xf]
      %v956 = vld [vmem:[%s949 + $0x18] sm:$0xf]
      %v957 = vld [vmem:[%s949 + $0x1c] sm:$0xf]
      %v958 = vld [vmem:[%s949 + $0x20] sm:$0xf]
      %v959 = vld [vmem:[%s949 + $0x24] sm:$0xf]
      %v960 = vld [vmem:[%s949 + $0x28] sm:$0xf]
      %v961 = vld [vmem:[%s949 + $0x2c] sm:$0xf]
      %v962 = vld [vmem:[%s949 + $0x30] sm:$0xf]
      %v963 = vld [vmem:[%s949 + $0x34] sm:$0xf]
      %v964 = vld [vmem:[%s949 + $0x38] sm:$0xf]
      %v965 = vld [vmem:[%s949 + $0x3c] sm:$0xf]
      %v967 = vrot.slane %v728, 1
      %v985 = vunpack.c.l.b16 %v950
      %v986 = vunpack.c.l.b16 %v951
      %v987 = vunpack.c.l.b16 %v952
      %v988 = vunpack.c.l.b16 %v953
      %v989 = vunpack.c.l.b16 %v954
      %v990 = vunpack.c.l.b16 %v955
      %v991 = vunpack.c.l.b16 %v956
      %v992 = vunpack.c.l.b16 %v957
      %v993 = vunpack.c.l.b16 %v958
      %v994 = vunpack.c.l.b16 %v959
      %v995 = vunpack.c.l.b16 %v960
      %v996 = vunpack.c.l.b16 %v961
      %v997 = vunpack.c.l.b16 %v962
      %v998 = vunpack.c.l.b16 %v963
      %v999 = vunpack.c.l.b16 %v964
      %v1000 = vunpack.c.l.b16 %v965
      %v1001 = vpack.c.b16 %v986, %v985
      %v1002 = vpack.c.b16 %v988, %v987
      %v1003 = vpack.c.b16 %v990, %v989
      %v1004 = vpack.c.b16 %v992, %v991
      %v1005 = vpack.c.b16 %v994, %v993
      %v1006 = vpack.c.b16 %v996, %v995
      %v1007 = vpack.c.b16 %v998, %v997
      %v1008 = vpack.c.b16 %v1000, %v999
      %1017 = vmatprep.subr.bf16.mxu0 0
      %1018 = vmatpush1.bf16.msra.mxu0 %v1001
      %1019 = vmatprep.subr.bf16.mxu0 0
      %1020 = vmatpush1.bf16.msra.mxu0 %v1002
      %1021 = vmatprep.subr.bf16.mxu0 0
      %1022 = vmatpush1.bf16.msra.mxu0 %v1003
      %1023 = vmatprep.subr.bf16.mxu0 0
      %1024 = vmatpush1.bf16.msra.mxu0 %v1004
      %1025 = vmatprep.subr.bf16.mxu0 0
      %1026 = vmatpush1.bf16.msra.mxu0 %v1005
      %1027 = vmatprep.subr.bf16.mxu0 0
      %1028 = vmatpush1.bf16.msra.mxu0 %v1006
      %1029 = vmatprep.subr.bf16.mxu0 0
      %1030 = vmatpush1.bf16.msra.mxu0 %v1007
      %1031 = vmatprep.subr.bf16.mxu0 0
      %1032 = vmatpush1.bf16.msra.mxu0 %v1008
      %1033 = vmatprep.subr.bf16.mxu0 0
      %1034 = vmatpush1.bf16.msra.mxu0 0
      %1035 = vmatprep.subr.bf16.mxu0 0
      %1036 = vmatpush1.bf16.msra.mxu0 0
      %1037 = vmatprep.subr.bf16.mxu0 0
      %1038 = vmatpush1.bf16.msra.mxu0 0
      %1039 = vmatprep.subr.bf16.mxu0 0
      %1040 = vmatpush1.bf16.msra.mxu0 0
      %1041 = vmatprep.subr.bf16.mxu0 0
      %1042 = vmatpush1.bf16.msra.mxu0 0
      %1043 = vmatprep.subr.bf16.mxu0 0
      %1044 = vmatpush1.bf16.msra.mxu0 0
      %1045 = vmatprep.subr.bf16.mxu0 0
      %1046 = vmatpush1.bf16.msra.mxu0 0
      %1047 = vmatprep.subr.bf16.mxu0 0
      %1048 = vmatpush1.bf16.msra.mxu0 0
      %1049 = vmatprep.mubr.bf16.mxu0 0
      %1050 = vmatmul.mubr.bf16.gmra.mrb[0].mxu0 %v967
      %v1051 = vpop.f32.mrb[0].mxu0
      %v1052 = vadd.f32 0.0, %v1051
      %v1053 = vpop.f32.mrb[0].mxu0
      %v1054 = vpop.f32.mrb[0].mxu0
      %v1055 = vpop.f32.mrb[0].mxu0
      %1056 = vdwg.mxu0
      %v1057 = vadd.f32 %v948, %v1052
      %v1058 = vpack.c.bf16 %v400, %v400
      %s1059 = scalar_lea.vmem %s3, 384
      %v1060 = vld [vmem:[%s1059] sm:$0xf]
      %v1061 = vld [vmem:[%s1059 + $0x4] sm:$0xf]
      %v1062 = vld [vmem:[%s1059 + $0x8] sm:$0xf]
      %v1063 = vld [vmem:[%s1059 + $0xc] sm:$0xf]
      %v1064 = vld [vmem:[%s1059 + $0x10] sm:$0xf]
      %v1065 = vld [vmem:[%s1059 + $0x14] sm:$0xf]
      %v1066 = vld [vmem:[%s1059 + $0x18] sm:$0xf]
      %v1067 = vld [vmem:[%s1059 + $0x1c] sm:$0xf]
      %v1068 = vld [vmem:[%s1059 + $0x20] sm:$0xf]
      %v1069 = vld [vmem:[%s1059 + $0x24] sm:$0xf]
      %v1070 = vld [vmem:[%s1059 + $0x28] sm:$0xf]
      %v1071 = vld [vmem:[%s1059 + $0x2c] sm:$0xf]
      %v1072 = vld [vmem:[%s1059 + $0x30] sm:$0xf]
      %v1073 = vld [vmem:[%s1059 + $0x34] sm:$0xf]
      %v1074 = vld [vmem:[%s1059 + $0x38] sm:$0xf]
      %v1075 = vld [vmem:[%s1059 + $0x3c] sm:$0xf]
      %v1092 = vunpack.c.l.b16 %v1060
      %v1093 = vunpack.c.l.b16 %v1061
      %v1094 = vunpack.c.l.b16 %v1062
      %v1095 = vunpack.c.l.b16 %v1063
      %v1096 = vunpack.c.l.b16 %v1064
      %v1097 = vunpack.c.l.b16 %v1065
      %v1098 = vunpack.c.l.b16 %v1066
      %v1099 = vunpack.c.l.b16 %v1067
      %v1100 = vunpack.c.l.b16 %v1068
      %v1101 = vunpack.c.l.b16 %v1069
      %v1102 = vunpack.c.l.b16 %v1070
      %v1103 = vunpack.c.l.b16 %v1071
      %v1104 = vunpack.c.l.b16 %v1072
      %v1105 = vunpack.c.l.b16 %v1073
      %v1106 = vunpack.c.l.b16 %v1074
      %v1107 = vunpack.c.l.b16 %v1075
      %v1108 = vpack.c.b16 %v1093, %v1092
      %v1109 = vpack.c.b16 %v1095, %v1094
      %v1110 = vpack.c.b16 %v1097, %v1096
      %v1111 = vpack.c.b16 %v1099, %v1098
      %v1112 = vpack.c.b16 %v1101, %v1100
      %v1113 = vpack.c.b16 %v1103, %v1102
      %v1114 = vpack.c.b16 %v1105, %v1104
      %v1115 = vpack.c.b16 %v1107, %v1106
      %1124 = vmatprep.subr.bf16.mxu0 0
      %1125 = vmatpush1.bf16.msra.mxu0 %v1108
      %1126 = vmatprep.subr.bf16.mxu0 0
      %1127 = vmatpush1.bf16.msra.mxu0 %v1109
      %1128 = vmatprep.subr.bf16.mxu0 0
      %1129 = vmatpush1.bf16.msra.mxu0 %v1110
      %1130 = vmatprep.subr.bf16.mxu0 0
      %1131 = vmatpush1.bf16.msra.mxu0 %v1111
      %1132 = vmatprep.subr.bf16.mxu0 0
      %1133 = vmatpush1.bf16.msra.mxu0 %v1112
      %1134 = vmatprep.subr.bf16.mxu0 0
      %1135 = vmatpush1.bf16.msra.mxu0 %v1113
      %1136 = vmatprep.subr.bf16.mxu0 0
      %1137 = vmatpush1.bf16.msra.mxu0 %v1114
      %1138 = vmatprep.subr.bf16.mxu0 0
      %1139 = vmatpush1.bf16.msra.mxu0 %v1115
      %1140 = vmatprep.subr.bf16.mxu0 0
      %1141 = vmatpush1.bf16.msra.mxu0 0
      %1142 = vmatprep.subr.bf16.mxu0 0
      %1143 = vmatpush1.bf16.msra.mxu0 0
      %1144 = vmatprep.subr.bf16.mxu0 0
      %1145 = vmatpush1.bf16.msra.mxu0 0
      %1146 = vmatprep.subr.bf16.mxu0 0
      %1147 = vmatpush1.bf16.msra.mxu0 0
      %1148 = vmatprep.subr.bf16.mxu0 0
      %1149 = vmatpush1.bf16.msra.mxu0 0
      %1150 = vmatprep.subr.bf16.mxu0 0
      %1151 = vmatpush1.bf16.msra.mxu0 0
      %1152 = vmatprep.subr.bf16.mxu0 0
      %1153 = vmatpush1.bf16.msra.mxu0 0
      %1154 = vmatprep.subr.bf16.mxu0 0
      %1155 = vmatpush1.bf16.msra.mxu0 0
      %1156 = vmatprep.mubr.bf16.mxu0 0
      %1157 = vmatmul.mubr.bf16.gmra.mrb[0].mxu0 %v1058
      %v1158 = vpop.f32.mrb[0].mxu0
      %v1159 = vadd.f32 0.0, %v1158
      %v1160 = vpop.f32.mrb[0].mxu0
      %v1161 = vpop.f32.mrb[0].mxu0
      %v1162 = vpop.f32.mrb[0].mxu0
      %1163 = vdwg.mxu0
      %v1164 = vadd.f32 %v1057, %v1159
      %s1165 = scalar_lea.vmem %s3, 448
      %v1166 = vld [vmem:[%s1165] sm:$0xf]
      %v1167 = vld [vmem:[%s1165 + $0x4] sm:$0xf]
      %v1168 = vld [vmem:[%s1165 + $0x8] sm:$0xf]
      %v1169 = vld [vmem:[%s1165 + $0xc] sm:$0xf]
      %v1170 = vld [vmem:[%s1165 + $0x10] sm:$0xf]
      %v1171 = vld [vmem:[%s1165 + $0x14] sm:$0xf]
      %v1172 = vld [vmem:[%s1165 + $0x18] sm:$0xf]
      %v1173 = vld [vmem:[%s1165 + $0x1c] sm:$0xf]
      %v1174 = vld [vmem:[%s1165 + $0x20] sm:$0xf]
      %v1175 = vld [vmem:[%s1165 + $0x24] sm:$0xf]
      %v1176 = vld [vmem:[%s1165 + $0x28] sm:$0xf]
      %v1177 = vld [vmem:[%s1165 + $0x2c] sm:$0xf]
      %v1178 = vld [vmem:[%s1165 + $0x30] sm:$0xf]
      %v1179 = vld [vmem:[%s1165 + $0x34] sm:$0xf]
      %v1180 = vld [vmem:[%s1165 + $0x38] sm:$0xf]
      %v1181 = vld [vmem:[%s1165 + $0x3c] sm:$0xf]
      %v1183 = vshrl.u32 %v1058, 16
      %v1185 = vshll.u32 %v1058, 16
      %v1187 = vrot.slane %v1185, 1
      %v1188 = vor.u32 %v1183, %v1187
      %v1206 = vunpack.c.l.b16 %v1166
      %v1207 = vunpack.c.l.b16 %v1167
      %v1208 = vunpack.c.l.b16 %v1168
      %v1209 = vunpack.c.l.b16 %v1169
      %v1210 = vunpack.c.l.b16 %v1170
      %v1211 = vunpack.c.l.b16 %v1171
      %v1212 = vunpack.c.l.b16 %v1172
      %v1213 = vunpack.c.l.b16 %v1173
      %v1214 = vunpack.c.l.b16 %v1174
      %v1215 = vunpack.c.l.b16 %v1175
      %v1216 = vunpack.c.l.b16 %v1176
      %v1217 = vunpack.c.l.b16 %v1177
      %v1218 = vunpack.c.l.b16 %v1178
      %v1219 = vunpack.c.l.b16 %v1179
      %v1220 = vunpack.c.l.b16 %v1180
      %v1221 = vunpack.c.l.b16 %v1181
      %v1222 = vpack.c.b16 %v1207, %v1206
      %v1223 = vpack.c.b16 %v1209, %v1208
      %v1224 = vpack.c.b16 %v1211, %v1210
      %v1225 = vpack.c.b16 %v1213, %v1212
      %v1226 = vpack.c.b16 %v1215, %v1214
      %v1227 = vpack.c.b16 %v1217, %v1216
      %v1228 = vpack.c.b16 %v1219, %v1218
      %v1229 = vpack.c.b16 %v1221, %v1220
      %1238 = vmatprep.subr.bf16.mxu0 0
      %1239 = vmatpush1.bf16.msra.mxu0 %v1222
      %1240 = vmatprep.subr.bf16.mxu0 0
      %1241 = vmatpush1.bf16.msra.mxu0 %v1223
      %1242 = vmatprep.subr.bf16.mxu0 0
      %1243 = vmatpush1.bf16.msra.mxu0 %v1224
      %1244 = vmatprep.subr.bf16.mxu0 0
      %1245 = vmatpush1.bf16.msra.mxu0 %v1225
      %1246 = vmatprep.subr.bf16.mxu0 0
      %1247 = vmatpush1.bf16.msra.mxu0 %v1226
      %1248 = vmatprep.subr.bf16.mxu0 0
      %1249 = vmatpush1.bf16.msra.mxu0 %v1227
      %1250 = vmatprep.subr.bf16.mxu0 0
      %1251 = vmatpush1.bf16.msra.mxu0 %v1228
      %1252 = vmatprep.subr.bf16.mxu0 0
      %1253 = vmatpush1.bf16.msra.mxu0 %v1229
      %1254 = vmatprep.subr.bf16.mxu0 0
      %1255 = vmatpush1.bf16.msra.mxu0 0
      %1256 = vmatprep.subr.bf16.mxu0 0
      %1257 = vmatpush1.bf16.msra.mxu0 0
      %1258 = vmatprep.subr.bf16.mxu0 0
      %1259 = vmatpush1.bf16.msra.mxu0 0
      %1260 = vmatprep.subr.bf16.mxu0 0
      %1261 = vmatpush1.bf16.msra.mxu0 0
      %1262 = vmatprep.subr.bf16.mxu0 0
      %1263 = vmatpush1.bf16.msra.mxu0 0
      %1264 = vmatprep.subr.bf16.mxu0 0
      %1265 = vmatpush1.bf16.msra.mxu0 0
      %1266 = vmatprep.subr.bf16.mxu0 0
      %1267 = vmatpush1.bf16.msra.mxu0 0
      %1268 = vmatprep.subr.bf16.mxu0 0
      %1269 = vmatpush1.bf16.msra.mxu0 0
      %1270 = vmatprep.mubr.bf16.mxu0 0
      %1271 = vmatmul.mubr.bf16.gmra.mrb[0].mxu0 %v1188
      %v1272 = vpop.f32.mrb[0].mxu0
      %v1273 = vadd.f32 0.0, %v1272
      %v1274 = vpop.f32.mrb[0].mxu0
      %v1275 = vpop.f32.mrb[0].mxu0
      %v1276 = vpop.f32.mrb[0].mxu0
      %1277 = vdwg.mxu0
      %v1278 = vadd.f32 %v1164, %v1273
      %s1279 = scalar_lea.vmem %s3, 512
      %v1280 = vld [vmem:[%s1279] sm:$0xf]
      %v1281 = vld [vmem:[%s1279 + $0x4] sm:$0xf]
      %v1282 = vld [vmem:[%s1279 + $0x8] sm:$0xf]
      %v1283 = vld [vmem:[%s1279 + $0xc] sm:$0xf]
      %v1284 = vld [vmem:[%s1279 + $0x10] sm:$0xf]
      %v1285 = vld [vmem:[%s1279 + $0x14] sm:$0xf]
      %v1286 = vld [vmem:[%s1279 + $0x18] sm:$0xf]
      %v1287 = vld [vmem:[%s1279 + $0x1c] sm:$0xf]
      %v1288 = vld [vmem:[%s1279 + $0x20] sm:$0xf]
      %v1289 = vld [vmem:[%s1279 + $0x24] sm:$0xf]
      %v1290 = vld [vmem:[%s1279 + $0x28] sm:$0xf]
      %v1291 = vld [vmem:[%s1279 + $0x2c] sm:$0xf]
      %v1292 = vld [vmem:[%s1279 + $0x30] sm:$0xf]
      %v1293 = vld [vmem:[%s1279 + $0x34] sm:$0xf]
      %v1294 = vld [vmem:[%s1279 + $0x38] sm:$0xf]
      %v1295 = vld [vmem:[%s1279 + $0x3c] sm:$0xf]
      %v1297 = vrot.slane %v1058, 1
      %v1315 = vunpack.c.l.b16 %v1280
      %v1316 = vunpack.c.l.b16 %v1281
      %v1317 = vunpack.c.l.b16 %v1282
      %v1318 = vunpack.c.l.b16 %v1283
      %v1319 = vunpack.c.l.b16 %v1284
      %v1320 = vunpack.c.l.b16 %v1285
      %v1321 = vunpack.c.l.b16 %v1286
      %v1322 = vunpack.c.l.b16 %v1287
      %v1323 = vunpack.c.l.b16 %v1288
      %v1324 = vunpack.c.l.b16 %v1289
      %v1325 = vunpack.c.l.b16 %v1290
      %v1326 = vunpack.c.l.b16 %v1291
      %v1327 = vunpack.c.l.b16 %v1292
      %v1328 = vunpack.c.l.b16 %v1293
      %v1329 = vunpack.c.l.b16 %v1294
      %v1330 = vunpack.c.l.b16 %v1295
      %v1331 = vpack.c.b16 %v1316, %v1315
      %v1332 = vpack.c.b16 %v1318, %v1317
      %v1333 = vpack.c.b16 %v1320, %v1319
      %v1334 = vpack.c.b16 %v1322, %v1321
      %v1335 = vpack.c.b16 %v1324, %v1323
      %v1336 = vpack.c.b16 %v1326, %v1325
      %v1337 = vpack.c.b16 %v1328, %v1327
      %v1338 = vpack.c.b16 %v1330, %v1329
      %1347 = vmatprep.subr.bf16.mxu0 0
      %1348 = vmatpush1.bf16.msra.mxu0 %v1331
      %1349 = vmatprep.subr.bf16.mxu0 0
      %1350 = vmatpush1.bf16.msra.mxu0 %v1332
      %1351 = vmatprep.subr.bf16.mxu0 0
      %1352 = vmatpush1.bf16.msra.mxu0 %v1333
      %1353 = vmatprep.subr.bf16.mxu0 0
      %1354 = vmatpush1.bf16.msra.mxu0 %v1334
      %1355 = vmatprep.subr.bf16.mxu0 0
      %1356 = vmatpush1.bf16.msra.mxu0 %v1335
      %1357 = vmatprep.subr.bf16.mxu0 0
      %1358 = vmatpush1.bf16.msra.mxu0 %v1336
      %1359 = vmatprep.subr.bf16.mxu0 0
      %1360 = vmatpush1.bf16.msra.mxu0 %v1337
      %1361 = vmatprep.subr.bf16.mxu0 0
      %1362 = vmatpush1.bf16.msra.mxu0 %v1338
      %1363 = vmatprep.subr.bf16.mxu0 0
      %1364 = vmatpush1.bf16.msra.mxu0 0
      %1365 = vmatprep.subr.bf16.mxu0 0
      %1366 = vmatpush1.bf16.msra.mxu0 0
      %1367 = vmatprep.subr.bf16.mxu0 0
      %1368 = vmatpush1.bf16.msra.mxu0 0
      %1369 = vmatprep.subr.bf16.mxu0 0
      %1370 = vmatpush1.bf16.msra.mxu0 0
      %1371 = vmatprep.subr.bf16.mxu0 0
      %1372 = vmatpush1.bf16.msra.mxu0 0
      %1373 = vmatprep.subr.bf16.mxu0 0
      %1374 = vmatpush1.bf16.msra.mxu0 0
      %1375 = vmatprep.subr.bf16.mxu0 0
      %1376 = vmatpush1.bf16.msra.mxu0 0
      %1377 = vmatprep.subr.bf16.mxu0 0
      %1378 = vmatpush1.bf16.msra.mxu0 0
      %1379 = vmatprep.mubr.bf16.mxu0 0
      %1380 = vmatmul.mubr.bf16.gmra.mrb[0].mxu0 %v1297
      %v1381 = vpop.f32.mrb[0].mxu0
      %v1382 = vadd.f32 0.0, %v1381
      %v1383 = vpop.f32.mrb[0].mxu0
      %v1384 = vpop.f32.mrb[0].mxu0
      %v1385 = vpop.f32.mrb[0].mxu0
      %1386 = vdwg.mxu0
      %v1387 = vadd.f32 %v1278, %v1382
      %1388 = vst [vmem:[%s392] sm:$0x3f] %v1387
      %vm1389 = vcmask 1045504
      %v1390 = vsel %vm1389, %v1387, 0.0
      %v1391 = vrot.slane %v1390, 4
      %v1392 = vadd.f32 %v1390, %v1391
      %v1393 = vrot.slane %v1392, 2
      %v1394 = vadd.f32 %v1392, %v1393
      %v1395 = vrot.slane %v1394, 1
      %v1396 = vadd.f32 %v1394, %v1395
      %v1397 = vmul.f32 %v1387, %v1387
      %v1398 = vsel %vm1389, %v1397, 0.0
      %v1399 = vrot.slane %v1398, 4
      %v1400 = vadd.f32 %v1398, %v1399
      %v1401 = vrot.slane %v1400, 2
      %v1402 = vadd.f32 %v1400, %v1401
      %v1403 = vrot.slane %v1402, 1
      %v1404 = vadd.f32 %v1402, %v1403
      %vm1405 = vcmask 1040384
      %v1406 = vsel %vm1405, %v1396, %v1404
      %p1407 = scmp.eq.s32.totalorder %s24, 0
      // Predicated region
      $region45: #{down_forward.5} parent=43 // pred_check
        %p1408 = pneg %p1407
      $region46: #{down_forward.5} parent=43 // pred_check_branch
        %1410 = sbr.rel (%p1408) target = $region48
      $region47: #{down_forward.5} parent=43 // pred_region
        %1411 = vst [vmem:[%s396] sm:$0x3] 0.0
      $region48: #{down_forward.5} parent=43 // pred_fallthru
        _
      %v1412 = vld [vmem:[%s396] sm:$0x3]
      %v1413 = vadd.f32 %v1412, %v1406
      %1414 = vst [vmem:[%s396] sm:$0x3] %v1413
      %p1415 = scmp.lt.s32.totalorder %s23, 1
      %s1416 = scalar_select %p1415, %s23, 1
      %p1417 = scmp.lt.s32.totalorder %s24, 5
      %s1418 = scalar_select %p1417, %s24, 5
      %s1419 = smul.addr %s1416, 6
      %s1420 = sadd.s32 %s1418, %s1419
      %s1421 = smul.addr %s1420, 8
      %s1422 = scalar_lea.vmem %s6, %s1421
      %p1423 = scmp.lt.s32.totalorder %s23, 1
      %s1424 = scalar_select %p1423, %s23, 1
      %s1425 = smul.addr %s1424, 2
      %s1426 = scalar_lea.vmem %s7, %s1425
      // Predicated region
      $region49: #{down_forward.5} parent=43 // pred_check
        %p1427 = pneg %p202
      $region50: #{down_forward.5} parent=43 // pred_check_branch
        %1429 = sbr.rel (%p1427) target = $region52
      $region51: #{down_forward.5} parent=43 // pred_region
        _
      $region52: #{down_forward.5} parent=43 // pred_fallthru
        _
      // Predicated region
      $region53: #{down_forward.5} parent=43 // pred_check
        %p1430 = pneg %p228
      $region54: #{down_forward.5} parent=43 // pred_check_branch
        %1432 = sbr.rel (%p1430) target = $region56
      $region55: #{down_forward.5} parent=43 // pred_region
        _
      $region56: #{down_forward.5} parent=43 // pred_fallthru
        _
    $region44: #{down_forward.5} parent=5 // pred_fallthru
      _
    %p1433 = scmp.le.s32.totalorder 2, %s14
    // Predicated region
    $region57: #{down_forward.5} parent=5 // pred_check
      %p1434 = pneg %p1433
    $region58: #{down_forward.5} parent=5 // pred_check_branch
      %1436 = sbr.rel (%p1434) target = $region60
    $region59: #{down_forward.5} parent=5 // pred_region
      %s1437 = ssub.s32 %s14, 2
      // Predicated region
      $region61: #{down_forward.5} parent=59 // pred_check
        %p1438 = pneg %p208
      $region62: #{down_forward.5} parent=59 // pred_check_branch
        %1440 = sbr.rel (%p1438) target = $region64
      $region63: #{down_forward.5} parent=59 // pred_region
        %p1441 = scmp.lt.s32.totalorder %s25, 1
        %s1442 = scalar_select %p1441, %s25, 1
        %p1443 = scmp.lt.s32.totalorder %s26, 5
        %s1444 = scalar_select %p1443, %s26, 5
        %s1445 = smul.addr %s1442, 6
        %s1446 = sadd.s32 %s1444, %s1445
        %s1447 = smul.addr %s1446, 8
        %s1448 = scalar_lea.vmem %s6, %s1447
      $region64: #{down_forward.5} parent=59 // pred_fallthru
        _
      // Predicated region
      $region65: #{down_forward.5} parent=59 // pred_check
        %p1449 = pneg %p234
      $region66: #{down_forward.5} parent=59 // pred_check_branch
        %1451 = sbr.rel (%p1449) target = $region68
      $region67: #{down_forward.5} parent=59 // pred_region
        %p1452 = scmp.lt.s32.totalorder %s25, 1
        %s1453 = scalar_select %p1452, %s25, 1
        %s1454 = smul.addr %s1453, 2
        %s1455 = scalar_lea.vmem %s7, %s1454
      $region68: #{down_forward.5} parent=59 // pred_fallthru
        _
    $region60: #{down_forward.5} parent=5 // pred_fallthru
      _
  $region6: #{down_forward.5} parent=0 // loop_footer
    %s18 = sadd.s32 1, %s14
  $region7: #{down_forward.5} parent=0 // loop_footer_branch
    %13 = sbr.rel target = $region3
  $region8: #{down_forward.5} parent=0 // loop_exit
    _

// kernel: down_forward.6
$region0: #{down_forward.6}
  #allocation0 [shape = 'u32[]', space=smem, size = 0x4, offset = 0x4, fixed_abs, tag = 'smem constant byte address 0x4 - core index']
  #allocation1 [shape = 'u32[144,128]{1,0:T(1,128)}', space=vmem, size = 0x12000, scoped, tag = 'internal scratch']
  %s0 = inlined_call_operand.vmem [shape: f32[2,6,6,128], index: 0, kind: input, shape index: {}, may-alias: {0,1,2}]
  %s1 = inlined_call_operand.vmem [shape: f32[2,6,6,128], index: 1, kind: input, shape index: {}, may-alias: {0,1,2}]
  %s2 = inlined_call_operand.vmem [shape: f32[2,6,6,128], index: 2, kind: input, shape index: {}, may-alias: {0,1,2}]
  %s3 = inlined_call_operand.vmem [shape: bf16[9,128,128], index: 3, kind: input, shape index: {}]
  %s4 = inlined_call_operand.vmem [shape: f32[1,128], index: 4, kind: input, shape index: {}]
  %s5 = inlined_call_operand.vmem [shape: f32[1,128], index: 5, kind: input, shape index: {}]
  %s6 = inlined_call_operand.vmem [shape: f32[2,4,4,128], index: 6, kind: output, shape index: {0}]
  %s7 = inlined_call_operand.vmem [shape: f32[2,2,128], index: 7, kind: output, shape index: {1}]
  %8 = xla_tuple %s6, %s7
  %s9 = sld [smem:[#allocation0]]
  $region69: #{down_forward.6} parent=0
    _
  %s11 = ssub.s32 1, %s9
  %s12 = scalar_select 0, %s11, %s9
  loop: start=0, step=1, limit=10
  $region2: #{down_forward.6} parent=0 // loop_pre_header
    _
  $region3: #{down_forward.6} parent=0 // loop_header
    %s14 = sphi 0, %s18
    %p15 = scmp.ge.s32.totalorder %s14, 10
    %s21 = sphi 0, %s33
    %s22 = sphi 0, %s29
    %s23 = sphi 0, %s21
    %s24 = sphi 0, %s22
    %s25 = sphi 0, %s23
    %s26 = sphi 0, %s24
    %s38 = sphi 0, %s40
    %s41 = sphi 0, %s38
    %s42 = sphi 0, %s41
    %s58 = sphi 0, %s42
    %s68 = sphi 0, %s70
    %s71 = sphi 0, %s68
    %s72 = sphi 0, %s71
    %s88 = sphi 0, %s72
    %s98 = sphi 0, %s100
    %s101 = sphi 0, %s98
    %s102 = sphi 0, %s101
    %s118 = sphi 0, %s102
    %s122 = sphi 0, %s122
    %s124 = sphi 0, %s122
    %s125 = sphi 0, %s124
    %s139 = sphi 0, %s125
    %s143 = sphi 0, %s143
    %s145 = sphi 0, %s143
    %s146 = sphi 0, %s145
    %s160 = sphi 0, %s146
    %s164 = sphi 0, %s164
    %s166 = sphi 0, %s164
    %s167 = sphi 0, %s166
    %s181 = sphi 0, %s167
    %s189 = sphi 0, %s191
    %s192 = sphi 0, %s189
    %s193 = sphi 0, %s192
    %s209 = sphi 0, %s193
    %s215 = sphi 0, %s217
    %s218 = sphi 0, %s215
    %s219 = sphi 0, %s218
    %s235 = sphi 0, %s219
  $region4: #{down_forward.6} parent=0 // loop_header_branch
    %17 = sbr.rel (%p15) target = $region8
  $region5: #{down_forward.6} parent=0 // loop_body
    %s19 = ssub.s32 %s14, 1
    %s20 = ssub.s32 %s14, 2
    %s27 = sadd.s32 1, %s22
    %p28 = scmp.ge.s32.totalorder %s27, 4
    %s29 = scalar_select %p28, 0, %s27
    %s30 = sadd.s32 1, %s21
    %s31 = scalar_select %p28, %s30, %s21
    %p32 = scmp.ge.s32.totalorder %s31, 2
    %s33 = scalar_select %p32, 0, %s31
    %s34 = ssub.s32 %s21, %s33
    %s35 = ssub.s32 %s22, %s29
    %s36 = sor.u32 %s34, %s35
    %p37 = scmp.eq.s32.totalorder %s36, 0
    %s39 = sadd.s32 %s38, 1
    %s40 = scalar_select %p37, %s38, %s39
    %p43 = pneg %p37
    %p44 = scmp.eq.s32.totalorder %s14, 7
    %p45 = por %p43, %p44
    %p46 = scmp.ne.s32.totalorder %s38, %s41
    %p47 = scmp.eq.s32.totalorder %s14, 0
    %p48 = por %p46, %p47
    %p49 = scmp.ne.s32.totalorder %s38, %s41
    %p50 = scmp.eq.s32.totalorder %s19, 7
    %p51 = por %p49, %p50
    %p52 = scmp.ne.s32.totalorder %s41, %s42
    %p53 = scmp.eq.s32.totalorder %s19, 0
    %p54 = por %p52, %p53
    %p55 = scmp.ne.s32.totalorder %s41, %s42
    %p56 = scmp.eq.s32.totalorder %s20, 7
    %p57 = por %p55, %p56
    %p59 = scmp.ne.s32.totalorder %s42, %s58
    %p60 = scmp.eq.s32.totalorder %s20, 0
    %p61 = por %p59, %p60
    %s62 = sadd.s32 %s22, 1
    %s63 = sadd.s32 %s29, 1
    %s64 = ssub.s32 %s21, %s33
    %s65 = ssub.s32 %s62, %s63
    %s66 = sor.u32 %s64, %s65
    %p67 = scmp.eq.s32.totalorder %s66, 0
    %s69 = sadd.s32 %s68, 1
    %s70 = scalar_select %p67, %s68, %s69
    %p73 = pneg %p67
    %p74 = scmp.eq.s32.totalorder %s14, 7
    %p75 = por %p73, %p74
    %p76 = scmp.ne.s32.totalorder %s68, %s71
    %p77 = scmp.eq.s32.totalorder %s14, 0
    %p78 = por %p76, %p77
    %p79 = scmp.ne.s32.totalorder %s68, %s71
    %p80 = scmp.eq.s32.totalorder %s19, 7
    %p81 = por %p79, %p80
    %p82 = scmp.ne.s32.totalorder %s71, %s72
    %p83 = scmp.eq.s32.totalorder %s19, 0
    %p84 = por %p82, %p83
    %p85 = scmp.ne.s32.totalorder %s71, %s72
    %p86 = scmp.eq.s32.totalorder %s20, 7
    %p87 = por %p85, %p86
    %p89 = scmp.ne.s32.totalorder %s72, %s88
    %p90 = scmp.eq.s32.totalorder %s20, 0
    %p91 = por %p89, %p90
    %s92 = sadd.s32 %s22, 2
    %s93 = sadd.s32 %s29, 2
    %s94 = ssub.s32 %s21, %s33
    %s95 = ssub.s32 %s92, %s93
    %s96 = sor.u32 %s94, %s95
    %p97 = scmp.eq.s32.totalorder %s96, 0
    %s99 = sadd.s32 %s98, 1
    %s100 = scalar_select %p97, %s98, %s99
    %p103 = pneg %p97
    %p104 = scmp.eq.s32.totalorder %s14, 7
    %p105 = por %p103, %p104
    %p106 = scmp.ne.s32.totalorder %s98, %s101
    %p107 = scmp.eq.s32.totalorder %s14, 0
    %p108 = por %p106, %p107
    %p109 = scmp.ne.s32.totalorder %s98, %s101
    %p110 = scmp.eq.s32.totalorder %s19, 7
    %p111 = por %p109, %p110
    %p112 = scmp.ne.s32.totalorder %s101, %s102
    %p113 = scmp.eq.s32.totalorder %s19, 0
    %p114 = por %p112, %p113
    %p115 = scmp.ne.s32.totalorder %s101, %s102
    %p116 = scmp.eq.s32.totalorder %s20, 7
    %p117 = por %p115, %p116
    %p119 = scmp.ne.s32.totalorder %s102, %s118
    %p120 = scmp.eq.s32.totalorder %s20, 0
    %p121 = por %p119, %p120
    %s123 = sadd.s32 %s122, 1
    %p126 = scmp.eq.s32.totalorder %s14, 7
    %p127 = scmp.ne.s32.totalorder %s122, %s124
    %p128 = scmp.eq.s32.totalorder %s14, 0
    %p129 = por %p127, %p128
    %p130 = scmp.ne.s32.totalorder %s122, %s124
    %p131 = scmp.eq.s32.totalorder %s19, 7
    %p132 = por %p130, %p131
    %p133 = scmp.ne.s32.totalorder %s124, %s125
    %p134 = scmp.eq.s32.totalorder %s19, 0
    %p135 = por %p133, %p134
    %p136 = scmp.ne.s32.totalorder %s124, %s125
    %p137 = scmp.eq.s32.totalorder %s20, 7
    %p138 = por %p136, %p137
    %p140 = scmp.ne.s32.totalorder %s125, %s139
    %p141 = scmp.eq.s32.totalorder %s20, 0
    %p142 = por %p140, %p141
    %s144 = sadd.s32 %s143, 1
    %p147 = scmp.eq.s32.totalorder %s14, 7
    %p148 = scmp.ne.s32.totalorder %s143, %s145
    %p149 = scmp.eq.s32.totalorder %s14, 0
    %p150 = por %p148, %p149
    %p151 = scmp.ne.s32.totalorder %s143, %s145
    %p152 = scmp.eq.s32.totalorder %s19, 7
    %p153 = por %p151, %p152
    %p154 = scmp.ne.s32.totalorder %s145, %s146
    %p155 = scmp.eq.s32.totalorder %s19, 0
    %p156 = por %p154, %p155
    %p157 = scmp.ne.s32.totalorder %s145, %s146
    %p158 = scmp.eq.s32.totalorder %s20, 7
    %p159 = por %p157, %p158
    %p161 = scmp.ne.s32.totalorder %s146, %s160
    %p162 = scmp.eq.s32.totalorder %s20, 0
    %p163 = por %p161, %p162
    %s165 = sadd.s32 %s164, 1
    %p168 = scmp.eq.s32.totalorder %s14, 7
    %p169 = scmp.ne.s32.totalorder %s164, %s166
    %p170 = scmp.eq.s32.totalorder %s14, 0
    %p171 = por %p169, %p170
    %p172 = scmp.ne.s32.totalorder %s164, %s166
    %p173 = scmp.eq.s32.totalorder %s19, 7
    %p174 = por %p172, %p173
    %p175 = scmp.ne.s32.totalorder %s166, %s167
    %p176 = scmp.eq.s32.totalorder %s19, 0
    %p177 = por %p175, %p176
    %p178 = scmp.ne.s32.totalorder %s166, %s167
    %p179 = scmp.eq.s32.totalorder %s20, 7
    %p180 = por %p178, %p179
    %p182 = scmp.ne.s32.totalorder %s167, %s181
    %p183 = scmp.eq.s32.totalorder %s20, 0
    %p184 = por %p182, %p183
    %s185 = ssub.s32 %s21, %s33
    %s186 = ssub.s32 %s22, %s29
    %s187 = sor.u32 %s185, %s186
    %p188 = scmp.eq.s32.totalorder %s187, 0
    %s190 = sadd.s32 %s189, 1
    %s191 = scalar_select %p188, %s189, %s190
    %p194 = pneg %p188
    %p195 = scmp.eq.s32.totalorder %s14, 7
    %p196 = por %p194, %p195
    %p197 = scmp.ne.s32.totalorder %s189, %s192
    %p198 = scmp.eq.s32.totalorder %s14, 0
    %p199 = por %p197, %p198
    %p200 = scmp.ne.s32.totalorder %s189, %s192
    %p201 = scmp.eq.s32.totalorder %s19, 7
    %p202 = por %p200, %p201
    %p203 = scmp.ne.s32.totalorder %s192, %s193
    %p204 = scmp.eq.s32.totalorder %s19, 0
    %p205 = por %p203, %p204
    %p206 = scmp.ne.s32.totalorder %s192, %s193
    %p207 = scmp.eq.s32.totalorder %s20, 7
    %p208 = por %p206, %p207
    %p210 = scmp.ne.s32.totalorder %s193, %s209
    %p211 = scmp.eq.s32.totalorder %s20, 0
    %p212 = por %p210, %p211
    %s213 = ssub.s32 %s21, %s33
    %p214 = scmp.eq.s32.totalorder %s213, 0
    %s216 = sadd.s32 %s215, 1
    %s217 = scalar_select %p214, %s215, %s216
    %p220 = pneg %p214
    %p221 = scmp.eq.s32.totalorder %s14, 7
    %p222 = por %p220, %p221
    %p223 = scmp.ne.s32.totalorder %s215, %s218
    %p224 = scmp.eq.s32.totalorder %s14, 0
    %p225 = por %p223, %p224
    %p226 = scmp.ne.s32.totalorder %s215, %s218
    %p227 = scmp.eq.s32.totalorder %s19, 7
    %p228 = por %p226, %p227
    %p229 = scmp.ne.s32.totalorder %s218, %s219
    %p230 = scmp.eq.s32.totalorder %s19, 0
    %p231 = por %p229, %p230
    %p232 = scmp.ne.s32.totalorder %s218, %s219
    %p233 = scmp.eq.s32.totalorder %s20, 7
    %p234 = por %p232, %p233
    %p236 = scmp.ne.s32.totalorder %s219, %s235
    %p237 = scmp.eq.s32.totalorder %s20, 0
    %p238 = por %p236, %p237
    %p239 = scmp.le.s32.totalorder 1, %s14
    %p240 = scmp.lt.s32.totalorder %s14, 9
    %p241 = pnand %p239, %p240
    %p242 = pneg %p241
    // Predicated region
    $region9: #{down_forward.6} parent=5 // pred_check
      _
    $region10: #{down_forward.6} parent=5 // pred_check_branch
      %244 = sbr.rel (%p241) target = $region12
    $region11: #{down_forward.6} parent=5 // pred_region
      %s245 = ssub.s32 %s14, 1
      // Predicated region
      $region13: #{down_forward.6} parent=11 // pred_check
        %p246 = pneg %p135
      $region14: #{down_forward.6} parent=11 // pred_check_branch
        %248 = sbr.rel (%p246) target = $region16
      $region15: #{down_forward.6} parent=11 // pred_region
        _
      $region16: #{down_forward.6} parent=11 // pred_fallthru
        _
      // Predicated region
      $region17: #{down_forward.6} parent=11 // pred_check
        %p249 = pneg %p156
      $region18: #{down_forward.6} parent=11 // pred_check_branch
        %251 = sbr.rel (%p249) target = $region20
      $region19: #{down_forward.6} parent=11 // pred_region
        _
      $region20: #{down_forward.6} parent=11 // pred_fallthru
        _
      // Predicated region
      $region21: #{down_forward.6} parent=11 // pred_check
        %p252 = pneg %p177
      $region22: #{down_forward.6} parent=11 // pred_check_branch
        %254 = sbr.rel (%p252) target = $region24
      $region23: #{down_forward.6} parent=11 // pred_region
        _
      $region24: #{down_forward.6} parent=11 // pred_fallthru
        _
    $region12: #{down_forward.6} parent=5 // pred_fallthru
      _
    %p255 = scmp.lt.s32.totalorder %s14, 8
    // Predicated region
    $region25: #{down_forward.6} parent=5 // pred_check
      %p256 = pneg %p255
    $region26: #{down_forward.6} parent=5 // pred_check_branch
      %258 = sbr.rel (%p256) target = $region28
    $region27: #{down_forward.6} parent=5 // pred_region
      // Predicated region
      $region29: #{down_forward.6} parent=27 // pred_check
        %p259 = pneg %p48
      $region30: #{down_forward.6} parent=27 // pred_check_branch
        %261 = sbr.rel (%p259) target = $region32
      $region31: #{down_forward.6} parent=27 // pred_region
        %p262 = scmp.lt.s32.totalorder %s21, 1
        %s263 = scalar_select %p262, %s21, 1
        %p264 = scmp.lt.s32.totalorder %s22, 5
        %s265 = scalar_select %p264, %s22, 5
        %s266 = smul.addr %s263, 6
        %s267 = sadd.s32 %s265, %s266
        %s268 = smul.addr %s267, 8
        %s269 = scalar_lea.vmem %s0, %s268
      $region32: #{down_forward.6} parent=27 // pred_fallthru
        _
      // Predicated region
      $region33: #{down_forward.6} parent=27 // pred_check
        %p270 = pneg %p78
      $region34: #{down_forward.6} parent=27 // pred_check_branch
        %272 = sbr.rel (%p270) target = $region36
      $region35: #{down_forward.6} parent=27 // pred_region
        %s273 = sadd.s32 %s22, 1
        %p274 = scmp.lt.s32.totalorder %s21, 1
        %s275 = scalar_select %p274, %s21, 1
        %p276 = scmp.lt.s32.totalorder %s273, 5
        %s277 = scalar_select %p276, %s273, 5
        %s278 = smul.addr %s275, 6
        %s279 = sadd.s32 %s277, %s278
        %s280 = smul.addr %s279, 8
        %s281 = scalar_lea.vmem %s1, %s280
        %s282 = sadd.s32 %s22, 1
      $region36: #{down_forward.6} parent=27 // pred_fallthru
        _
      // Predicated region
      $region37: #{down_forward.6} parent=27 // pred_check
        %p283 = pneg %p108
      $region38: #{down_forward.6} parent=27 // pred_check_branch
        %285 = sbr.rel (%p283) target = $region40
      $region39: #{down_forward.6} parent=27 // pred_region
        %s286 = sadd.s32 %s22, 2
        %p287 = scmp.lt.s32.totalorder %s21, 1
        %s288 = scalar_select %p287, %s21, 1
        %p289 = scmp.lt.s32.totalorder %s286, 5
        %s290 = scalar_select %p289, %s286, 5
        %s291 = smul.addr %s288, 6
        %s292 = sadd.s32 %s290, %s291
        %s293 = smul.addr %s292, 8
        %s294 = scalar_lea.vmem %s2, %s293
        %s295 = sadd.s32 %s22, 2
      $region40: #{down_forward.6} parent=27 // pred_fallthru
        _
    $region28: #{down_forward.6} parent=5 // pred_fallthru
      _
    %p296 = scmp.le.s32.totalorder 1, %s14
    %p297 = scmp.lt.s32.totalorder %s14, 9
    %p298 = pnand %p296, %p297
    %p299 = pneg %p298
    // Predicated region
    $region41: #{down_forward.6} parent=5 // pred_check
      _
    $region42: #{down_forward.6} parent=5 // pred_check_branch
      %301 = sbr.rel (%p298) target = $region44
    $region43: #{down_forward.6} parent=5 // pred_region
      %s302 = ssub.s32 %s14, 1
      %p303 = scmp.lt.s32.totalorder %s23, 1
      %s304 = scalar_select %p303, %s23, 1
      %p305 = scmp.lt.s32.totalorder %s24, 5
      %s306 = scalar_select %p305, %s24, 5
      %s307 = smul.addr %s304, 6
      %s308 = sadd.s32 %s306, %s307
      %s309 = smul.addr %s308, 8
      %s310 = scalar_lea.vmem %s0, %s309
      %p311 = pneg %p54
      %p312 = pneg %p51
      %s313 = sadd.s32 %s24, 1
      %p314 = scmp.lt.s32.totalorder %s23, 1
      %s315 = scalar_select %p314, %s23, 1
      %p316 = scmp.lt.s32.totalorder %s313, 5
      %s317 = scalar_select %p316, %s313, 5
      %s318 = smul.addr %s315, 6
      %s319 = sadd.s32 %s317, %s318
      %s320 = smul.addr %s319, 8
      %s321 = scalar_lea.vmem %s1, %s320
      %p322 = pneg %p84
      %p323 = pneg %p81
      %s324 = sadd.s32 %s24, 2
      %p325 = scmp.lt.s32.totalorder %s23, 1
      %s326 = scalar_select %p325, %s23, 1
      %p327 = scmp.lt.s32.totalorder %s324, 5
      %s328 = scalar_select %p327, %s324, 5
      %s329 = smul.addr %s326, 6
      %s330 = sadd.s32 %s328, %s329
      %s331 = smul.addr %s330, 8
      %s332 = scalar_lea.vmem %s2, %s331
      %p333 = pneg %p114
      %p334 = pneg %p111
      %p335 = pneg %p135
      %p336 = pneg %p132
      %p337 = pneg %p156
      %p338 = pneg %p153
      %p339 = pneg %p177
      %p340 = pneg %p174
      %p341 = pneg %p205
      %p342 = pneg %p202
      %p343 = scmp.lt.s32.totalorder %s23, 1
      %s344 = scalar_select %p343, %s23, 1
      %p345 = scmp.lt.s32.totalorder %s24, 3
      %s346 = scalar_select %p345, %s24, 3
      %s347 = smul.addr %s344, 4
      %s348 = sadd.s32 %s346, %s347
      %s349 = smul.addr %s348, 4
      %s350 = scalar_lea.vmem %s6, %s349
      %p351 = pneg %p231
      %p352 = pneg %p228
      %p353 = scmp.lt.s32.totalorder %s23, 1
      %s354 = scalar_select %p353, %s23, 1
      %s355 = smul.addr %s354, 2
      %s356 = scalar_lea.vmem %s7, %s355
      %p357 = scmp.lt.s32.totalorder %s23, 1
      %s358 = scalar_select %p357, %s23, 1
      %p359 = scmp.lt.s32.totalorder %s24, 5
      %s360 = scalar_select %p359, %s24, 5
      %s361 = smul.addr %s358, 6
      %s362 = sadd.s32 %s360, %s361
      %s363 = smul.addr %s362, 8
      %s364 = scalar_lea.vmem %s0, %s363
      %s365 = sadd.s32 %s24, 1
      %p366 = scmp.lt.s32.totalorder %s23, 1
      %s367 = scalar_select %p366, %s23, 1
      %p368 = scmp.lt.s32.totalorder %s365, 5
      %s369 = scalar_select %p368, %s365, 5
      %s370 = smul.addr %s367, 6
      %s371 = sadd.s32 %s369, %s370
      %s372 = smul.addr %s371, 8
      %s373 = scalar_lea.vmem %s1, %s372
      %s374 = sadd.s32 %s24, 1
      %s375 = sadd.s32 %s24, 2
      %p376 = scmp.lt.s32.totalorder %s23, 1
      %s377 = scalar_select %p376, %s23, 1
      %p378 = scmp.lt.s32.totalorder %s375, 5
      %s379 = scalar_select %p378, %s375, 5
      %s380 = smul.addr %s377, 6
      %s381 = sadd.s32 %s379, %s380
      %s382 = smul.addr %s381, 8
      %s383 = scalar_lea.vmem %s2, %s382
      %s384 = sadd.s32 %s24, 2
      %p385 = scmp.lt.s32.totalorder %s23, 1
      %s386 = scalar_select %p385, %s23, 1
      %p387 = scmp.lt.s32.totalorder %s24, 3
      %s388 = scalar_select %p387, %s24, 3
      %s389 = smul.addr %s386, 4
      %s390 = sadd.s32 %s388, %s389
      %s391 = smul.addr %s390, 4
      %s392 = scalar_lea.vmem %s6, %s391
      %p393 = scmp.lt.s32.totalorder %s23, 1
      %s394 = scalar_select %p393, %s23, 1
      %s395 = smul.addr %s394, 2
      %s396 = scalar_lea.vmem %s7, %s395
      %v398 = vld [vmem:[%s364] sm:$0x3f]
      %v399 = vld [vmem:[%s373] sm:$0x3f]
      %v400 = vld [vmem:[%s383] sm:$0x3f]
      %v401 = vld [vmem:[%s4] sm:$0x1]
      %v402 = vld [vmem:[%s5] sm:$0x1]
      %v404 = vlaneseq
      %v405 = vshrl.u32 %v404, 7
      %v406 = vsub.s32 0, %v405
      %v407 = vrot.slane %v401, %v406
      %v409 = vmul.f32 %v398, %v407
      %v411 = vlaneseq
      %v412 = vshrl.u32 %v411, 7
      %v413 = vsub.s32 0, %v412
      %v414 = vrot.slane %v402, %v413
      %v416 = vadd.f32 %v409, %v414
      %v417 = vmax.f32 %v416, 0.0
      %v418 = vmul.f32 %v399, %v407
      %v419 = vadd.f32 %v418, %v414
      %v420 = vmax.f32 %v419, 0.0
      %v421 = vmul.f32 %v400, %v407
      %v422 = vadd.f32 %v421, %v414
      %v423 = vmax.f32 %v422, 0.0
      %v424 = vpack.c.bf16 %v417, %v417
      %v425 = vld [vmem:[%s3] sm:$0xf]
      %v426 = vld [vmem:[%s3 + $0x4] sm:$0xf]
      %v427 = vld [vmem:[%s3 + $0x8] sm:$0xf]
      %v428 = vld [vmem:[%s3 + $0xc] sm:$0xf]
      %v429 = vld [vmem:[%s3 + $0x10] sm:$0xf]
      %v430 = vld [vmem:[%s3 + $0x14] sm:$0xf]
      %v431 = vld [vmem:[%s3 + $0x18] sm:$0xf]
      %v432 = vld [vmem:[%s3 + $0x1c] sm:$0xf]
      %v433 = vld [vmem:[%s3 + $0x20] sm:$0xf]
      %v434 = vld [vmem:[%s3 + $0x24] sm:$0xf]
      %v435 = vld [vmem:[%s3 + $0x28] sm:$0xf]
      %v436 = vld [vmem:[%s3 + $0x2c] sm:$0xf]
      %v437 = vld [vmem:[%s3 + $0x30] sm:$0xf]
      %v438 = vld [vmem:[%s3 + $0x34] sm:$0xf]
      %v439 = vld [vmem:[%s3 + $0x38] sm:$0xf]
      %v440 = vld [vmem:[%s3 + $0x3c] sm:$0xf]
      %s441 = scalar_lea.vmem %s3, 64
      %v442 = vld [vmem:[%s441] sm:$0xf]
      %v443 = vld [vmem:[%s441 + $0x4] sm:$0xf]
      %v444 = vld [vmem:[%s441 + $0x8] sm:$0xf]
      %v445 = vld [vmem:[%s441 + $0xc] sm:$0xf]
      %v446 = vld [vmem:[%s441 + $0x10] sm:$0xf]
      %v447 = vld [vmem:[%s441 + $0x14] sm:$0xf]
      %v448 = vld [vmem:[%s441 + $0x18] sm:$0xf]
      %v449 = vld [vmem:[%s441 + $0x1c] sm:$0xf]
      %v450 = vld [vmem:[%s441 + $0x20] sm:$0xf]
      %v451 = vld [vmem:[%s441 + $0x24] sm:$0xf]
      %v452 = vld [vmem:[%s441 + $0x28] sm:$0xf]
      %v453 = vld [vmem:[%s441 + $0x2c] sm:$0xf]
      %v454 = vld [vmem:[%s441 + $0x30] sm:$0xf]
      %v455 = vld [vmem:[%s441 + $0x34] sm:$0xf]
      %v456 = vld [vmem:[%s441 + $0x38] sm:$0xf]
      %v457 = vld [vmem:[%s441 + $0x3c] sm:$0xf]
      %v459 = vshrl.u32 %v424, 16
      %v461 = vshll.u32 %v424, 16
      %v463 = vrot.slane %v461, 1
      %v464 = vor.u32 %v459, %v463
      %v482 = vunpack.c.l.b16 %v442
      %v483 = vunpack.c.l.b16 %v443
      %v484 = vunpack.c.l.b16 %v444
      %v485 = vunpack.c.l.b16 %v445
      %v486 = vunpack.c.l.b16 %v446
      %v487 = vunpack.c.l.b16 %v447
      %v488 = vunpack.c.l.b16 %v448
      %v489 = vunpack.c.l.b16 %v449
      %v490 = vunpack.c.l.b16 %v450
      %v491 = vunpack.c.l.b16 %v451
      %v492 = vunpack.c.l.b16 %v452
      %v493 = vunpack.c.l.b16 %v453
      %v494 = vunpack.c.l.b16 %v454
      %v495 = vunpack.c.l.b16 %v455
      %v496 = vunpack.c.l.b16 %v456
      %v497 = vunpack.c.l.b16 %v457
      %v498 = vpack.c.b16 %v483, %v482
      %v499 = vpack.c.b16 %v485, %v484
      %v500 = vpack.c.b16 %v487, %v486
      %v501 = vpack.c.b16 %v489, %v488
      %v502 = vpack.c.b16 %v491, %v490
      %v503 = vpack.c.b16 %v493, %v492
      %v504 = vpack.c.b16 %v495, %v494
      %v505 = vpack.c.b16 %v497, %v496
      %514 = vmatprep.subr.bf16.mxu0 0
      %515 = vmatpush1.bf16.msra.mxu0 %v498
      %516 = vmatprep.subr.bf16.mxu0 0
      %517 = vmatpush1.bf16.msra.mxu0 %v499
      %518 = vmatprep.subr.bf16.mxu0 0
      %519 = vmatpush1.bf16.msra.mxu0 %v500
      %520 = vmatprep.subr.bf16.mxu0 0
      %521 = vmatpush1.bf16.msra.mxu0 %v501
      %522 = vmatprep.subr.bf16.mxu0 0
      %523 = vmatpush1.bf16.msra.mxu0 %v502
      %524 = vmatprep.subr.bf16.mxu0 0
      %525 = vmatpush1.bf16.msra.mxu0 %v503
      %526 = vmatprep.subr.bf16.mxu0 0
      %527 = vmatpush1.bf16.msra.mxu0 %v504
      %528 = vmatprep.subr.bf16.mxu0 0
      %529 = vmatpush1.bf16.msra.mxu0 %v505
      %530 = vmatprep.subr.bf16.mxu0 0
      %531 = vmatpush1.bf16.msra.mxu0 0
      %532 = vmatprep.subr.bf16.mxu0 0
      %533 = vmatpush1.bf16.msra.mxu0 0
      %534 = vmatprep.subr.bf16.mxu0 0
      %535 = vmatpush1.bf16.msra.mxu0 0
      %536 = vmatprep.subr.bf16.mxu0 0
      %537 = vmatpush1.bf16.msra.mxu0 0
      %538 = vmatprep.subr.bf16.mxu0 0
      %539 = vmatpush1.bf16.msra.mxu0 0
      %540 = vmatprep.subr.bf16.mxu0 0
      %541 = vmatpush1.bf16.msra.mxu0 0
      %542 = vmatprep.subr.bf16.mxu0 0
      %543 = vmatpush1.bf16.msra.mxu0 0
      %544 = vmatprep.subr.bf16.mxu0 0
      %545 = vmatpush1.bf16.msra.mxu0 0
      %546 = vmatprep.mubr.bf16.mxu0 0
      %547 = vmatmul.mubr.bf16.gmra.mrb[0].mxu0 %v464
      %v548 = vpop.f32.mrb[0].mxu0
      %v549 = vadd.f32 0.0, %v548
      %v550 = vpop.f32.mrb[0].mxu0
      %v551 = vpop.f32.mrb[0].mxu0
      %v552 = vpop.f32.mrb[0].mxu0
      %553 = vdwg.mxu0
      %v570 = vunpack.c.l.b16 %v425
      %v571 = vunpack.c.l.b16 %v426
      %v572 = vunpack.c.l.b16 %v427
      %v573 = vunpack.c.l.b16 %v428
      %v574 = vunpack.c.l.b16 %v429
      %v575 = vunpack.c.l.b16 %v430
      %v576 = vunpack.c.l.b16 %v431
      %v577 = vunpack.c.l.b16 %v432
      %v578 = vunpack.c.l.b16 %v433
      %v579 = vunpack.c.l.b16 %v434
      %v580 = vunpack.c.l.b16 %v435
      %v581 = vunpack.c.l.b16 %v436
      %v582 = vunpack.c.l.b16 %v437
      %v583 = vunpack.c.l.b16 %v438
      %v584 = vunpack.c.l.b16 %v439
      %v585 = vunpack.c.l.b16 %v440
      %v586 = vpack.c.b16 %v571, %v570
      %v587 = vpack.c.b16 %v573, %v572
      %v588 = vpack.c.b16 %v575, %v574
      %v589 = vpack.c.b16 %v577, %v576
      %v590 = vpack.c.b16 %v579, %v578
      %v591 = vpack.c.b16 %v581, %v580
      %v592 = vpack.c.b16 %v583, %v582
      %v593 = vpack.c.b16 %v585, %v584
      %602 = vmatprep.subr.bf16.mxu0 0
      %603 = vmatpush1.bf16.msra.mxu0 %v586
      %604 = vmatprep.subr.bf16.mxu0 0
      %605 = vmatpush1.bf16.msra.mxu0 %v587
      %606 = vmatprep.subr.bf16.mxu0 0
      %607 = vmatpush1.bf16.msra.mxu0 %v588
      %608 = vmatprep.subr.bf16.mxu0 0
      %609 = vmatpush1.bf16.msra.mxu0 %v589
      %610 = vmatprep.subr.bf16.mxu0 0
      %611 = vmatpush1.bf16.msra.mxu0 %v590
      %612 = vmatprep.subr.bf16.mxu0 0
      %613 = vmatpush1.bf16.msra.mxu0 %v591
      %614 = vmatprep.subr.bf16.mxu0 0
      %615 = vmatpush1.bf16.msra.mxu0 %v592
      %616 = vmatprep.subr.bf16.mxu0 0
      %617 = vmatpush1.bf16.msra.mxu0 %v593
      %618 = vmatprep.subr.bf16.mxu0 0
      %619 = vmatpush1.bf16.msra.mxu0 0
      %620 = vmatprep.subr.bf16.mxu0 0
      %621 = vmatpush1.bf16.msra.mxu0 0
      %622 = vmatprep.subr.bf16.mxu0 0
      %623 = vmatpush1.bf16.msra.mxu0 0
      %624 = vmatprep.subr.bf16.mxu0 0
      %625 = vmatpush1.bf16.msra.mxu0 0
      %626 = vmatprep.subr.bf16.mxu0 0
      %627 = vmatpush1.bf16.msra.mxu0 0
      %628 = vmatprep.subr.bf16.mxu0 0
      %629 = vmatpush1.bf16.msra.mxu0 0
      %630 = vmatprep.subr.bf16.mxu0 0
      %631 = vmatpush1.bf16.msra.mxu0 0
      %632 = vmatprep.subr.bf16.mxu0 0
      %633 = vmatpush1.bf16.msra.mxu0 0
      %634 = vmatprep.mubr.bf16.mxu0 0
      %635 = vmatmul.mubr.bf16.gmra.mrb[0].mxu0 %v424
      %v636 = vpop.f32.mrb[0].mxu0
      %v637 = vadd.f32 %v549, %v636
      %v638 = vpop.f32.mrb[0].mxu0
      %v639 = vpop.f32.mrb[0].mxu0
      %v640 = vpop.f32.mrb[0].mxu0
      %641 = vdwg.mxu0
      %s642 = scalar_lea.vmem %s3, 128
      %v643 = vld [vmem:[%s642] sm:$0xf]
      %v644 = vld [vmem:[%s642 + $0x4] sm:$0xf]
      %v645 = vld [vmem:[%s642 + $0x8] sm:$0xf]
      %v646 = vld [vmem:[%s642 + $0xc] sm:$0xf]
      %v647 = vld [vmem:[%s642 + $0x10] sm:$0xf]
      %v648 = vld [vmem:[%s642 + $0x14] sm:$0xf]
      %v649 = vld [vmem:[%s642 + $0x18] sm:$0xf]
      %v650 = vld [vmem:[%s642 + $0x1c] sm:$0xf]
      %v651 = vld [vmem:[%s642 + $0x20] sm:$0xf]
      %v652 = vld [vmem:[%s642 + $0x24] sm:$0xf]
      %v653 = vld [vmem:[%s642 + $0x28] sm:$0xf]
      %v654 = vld [vmem:[%s642 + $0x2c] sm:$0xf]
      %v655 = vld [vmem:[%s642 + $0x30] sm:$0xf]
      %v656 = vld [vmem:[%s642 + $0x34] sm:$0xf]
      %v657 = vld [vmem:[%s642 + $0x38] sm:$0xf]
      %v658 = vld [vmem:[%s642 + $0x3c] sm:$0xf]
      %v660 = vrot.slane %v424, 1
      %v678 = vunpack.c.l.b16 %v643
      %v679 = vunpack.c.l.b16 %v644
      %v680 = vunpack.c.l.b16 %v645
      %v681 = vunpack.c.l.b16 %v646
      %v682 = vunpack.c.l.b16 %v647
      %v683 = vunpack.c.l.b16 %v648
      %v684 = vunpack.c.l.b16 %v649
      %v685 = vunpack.c.l.b16 %v650
      %v686 = vunpack.c.l.b16 %v651
      %v687 = vunpack.c.l.b16 %v652
      %v688 = vunpack.c.l.b16 %v653
      %v689 = vunpack.c.l.b16 %v654
      %v690 = vunpack.c.l.b16 %v655
      %v691 = vunpack.c.l.b16 %v656
      %v692 = vunpack.c.l.b16 %v657
      %v693 = vunpack.c.l.b16 %v658
      %v694 = vpack.c.b16 %v679, %v678
      %v695 = vpack.c.b16 %v681, %v680
      %v696 = vpack.c.b16 %v683, %v682
      %v697 = vpack.c.b16 %v685, %v684
      %v698 = vpack.c.b16 %v687, %v686
      %v699 = vpack.c.b16 %v689, %v688
      %v700 = vpack.c.b16 %v691, %v690
      %v701 = vpack.c.b16 %v693, %v692
      %710 = vmatprep.subr.bf16.mxu0 0
      %711 = vmatpush1.bf16.msra.mxu0 %v694
      %712 = vmatprep.subr.bf16.mxu0 0
      %713 = vmatpush1.bf16.msra.mxu0 %v695
      %714 = vmatprep.subr.bf16.mxu0 0
      %715 = vmatpush1.bf16.msra.mxu0 %v696
      %716 = vmatprep.subr.bf16.mxu0 0
      %717 = vmatpush1.bf16.msra.mxu0 %v697
      %718 = vmatprep.subr.bf16.mxu0 0
      %719 = vmatpush1.bf16.msra.mxu0 %v698
      %720 = vmatprep.subr.bf16.mxu0 0
      %721 = vmatpush1.bf16.msra.mxu0 %v699
      %722 = vmatprep.subr.bf16.mxu0 0
      %723 = vmatpush1.bf16.msra.mxu0 %v700
      %724 = vmatprep.subr.bf16.mxu0 0
      %725 = vmatpush1.bf16.msra.mxu0 %v701
      %726 = vmatprep.subr.bf16.mxu0 0
      %727 = vmatpush1.bf16.msra.mxu0 0
      %728 = vmatprep.subr.bf16.mxu0 0
      %729 = vmatpush1.bf16.msra.mxu0 0
      %730 = vmatprep.subr.bf16.mxu0 0
      %731 = vmatpush1.bf16.msra.mxu0 0
      %732 = vmatprep.subr.bf16.mxu0 0
      %733 = vmatpush1.bf16.msra.mxu0 0
      %734 = vmatprep.subr.bf16.mxu0 0
      %735 = vmatpush1.bf16.msra.mxu0 0
      %736 = vmatprep.subr.bf16.mxu0 0
      %737 = vmatpush1.bf16.msra.mxu0 0
      %738 = vmatprep.subr.bf16.mxu0 0
      %739 = vmatpush1.bf16.msra.mxu0 0
      %740 = vmatprep.subr.bf16.mxu0 0
      %741 = vmatpush1.bf16.msra.mxu0 0
      %742 = vmatprep.mubr.bf16.mxu0 0
      %743 = vmatmul.mubr.bf16.gmra.mrb[0].mxu0 %v660
      %v744 = vpop.f32.mrb[0].mxu0
      %v745 = vadd.f32 0.0, %v744
      %v746 = vpop.f32.mrb[0].mxu0
      %v747 = vpop.f32.mrb[0].mxu0
      %v748 = vpop.f32.mrb[0].mxu0
      %749 = vdwg.mxu0
      %v750 = vadd.f32 %v637, %v745
      %v751 = vpack.c.bf16 %v420, %v420
      %s752 = scalar_lea.vmem %s3, 192
      %v753 = vld [vmem:[%s752] sm:$0xf]
      %v754 = vld [vmem:[%s752 + $0x4] sm:$0xf]
      %v755 = vld [vmem:[%s752 + $0x8] sm:$0xf]
      %v756 = vld [vmem:[%s752 + $0xc] sm:$0xf]
      %v757 = vld [vmem:[%s752 + $0x10] sm:$0xf]
      %v758 = vld [vmem:[%s752 + $0x14] sm:$0xf]
      %v759 = vld [vmem:[%s752 + $0x18] sm:$0xf]
      %v760 = vld [vmem:[%s752 + $0x1c] sm:$0xf]
      %v761 = vld [vmem:[%s752 + $0x20] sm:$0xf]
      %v762 = vld [vmem:[%s752 + $0x24] sm:$0xf]
      %v763 = vld [vmem:[%s752 + $0x28] sm:$0xf]
      %v764 = vld [vmem:[%s752 + $0x2c] sm:$0xf]
      %v765 = vld [vmem:[%s752 + $0x30] sm:$0xf]
      %v766 = vld [vmem:[%s752 + $0x34] sm:$0xf]
      %v767 = vld [vmem:[%s752 + $0x38] sm:$0xf]
      %v768 = vld [vmem:[%s752 + $0x3c] sm:$0xf]
      %v785 = vunpack.c.l.b16 %v753
      %v786 = vunpack.c.l.b16 %v754
      %v787 = vunpack.c.l.b16 %v755
      %v788 = vunpack.c.l.b16 %v756
      %v789 = vunpack.c.l.b16 %v757
      %v790 = vunpack.c.l.b16 %v758
      %v791 = vunpack.c.l.b16 %v759
      %v792 = vunpack.c.l.b16 %v760
      %v793 = vunpack.c.l.b16 %v761
      %v794 = vunpack.c.l.b16 %v762
      %v795 = vunpack.c.l.b16 %v763
      %v796 = vunpack.c.l.b16 %v764
      %v797 = vunpack.c.l.b16 %v765
      %v798 = vunpack.c.l.b16 %v766
      %v799 = vunpack.c.l.b16 %v767
      %v800 = vunpack.c.l.b16 %v768
      %v801 = vpack.c.b16 %v786, %v785
      %v802 = vpack.c.b16 %v788, %v787
      %v803 = vpack.c.b16 %v790, %v789
      %v804 = vpack.c.b16 %v792, %v791
      %v805 = vpack.c.b16 %v794, %v793
      %v806 = vpack.c.b16 %v796, %v795
      %v807 = vpack.c.b16 %v798, %v797
      %v808 = vpack.c.b16 %v800, %v799
      %817 = vmatprep.subr.bf16.mxu0 0
      %818 = vmatpush1.bf16.msra.mxu0 %v801
      %819 = vmatprep.subr.bf16.mxu0 0
      %820 = vmatpush1.bf16.msra.mxu0 %v802
      %821 = vmatprep.subr.bf16.mxu0 0
      %822 = vmatpush1.bf16.msra.mxu0 %v803
      %823 = vmatprep.subr.bf16.mxu0 0
      %824 = vmatpush1.bf16.msra.mxu0 %v804
      %825 = vmatprep.subr.bf16.mxu0 0
      %826 = vmatpush1.bf16.msra.mxu0 %v805
      %827 = vmatprep.subr.bf16.mxu0 0
      %828 = vmatpush1.bf16.msra.mxu0 %v806
      %829 = vmatprep.subr.bf16.mxu0 0
      %830 = vmatpush1.bf16.msra.mxu0 %v807
      %831 = vmatprep.subr.bf16.mxu0 0
      %832 = vmatpush1.bf16.msra.mxu0 %v808
      %833 = vmatprep.subr.bf16.mxu0 0
      %834 = vmatpush1.bf16.msra.mxu0 0
      %835 = vmatprep.subr.bf16.mxu0 0
      %836 = vmatpush1.bf16.msra.mxu0 0
      %837 = vmatprep.subr.bf16.mxu0 0
      %838 = vmatpush1.bf16.msra.mxu0 0
      %839 = vmatprep.subr.bf16.mxu0 0
      %840 = vmatpush1.bf16.msra.mxu0 0
      %841 = vmatprep.subr.bf16.mxu0 0
      %842 = vmatpush1.bf16.msra.mxu0 0
      %843 = vmatprep.subr.bf16.mxu0 0
      %844 = vmatpush1.bf16.msra.mxu0 0
      %845 = vmatprep.subr.bf16.mxu0 0
      %846 = vmatpush1.bf16.msra.mxu0 0
      %847 = vmatprep.subr.bf16.mxu0 0
      %848 = vmatpush1.bf16.msra.mxu0 0
      %849 = vmatprep.mubr.bf16.mxu0 0
      %850 = vmatmul.mubr.bf16.gmra.mrb[0].mxu0 %v751
      %v851 = vpop.f32.mrb[0].mxu0
      %v852 = vadd.f32 0.0, %v851
      %v853 = vpop.f32.mrb[0].mxu0
      %v854 = vpop.f32.mrb[0].mxu0
      %v855 = vpop.f32.mrb[0].mxu0
      %856 = vdwg.mxu0
      %v857 = vadd.f32 %v750, %v852
      %s858 = scalar_lea.vmem %s3, 256
      %v859 = vld [vmem:[%s858] sm:$0xf]
      %v860 = vld [vmem:[%s858 + $0x4] sm:$0xf]
      %v861 = vld [vmem:[%s858 + $0x8] sm:$0xf]
      %v862 = vld [vmem:[%s858 + $0xc] sm:$0xf]
      %v863 = vld [vmem:[%s858 + $0x10] sm:$0xf]
      %v864 = vld [vmem:[%s858 + $0x14] sm:$0xf]
      %v865 = vld [vmem:[%s858 + $0x18] sm:$0xf]
      %v866 = vld [vmem:[%s858 + $0x1c] sm:$0xf]
      %v867 = vld [vmem:[%s858 + $0x20] sm:$0xf]
      %v868 = vld [vmem:[%s858 + $0x24] sm:$0xf]
      %v869 = vld [vmem:[%s858 + $0x28] sm:$0xf]
      %v870 = vld [vmem:[%s858 + $0x2c] sm:$0xf]
      %v871 = vld [vmem:[%s858 + $0x30] sm:$0xf]
      %v872 = vld [vmem:[%s858 + $0x34] sm:$0xf]
      %v873 = vld [vmem:[%s858 + $0x38] sm:$0xf]
      %v874 = vld [vmem:[%s858 + $0x3c] sm:$0xf]
      %v876 = vshrl.u32 %v751, 16
      %v878 = vshll.u32 %v751, 16
      %v880 = vrot.slane %v878, 1
      %v881 = vor.u32 %v876, %v880
      %v899 = vunpack.c.l.b16 %v859
      %v900 = vunpack.c.l.b16 %v860
      %v901 = vunpack.c.l.b16 %v861
      %v902 = vunpack.c.l.b16 %v862
      %v903 = vunpack.c.l.b16 %v863
      %v904 = vunpack.c.l.b16 %v864
      %v905 = vunpack.c.l.b16 %v865
      %v906 = vunpack.c.l.b16 %v866
      %v907 = vunpack.c.l.b16 %v867
      %v908 = vunpack.c.l.b16 %v868
      %v909 = vunpack.c.l.b16 %v869
      %v910 = vunpack.c.l.b16 %v870
      %v911 = vunpack.c.l.b16 %v871
      %v912 = vunpack.c.l.b16 %v872
      %v913 = vunpack.c.l.b16 %v873
      %v914 = vunpack.c.l.b16 %v874
      %v915 = vpack.c.b16 %v900, %v899
      %v916 = vpack.c.b16 %v902, %v901
      %v917 = vpack.c.b16 %v904, %v903
      %v918 = vpack.c.b16 %v906, %v905
      %v919 = vpack.c.b16 %v908, %v907
      %v920 = vpack.c.b16 %v910, %v909
      %v921 = vpack.c.b16 %v912, %v911
      %v922 = vpack.c.b16 %v914, %v913
      %931 = vmatprep.subr.bf16.mxu0 0
      %932 = vmatpush1.bf16.msra.mxu0 %v915
      %933 = vmatprep.subr.bf16.mxu0 0
      %934 = vmatpush1.bf16.msra.mxu0 %v916
      %935 = vmatprep.subr.bf16.mxu0 0
      %936 = vmatpush1.bf16.msra.mxu0 %v917
      %937 = vmatprep.subr.bf16.mxu0 0
      %938 = vmatpush1.bf16.msra.mxu0 %v918
      %939 = vmatprep.subr.bf16.mxu0 0
      %940 = vmatpush1.bf16.msra.mxu0 %v919
      %941 = vmatprep.subr.bf16.mxu0 0
      %942 = vmatpush1.bf16.msra.mxu0 %v920
      %943 = vmatprep.subr.bf16.mxu0 0
      %944 = vmatpush1.bf16.msra.mxu0 %v921
      %945 = vmatprep.subr.bf16.mxu0 0
      %946 = vmatpush1.bf16.msra.mxu0 %v922
      %947 = vmatprep.subr.bf16.mxu0 0
      %948 = vmatpush1.bf16.msra.mxu0 0
      %949 = vmatprep.subr.bf16.mxu0 0
      %950 = vmatpush1.bf16.msra.mxu0 0
      %951 = vmatprep.subr.bf16.mxu0 0
      %952 = vmatpush1.bf16.msra.mxu0 0
      %953 = vmatprep.subr.bf16.mxu0 0
      %954 = vmatpush1.bf16.msra.mxu0 0
      %955 = vmatprep.subr.bf16.mxu0 0
      %956 = vmatpush1.bf16.msra.mxu0 0
      %957 = vmatprep.subr.bf16.mxu0 0
      %958 = vmatpush1.bf16.msra.mxu0 0
      %959 = vmatprep.subr.bf16.mxu0 0
      %960 = vmatpush1.bf16.msra.mxu0 0
      %961 = vmatprep.subr.bf16.mxu0 0
      %962 = vmatpush1.bf16.msra.mxu0 0
      %963 = vmatprep.mubr.bf16.mxu0 0
      %964 = vmatmul.mubr.bf16.gmra.mrb[0].mxu0 %v881
      %v965 = vpop.f32.mrb[0].mxu0
      %v966 = vadd.f32 0.0, %v965
      %v967 = vpop.f32.mrb[0].mxu0
      %v968 = vpop.f32.mrb[0].mxu0
      %v969 = vpop.f32.mrb[0].mxu0
      %970 = vdwg.mxu0
      %v971 = vadd.f32 %v857, %v966
      %s972 = scalar_lea.vmem %s3, 320
      %v973 = vld [vmem:[%s972] sm:$0xf]
      %v974 = vld [vmem:[%s972 + $0x4] sm:$0xf]
      %v975 = vld [vmem:[%s972 + $0x8] sm:$0xf]
      %v976 = vld [vmem:[%s972 + $0xc] sm:$0xf]
      %v977 = vld [vmem:[%s972 + $0x10] sm:$0xf]
      %v978 = vld [vmem:[%s972 + $0x14] sm:$0xf]
      %v979 = vld [vmem:[%s972 + $0x18] sm:$0xf]
      %v980 = vld [vmem:[%s972 + $0x1c] sm:$0xf]
      %v981 = vld [vmem:[%s972 + $0x20] sm:$0xf]
      %v982 = vld [vmem:[%s972 + $0x24] sm:$0xf]
      %v983 = vld [vmem:[%s972 + $0x28] sm:$0xf]
      %v984 = vld [vmem:[%s972 + $0x2c] sm:$0xf]
      %v985 = vld [vmem:[%s972 + $0x30] sm:$0xf]
      %v986 = vld [vmem:[%s972 + $0x34] sm:$0xf]
      %v987 = vld [vmem:[%s972 + $0x38] sm:$0xf]
      %v988 = vld [vmem:[%s972 + $0x3c] sm:$0xf]
      %v990 = vrot.slane %v751, 1
      %v1008 = vunpack.c.l.b16 %v973
      %v1009 = vunpack.c.l.b16 %v974
      %v1010 = vunpack.c.l.b16 %v975
      %v1011 = vunpack.c.l.b16 %v976
      %v1012 = vunpack.c.l.b16 %v977
      %v1013 = vunpack.c.l.b16 %v978
      %v1014 = vunpack.c.l.b16 %v979
      %v1015 = vunpack.c.l.b16 %v980
      %v1016 = vunpack.c.l.b16 %v981
      %v1017 = vunpack.c.l.b16 %v982
      %v1018 = vunpack.c.l.b16 %v983
      %v1019 = vunpack.c.l.b16 %v984
      %v1020 = vunpack.c.l.b16 %v985
      %v1021 = vunpack.c.l.b16 %v986
      %v1022 = vunpack.c.l.b16 %v987
      %v1023 = vunpack.c.l.b16 %v988
      %v1024 = vpack.c.b16 %v1009, %v1008
      %v1025 = vpack.c.b16 %v1011, %v1010
      %v1026 = vpack.c.b16 %v1013, %v1012
      %v1027 = vpack.c.b16 %v1015, %v1014
      %v1028 = vpack.c.b16 %v1017, %v1016
      %v1029 = vpack.c.b16 %v1019, %v1018
      %v1030 = vpack.c.b16 %v1021, %v1020
      %v1031 = vpack.c.b16 %v1023, %v1022
      %1040 = vmatprep.subr.bf16.mxu0 0
      %1041 = vmatpush1.bf16.msra.mxu0 %v1024
      %1042 = vmatprep.subr.bf16.mxu0 0
      %1043 = vmatpush1.bf16.msra.mxu0 %v1025
      %1044 = vmatprep.subr.bf16.mxu0 0
      %1045 = vmatpush1.bf16.msra.mxu0 %v1026
      %1046 = vmatprep.subr.bf16.mxu0 0
      %1047 = vmatpush1.bf16.msra.mxu0 %v1027
      %1048 = vmatprep.subr.bf16.mxu0 0
      %1049 = vmatpush1.bf16.msra.mxu0 %v1028
      %1050 = vmatprep.subr.bf16.mxu0 0
      %1051 = vmatpush1.bf16.msra.mxu0 %v1029
      %1052 = vmatprep.subr.bf16.mxu0 0
      %1053 = vmatpush1.bf16.msra.mxu0 %v1030
      %1054 = vmatprep.subr.bf16.mxu0 0
      %1055 = vmatpush1.bf16.msra.mxu0 %v1031
      %1056 = vmatprep.subr.bf16.mxu0 0
      %1057 = vmatpush1.bf16.msra.mxu0 0
      %1058 = vmatprep.subr.bf16.mxu0 0
      %1059 = vmatpush1.bf16.msra.mxu0 0
      %1060 = vmatprep.subr.bf16.mxu0 0
      %1061 = vmatpush1.bf16.msra.mxu0 0
      %1062 = vmatprep.subr.bf16.mxu0 0
      %1063 = vmatpush1.bf16.msra.mxu0 0
      %1064 = vmatprep.subr.bf16.mxu0 0
      %1065 = vmatpush1.bf16.msra.mxu0 0
      %1066 = vmatprep.subr.bf16.mxu0 0
      %1067 = vmatpush1.bf16.msra.mxu0 0
      %1068 = vmatprep.subr.bf16.mxu0 0
      %1069 = vmatpush1.bf16.msra.mxu0 0
      %1070 = vmatprep.subr.bf16.mxu0 0
      %1071 = vmatpush1.bf16.msra.mxu0 0
      %1072 = vmatprep.mubr.bf16.mxu0 0
      %1073 = vmatmul.mubr.bf16.gmra.mrb[0].mxu0 %v990
      %v1074 = vpop.f32.mrb[0].mxu0
      %v1075 = vadd.f32 0.0, %v1074
      %v1076 = vpop.f32.mrb[0].mxu0
      %v1077 = vpop.f32.mrb[0].mxu0
      %v1078 = vpop.f32.mrb[0].mxu0
      %1079 = vdwg.mxu0
      %v1080 = vadd.f32 %v971, %v1075
      %v1081 = vpack.c.bf16 %v423, %v423
      %s1082 = scalar_lea.vmem %s3, 384
      %v1083 = vld [vmem:[%s1082] sm:$0xf]
      %v1084 = vld [vmem:[%s1082 + $0x4] sm:$0xf]
      %v1085 = vld [vmem:[%s1082 + $0x8] sm:$0xf]
      %v1086 = vld [vmem:[%s1082 + $0xc] sm:$0xf]
      %v1087 = vld [vmem:[%s1082 + $0x10] sm:$0xf]
      %v1088 = vld [vmem:[%s1082 + $0x14] sm:$0xf]
      %v1089 = vld [vmem:[%s1082 + $0x18] sm:$0xf]
      %v1090 = vld [vmem:[%s1082 + $0x1c] sm:$0xf]
      %v1091 = vld [vmem:[%s1082 + $0x20] sm:$0xf]
      %v1092 = vld [vmem:[%s1082 + $0x24] sm:$0xf]
      %v1093 = vld [vmem:[%s1082 + $0x28] sm:$0xf]
      %v1094 = vld [vmem:[%s1082 + $0x2c] sm:$0xf]
      %v1095 = vld [vmem:[%s1082 + $0x30] sm:$0xf]
      %v1096 = vld [vmem:[%s1082 + $0x34] sm:$0xf]
      %v1097 = vld [vmem:[%s1082 + $0x38] sm:$0xf]
      %v1098 = vld [vmem:[%s1082 + $0x3c] sm:$0xf]
      %v1115 = vunpack.c.l.b16 %v1083
      %v1116 = vunpack.c.l.b16 %v1084
      %v1117 = vunpack.c.l.b16 %v1085
      %v1118 = vunpack.c.l.b16 %v1086
      %v1119 = vunpack.c.l.b16 %v1087
      %v1120 = vunpack.c.l.b16 %v1088
      %v1121 = vunpack.c.l.b16 %v1089
      %v1122 = vunpack.c.l.b16 %v1090
      %v1123 = vunpack.c.l.b16 %v1091
      %v1124 = vunpack.c.l.b16 %v1092
      %v1125 = vunpack.c.l.b16 %v1093
      %v1126 = vunpack.c.l.b16 %v1094
      %v1127 = vunpack.c.l.b16 %v1095
      %v1128 = vunpack.c.l.b16 %v1096
      %v1129 = vunpack.c.l.b16 %v1097
      %v1130 = vunpack.c.l.b16 %v1098
      %v1131 = vpack.c.b16 %v1116, %v1115
      %v1132 = vpack.c.b16 %v1118, %v1117
      %v1133 = vpack.c.b16 %v1120, %v1119
      %v1134 = vpack.c.b16 %v1122, %v1121
      %v1135 = vpack.c.b16 %v1124, %v1123
      %v1136 = vpack.c.b16 %v1126, %v1125
      %v1137 = vpack.c.b16 %v1128, %v1127
      %v1138 = vpack.c.b16 %v1130, %v1129
      %1147 = vmatprep.subr.bf16.mxu0 0
      %1148 = vmatpush1.bf16.msra.mxu0 %v1131
      %1149 = vmatprep.subr.bf16.mxu0 0
      %1150 = vmatpush1.bf16.msra.mxu0 %v1132
      %1151 = vmatprep.subr.bf16.mxu0 0
      %1152 = vmatpush1.bf16.msra.mxu0 %v1133
      %1153 = vmatprep.subr.bf16.mxu0 0
      %1154 = vmatpush1.bf16.msra.mxu0 %v1134
      %1155 = vmatprep.subr.bf16.mxu0 0
      %1156 = vmatpush1.bf16.msra.mxu0 %v1135
      %1157 = vmatprep.subr.bf16.mxu0 0
      %1158 = vmatpush1.bf16.msra.mxu0 %v1136
      %1159 = vmatprep.subr.bf16.mxu0 0
      %1160 = vmatpush1.bf16.msra.mxu0 %v1137
      %1161 = vmatprep.subr.bf16.mxu0 0
      %1162 = vmatpush1.bf16.msra.mxu0 %v1138
      %1163 = vmatprep.subr.bf16.mxu0 0
      %1164 = vmatpush1.bf16.msra.mxu0 0
      %1165 = vmatprep.subr.bf16.mxu0 0
      %1166 = vmatpush1.bf16.msra.mxu0 0
      %1167 = vmatprep.subr.bf16.mxu0 0
      %1168 = vmatpush1.bf16.msra.mxu0 0
      %1169 = vmatprep.subr.bf16.mxu0 0
      %1170 = vmatpush1.bf16.msra.mxu0 0
      %1171 = vmatprep.subr.bf16.mxu0 0
      %1172 = vmatpush1.bf16.msra.mxu0 0
      %1173 = vmatprep.subr.bf16.mxu0 0
      %1174 = vmatpush1.bf16.msra.mxu0 0
      %1175 = vmatprep.subr.bf16.mxu0 0
      %1176 = vmatpush1.bf16.msra.mxu0 0
      %1177 = vmatprep.subr.bf16.mxu0 0
      %1178 = vmatpush1.bf16.msra.mxu0 0
      %1179 = vmatprep.mubr.bf16.mxu0 0
      %1180 = vmatmul.mubr.bf16.gmra.mrb[0].mxu0 %v1081
      %v1181 = vpop.f32.mrb[0].mxu0
      %v1182 = vadd.f32 0.0, %v1181
      %v1183 = vpop.f32.mrb[0].mxu0
      %v1184 = vpop.f32.mrb[0].mxu0
      %v1185 = vpop.f32.mrb[0].mxu0
      %1186 = vdwg.mxu0
      %v1187 = vadd.f32 %v1080, %v1182
      %s1188 = scalar_lea.vmem %s3, 448
      %v1189 = vld [vmem:[%s1188] sm:$0xf]
      %v1190 = vld [vmem:[%s1188 + $0x4] sm:$0xf]
      %v1191 = vld [vmem:[%s1188 + $0x8] sm:$0xf]
      %v1192 = vld [vmem:[%s1188 + $0xc] sm:$0xf]
      %v1193 = vld [vmem:[%s1188 + $0x10] sm:$0xf]
      %v1194 = vld [vmem:[%s1188 + $0x14] sm:$0xf]
      %v1195 = vld [vmem:[%s1188 + $0x18] sm:$0xf]
      %v1196 = vld [vmem:[%s1188 + $0x1c] sm:$0xf]
      %v1197 = vld [vmem:[%s1188 + $0x20] sm:$0xf]
      %v1198 = vld [vmem:[%s1188 + $0x24] sm:$0xf]
      %v1199 = vld [vmem:[%s1188 + $0x28] sm:$0xf]
      %v1200 = vld [vmem:[%s1188 + $0x2c] sm:$0xf]
      %v1201 = vld [vmem:[%s1188 + $0x30] sm:$0xf]
      %v1202 = vld [vmem:[%s1188 + $0x34] sm:$0xf]
      %v1203 = vld [vmem:[%s1188 + $0x38] sm:$0xf]
      %v1204 = vld [vmem:[%s1188 + $0x3c] sm:$0xf]
      %v1206 = vshrl.u32 %v1081, 16
      %v1208 = vshll.u32 %v1081, 16
      %v1210 = vrot.slane %v1208, 1
      %v1211 = vor.u32 %v1206, %v1210
      %v1229 = vunpack.c.l.b16 %v1189
      %v1230 = vunpack.c.l.b16 %v1190
      %v1231 = vunpack.c.l.b16 %v1191
      %v1232 = vunpack.c.l.b16 %v1192
      %v1233 = vunpack.c.l.b16 %v1193
      %v1234 = vunpack.c.l.b16 %v1194
      %v1235 = vunpack.c.l.b16 %v1195
      %v1236 = vunpack.c.l.b16 %v1196
      %v1237 = vunpack.c.l.b16 %v1197
      %v1238 = vunpack.c.l.b16 %v1198
      %v1239 = vunpack.c.l.b16 %v1199
      %v1240 = vunpack.c.l.b16 %v1200
      %v1241 = vunpack.c.l.b16 %v1201
      %v1242 = vunpack.c.l.b16 %v1202
      %v1243 = vunpack.c.l.b16 %v1203
      %v1244 = vunpack.c.l.b16 %v1204
      %v1245 = vpack.c.b16 %v1230, %v1229
      %v1246 = vpack.c.b16 %v1232, %v1231
      %v1247 = vpack.c.b16 %v1234, %v1233
      %v1248 = vpack.c.b16 %v1236, %v1235
      %v1249 = vpack.c.b16 %v1238, %v1237
      %v1250 = vpack.c.b16 %v1240, %v1239
      %v1251 = vpack.c.b16 %v1242, %v1241
      %v1252 = vpack.c.b16 %v1244, %v1243
      %1261 = vmatprep.subr.bf16.mxu0 0
      %1262 = vmatpush1.bf16.msra.mxu0 %v1245
      %1263 = vmatprep.subr.bf16.mxu0 0
      %1264 = vmatpush1.bf16.msra.mxu0 %v1246
      %1265 = vmatprep.subr.bf16.mxu0 0
      %1266 = vmatpush1.bf16.msra.mxu0 %v1247
      %1267 = vmatprep.subr.bf16.mxu0 0
      %1268 = vmatpush1.bf16.msra.mxu0 %v1248
      %1269 = vmatprep.subr.bf16.mxu0 0
      %1270 = vmatpush1.bf16.msra.mxu0 %v1249
      %1271 = vmatprep.subr.bf16.mxu0 0
      %1272 = vmatpush1.bf16.msra.mxu0 %v1250
      %1273 = vmatprep.subr.bf16.mxu0 0
      %1274 = vmatpush1.bf16.msra.mxu0 %v1251
      %1275 = vmatprep.subr.bf16.mxu0 0
      %1276 = vmatpush1.bf16.msra.mxu0 %v1252
      %1277 = vmatprep.subr.bf16.mxu0 0
      %1278 = vmatpush1.bf16.msra.mxu0 0
      %1279 = vmatprep.subr.bf16.mxu0 0
      %1280 = vmatpush1.bf16.msra.mxu0 0
      %1281 = vmatprep.subr.bf16.mxu0 0
      %1282 = vmatpush1.bf16.msra.mxu0 0
      %1283 = vmatprep.subr.bf16.mxu0 0
      %1284 = vmatpush1.bf16.msra.mxu0 0
      %1285 = vmatprep.subr.bf16.mxu0 0
      %1286 = vmatpush1.bf16.msra.mxu0 0
      %1287 = vmatprep.subr.bf16.mxu0 0
      %1288 = vmatpush1.bf16.msra.mxu0 0
      %1289 = vmatprep.subr.bf16.mxu0 0
      %1290 = vmatpush1.bf16.msra.mxu0 0
      %1291 = vmatprep.subr.bf16.mxu0 0
      %1292 = vmatpush1.bf16.msra.mxu0 0
      %1293 = vmatprep.mubr.bf16.mxu0 0
      %1294 = vmatmul.mubr.bf16.gmra.mrb[0].mxu0 %v1211
      %v1295 = vpop.f32.mrb[0].mxu0
      %v1296 = vadd.f32 0.0, %v1295
      %v1297 = vpop.f32.mrb[0].mxu0
      %v1298 = vpop.f32.mrb[0].mxu0
      %v1299 = vpop.f32.mrb[0].mxu0
      %1300 = vdwg.mxu0
      %v1301 = vadd.f32 %v1187, %v1296
      %s1302 = scalar_lea.vmem %s3, 512
      %v1303 = vld [vmem:[%s1302] sm:$0xf]
      %v1304 = vld [vmem:[%s1302 + $0x4] sm:$0xf]
      %v1305 = vld [vmem:[%s1302 + $0x8] sm:$0xf]
      %v1306 = vld [vmem:[%s1302 + $0xc] sm:$0xf]
      %v1307 = vld [vmem:[%s1302 + $0x10] sm:$0xf]
      %v1308 = vld [vmem:[%s1302 + $0x14] sm:$0xf]
      %v1309 = vld [vmem:[%s1302 + $0x18] sm:$0xf]
      %v1310 = vld [vmem:[%s1302 + $0x1c] sm:$0xf]
      %v1311 = vld [vmem:[%s1302 + $0x20] sm:$0xf]
      %v1312 = vld [vmem:[%s1302 + $0x24] sm:$0xf]
      %v1313 = vld [vmem:[%s1302 + $0x28] sm:$0xf]
      %v1314 = vld [vmem:[%s1302 + $0x2c] sm:$0xf]
      %v1315 = vld [vmem:[%s1302 + $0x30] sm:$0xf]
      %v1316 = vld [vmem:[%s1302 + $0x34] sm:$0xf]
      %v1317 = vld [vmem:[%s1302 + $0x38] sm:$0xf]
      %v1318 = vld [vmem:[%s1302 + $0x3c] sm:$0xf]
      %v1320 = vrot.slane %v1081, 1
      %v1338 = vunpack.c.l.b16 %v1303
      %v1339 = vunpack.c.l.b16 %v1304
      %v1340 = vunpack.c.l.b16 %v1305
      %v1341 = vunpack.c.l.b16 %v1306
      %v1342 = vunpack.c.l.b16 %v1307
      %v1343 = vunpack.c.l.b16 %v1308
      %v1344 = vunpack.c.l.b16 %v1309
      %v1345 = vunpack.c.l.b16 %v1310
      %v1346 = vunpack.c.l.b16 %v1311
      %v1347 = vunpack.c.l.b16 %v1312
      %v1348 = vunpack.c.l.b16 %v1313
      %v1349 = vunpack.c.l.b16 %v1314
      %v1350 = vunpack.c.l.b16 %v1315
      %v1351 = vunpack.c.l.b16 %v1316
      %v1352 = vunpack.c.l.b16 %v1317
      %v1353 = vunpack.c.l.b16 %v1318
      %v1354 = vpack.c.b16 %v1339, %v1338
      %v1355 = vpack.c.b16 %v1341, %v1340
      %v1356 = vpack.c.b16 %v1343, %v1342
      %v1357 = vpack.c.b16 %v1345, %v1344
      %v1358 = vpack.c.b16 %v1347, %v1346
      %v1359 = vpack.c.b16 %v1349, %v1348
      %v1360 = vpack.c.b16 %v1351, %v1350
      %v1361 = vpack.c.b16 %v1353, %v1352
      %1370 = vmatprep.subr.bf16.mxu0 0
      %1371 = vmatpush1.bf16.msra.mxu0 %v1354
      %1372 = vmatprep.subr.bf16.mxu0 0
      %1373 = vmatpush1.bf16.msra.mxu0 %v1355
      %1374 = vmatprep.subr.bf16.mxu0 0
      %1375 = vmatpush1.bf16.msra.mxu0 %v1356
      %1376 = vmatprep.subr.bf16.mxu0 0
      %1377 = vmatpush1.bf16.msra.mxu0 %v1357
      %1378 = vmatprep.subr.bf16.mxu0 0
      %1379 = vmatpush1.bf16.msra.mxu0 %v1358
      %1380 = vmatprep.subr.bf16.mxu0 0
      %1381 = vmatpush1.bf16.msra.mxu0 %v1359
      %1382 = vmatprep.subr.bf16.mxu0 0
      %1383 = vmatpush1.bf16.msra.mxu0 %v1360
      %1384 = vmatprep.subr.bf16.mxu0 0
      %1385 = vmatpush1.bf16.msra.mxu0 %v1361
      %1386 = vmatprep.subr.bf16.mxu0 0
      %1387 = vmatpush1.bf16.msra.mxu0 0
      %1388 = vmatprep.subr.bf16.mxu0 0
      %1389 = vmatpush1.bf16.msra.mxu0 0
      %1390 = vmatprep.subr.bf16.mxu0 0
      %1391 = vmatpush1.bf16.msra.mxu0 0
      %1392 = vmatprep.subr.bf16.mxu0 0
      %1393 = vmatpush1.bf16.msra.mxu0 0
      %1394 = vmatprep.subr.bf16.mxu0 0
      %1395 = vmatpush1.bf16.msra.mxu0 0
      %1396 = vmatprep.subr.bf16.mxu0 0
      %1397 = vmatpush1.bf16.msra.mxu0 0
      %1398 = vmatprep.subr.bf16.mxu0 0
      %1399 = vmatpush1.bf16.msra.mxu0 0
      %1400 = vmatprep.subr.bf16.mxu0 0
      %1401 = vmatpush1.bf16.msra.mxu0 0
      %1402 = vmatprep.mubr.bf16.mxu0 0
      %1403 = vmatmul.mubr.bf16.gmra.mrb[0].mxu0 %v1320
      %v1404 = vpop.f32.mrb[0].mxu0
      %v1405 = vadd.f32 0.0, %v1404
      %v1406 = vpop.f32.mrb[0].mxu0
      %v1407 = vpop.f32.mrb[0].mxu0
      %v1408 = vpop.f32.mrb[0].mxu0
      %1409 = vdwg.mxu0
      %v1410 = vadd.f32 %v1301, %v1405
      %1411 = vst [vmem:[%s392] sm:$0xf] %v1410
      %vm1412 = vcmask 1043456
      %v1413 = vsel %vm1412, %v1410, 0.0
      %v1414 = vrot.slane %v1413, 4
      %v1415 = vadd.f32 %v1413, %v1414
      %v1416 = vrot.slane %v1415, 2
      %v1417 = vadd.f32 %v1415, %v1416
      %v1418 = vrot.slane %v1417, 1
      %v1419 = vadd.f32 %v1417, %v1418
      %v1420 = vmul.f32 %v1410, %v1410
      %v1421 = vsel %vm1412, %v1420, 0.0
      %v1422 = vrot.slane %v1421, 4
      %v1423 = vadd.f32 %v1421, %v1422
      %v1424 = vrot.slane %v1423, 2
      %v1425 = vadd.f32 %v1423, %v1424
      %v1426 = vrot.slane %v1425, 1
      %v1427 = vadd.f32 %v1425, %v1426
      %vm1428 = vcmask 1040384
      %v1429 = vsel %vm1428, %v1419, %v1427
      %p1430 = scmp.eq.s32.totalorder %s24, 0
      // Predicated region
      $region45: #{down_forward.6} parent=43 // pred_check
        %p1431 = pneg %p1430
      $region46: #{down_forward.6} parent=43 // pred_check_branch
        %1433 = sbr.rel (%p1431) target = $region48
      $region47: #{down_forward.6} parent=43 // pred_region
        %1434 = vst [vmem:[%s396] sm:$0x3] 0.0
      $region48: #{down_forward.6} parent=43 // pred_fallthru
        _
      %v1435 = vld [vmem:[%s396] sm:$0x3]
      %v1436 = vadd.f32 %v1435, %v1429
      %1437 = vst [vmem:[%s396] sm:$0x3] %v1436
      %p1438 = scmp.lt.s32.totalorder %s23, 1
      %s1439 = scalar_select %p1438, %s23, 1
      %p1440 = scmp.lt.s32.totalorder %s24, 3
      %s1441 = scalar_select %p1440, %s24, 3
      %s1442 = smul.addr %s1439, 4
      %s1443 = sadd.s32 %s1441, %s1442
      %s1444 = smul.addr %s1443, 4
      %s1445 = scalar_lea.vmem %s6, %s1444
      %p1446 = scmp.lt.s32.totalorder %s23, 1
      %s1447 = scalar_select %p1446, %s23, 1
      %s1448 = smul.addr %s1447, 2
      %s1449 = scalar_lea.vmem %s7, %s1448
      // Predicated region
      $region49: #{down_forward.6} parent=43 // pred_check
        %p1450 = pneg %p202
      $region50: #{down_forward.6} parent=43 // pred_check_branch
        %1452 = sbr.rel (%p1450) target = $region52
      $region51: #{down_forward.6} parent=43 // pred_region
        _
      $region52: #{down_forward.6} parent=43 // pred_fallthru
        _
      // Predicated region
      $region53: #{down_forward.6} parent=43 // pred_check
        %p1453 = pneg %p228
      $region54: #{down_forward.6} parent=43 // pred_check_branch
        %1455 = sbr.rel (%p1453) target = $region56
      $region55: #{down_forward.6} parent=43 // pred_region
        _
      $region56: #{down_forward.6} parent=43 // pred_fallthru
        _
    $region44: #{down_forward.6} parent=5 // pred_fallthru
      _
    %p1456 = scmp.le.s32.totalorder 2, %s14
    // Predicated region
    $region57: #{down_forward.6} parent=5 // pred_check
      %p1457 = pneg %p1456
    $region58: #{down_forward.6} parent=5 // pred_check_branch
      %1459 = sbr.rel (%p1457) target = $region60
    $region59: #{down_forward.6} parent=5 // pred_region
      %s1460 = ssub.s32 %s14, 2
      // Predicated region
      $region61: #{down_forward.6} parent=59 // pred_check
        %p1461 = pneg %p208
      $region62: #{down_forward.6} parent=59 // pred_check_branch
        %1463 = sbr.rel (%p1461) target = $region64
      $region63: #{down_forward.6} parent=59 // pred_region
        %p1464 = scmp.lt.s32.totalorder %s25, 1
        %s1465 = scalar_select %p1464, %s25, 1
        %p1466 = scmp.lt.s32.totalorder %s26, 3
        %s1467 = scalar_select %p1466, %s26, 3
        %s1468 = smul.addr %s1465, 4
        %s1469 = sadd.s32 %s1467, %s1468
        %s1470 = smul.addr %s1469, 4
        %s1471 = scalar_lea.vmem %s6, %s1470
      $region64: #{down_forward.6} parent=59 // pred_fallthru
        _
      // Predicated region
      $region65: #{down_forward.6} parent=59 // pred_check
        %p1472 = pneg %p234
      $region66: #{down_forward.6} parent=59 // pred_check_branch
        %1474 = sbr.rel (%p1472) target = $region68
      $region67: #{down_forward.6} parent=59 // pred_region
        %p1475 = scmp.lt.s32.totalorder %s25, 1
        %s1476 = scalar_select %p1475, %s25, 1
        %s1477 = smul.addr %s1476, 2
        %s1478 = scalar_lea.vmem %s7, %s1477
      $region68: #{down_forward.6} parent=59 // pred_fallthru
        _
    $region60: #{down_forward.6} parent=5 // pred_fallthru
      _
  $region6: #{down_forward.6} parent=0 // loop_footer
    %s18 = sadd.s32 1, %s14
  $region7: #{down_forward.6} parent=0 // loop_footer_branch
    %13 = sbr.rel target = $region3
  $region8: #{down_forward.6} parent=0 // loop_exit
    _

</llo_original>
